<compile_context>
chip_gen: v7x
topology: tpu7x:2x2x1
jax: 0.10.0
libtpu: 0.0.40
codegen_flags: <defaults>
</compile_context>

<pallas_src>
import jax
import jax.numpy as jnp
from jax import lax
from jax.experimental import pallas as pl
from jax.experimental.pallas import tpu as pltpu


# -----------------------------------------------------------------------------
# in-kernel math helpers
# -----------------------------------------------------------------------------
def _erf_approx(x):
    # Abramowitz & Stegun 7.1.26, |err| <= 1.5e-7.
    # TODO(synk): nn.GELU() uses exact erf; lax.erf lowering is not guaranteed in
    # Mosaic, so a high-accuracy polynomial (abs/exp/mul/where only) is used.
    a1, a2, a3, a4, a5 = 0.254829592, -0.284496736, 1.421413741, -1.453152027, 1.061405429
    p = 0.3275911
    ax = jnp.abs(x)
    t = 1.0 / (1.0 + p * ax)
    poly = ((((a5 * t + a4) * t + a3) * t + a2) * t + a1) * t
    y = 1.0 - poly * jnp.exp(-ax * ax)
    return jnp.where(x < 0.0, -y, y)


def _gelu(x):
    return 0.5 * x * (1.0 + _erf_approx(x * 0.7071067811865476))


# -----------------------------------------------------------------------------
# fused LocalAtt kernel (one batch element per grid step)
# -----------------------------------------------------------------------------
def _make_local_att_kernel(Wpad, S0, L):
    # flat offset of tap (kh, kw) relative to an output pixel, in padded coords
    offs = [S0 + (kh - 1) * Wpad + (kw - 1) for kh in range(3) for kw in range(3)]

    def kernel(xp_ref, mask_ref, w1_ref, b1_ref, w2_ref, b2_ref,
               wp_ref, bp_ref, o_ref, g1p_ref):
        C = o_ref.shape[0]            # dim
        C4 = g1p_ref.shape[0]         # dim // 4

        # ---- dw_conv stage 1: 3x3 conv (C -> C4), BN1 folded into w1/b1 ----
        acc1 = jnp.zeros((C4, L), jnp.float32)
        for t, off in enumerate(offs):
            acc1 = acc1 + jnp.dot(w1_ref[t], xp_ref[:, off:off + L],
                                  preferred_element_type=jnp.float32)
        g1 = _gelu(acc1 + b1_ref[...])                       # (C4, L)

        # Re-embed the GELU output into zero-padded flat coordinates so the
        # second 3x3 conv sees correct zero borders (mask kills pad-column junk).
        g1p_ref[...] = jnp.zeros_like(g1p_ref)
        g1p_ref[:, S0:S0 + L] = g1 * mask_ref[...]

        # ---- dw_conv stage 2: 3x3 conv (C4 -> C), BN2 folded into w2/b2 ----
        acc2 = jnp.zeros((C, L), jnp.float32)
        for t, off in enumerate(offs):
            acc2 = acc2 + jnp.dot(w2_ref[t], g1p_ref[:, off:off + L],
                                  preferred_element_type=jnp.float32)
        s_attn = acc2 + b2_ref[...]                          # (C, L)

        # ---- pw_conv: 1x1 conv (C -> C), BNp folded, then GELU ----
        c_attn = _gelu(jnp.dot(wp_ref[...], xp_ref[:, S0:S0 + L],
                               preferred_element_type=jnp.float32) + bp_ref[...])

        # ---- attn = GELU(s_attn * c_attn); single lane-dense store ----
        o_ref[...] = _gelu(s_attn * c_attn)

    return kernel


# -----------------------------------------------------------------------------
# wrapper: layout plumbing + BN folding + pallas_call
# -----------------------------------------------------------------------------
def local_att_forward(x, params, eps=1e-5):
    """LocalAtt.forward.  x: NCHW (B, dim, H, W) f32 -> NCHW (B, dim, H, W)."""
    B, C, H, W = x.shape

    # fold eval-mode BatchNorm into the preceding conv (exact algebraic fold)
    def fold(w, b, bn):
        g, bt, m, v = bn
        s = g / jnp.sqrt(v + eps)
        return w * s[:, None, None, None], (b - m) * s + bt

    w1, b1 = fold(params["w1"], params["b1"], params["bn1"])
    w2, b2 = fold(params["w2"], params["b2"], params["bn2"])
    wp, bp = fold(params["wp"], params["bp"], params["bnp"])
    C4 = w1.shape[0]

    # kernel-side weight layouts: (tap, Cout, Cin) / (Cout, 1)
    w1k = jnp.transpose(w1, (2, 3, 0, 1)).reshape(9, C4, C)
    w2k = jnp.transpose(w2, (2, 3, 0, 1)).reshape(9, C, C4)
    wpk = wp.reshape(C, C)
    b1k = b1.reshape(C4, 1)
    b2k = b2.reshape(C, 1)
    bpk = bp.reshape(C, 1)

    # Flattened zero-padded spatial layout (channels on sublanes, pixels on lanes):
    #   padded image is (H+2, W+2), flattened row-major and extended by 2 zeros
    #   so every shifted 3x3-tap slice of length L stays in bounds.
    Hpad, Wpad = H + 2, W + 2
    S0 = Wpad + 1            # flat index of interior pixel (h=1, w=1)
    L = H * Wpad             # window covering all H output rows (row stride Wpad)
    P = Hpad * Wpad + 2      # padded flat length (+2 tail zeros)

    xpad = jnp.pad(x, ((0, 0), (0, 0), (1, 1), (1, 1))).reshape(B, C, Hpad * Wpad)
    xpad = jnp.pad(xpad, ((0, 0), (0, 0), (0, P - Hpad * Wpad)))
    # 1.0 on interior pixels of the window, 0.0 on the 2 pad columns per row
    mask = (jnp.arange(L, dtype=jnp.int32) % Wpad < W).astype(jnp.float32)[None, :]

    kernel = _make_local_att_kernel(Wpad, S0, L)
    const = lambda rank: (lambda b: (0,) * rank)

    out_flat = pl.pallas_call(
        kernel,
        out_shape=jax.ShapeDtypeStruct((B, C, L), jnp.float32),
        grid=(B,),
        in_specs=[
            pl.BlockSpec((None, C, P), lambda b: (b, 0, 0)),   # padded input (1 copy)
            pl.BlockSpec((1, L), const(2)),                    # interior mask
            pl.BlockSpec((9, C4, C), const(3)),                # conv1 (+BN1)
            pl.BlockSpec((C4, 1), const(2)),
            pl.BlockSpec((9, C, C4), const(3)),                # conv2 (+BN2)
            pl.BlockSpec((C, 1), const(2)),
            pl.BlockSpec((C, C), const(2)),                    # pw conv (+BNp)
            pl.BlockSpec((C, 1), const(2)),
        ],
        out_specs=pl.BlockSpec((None, C, L), lambda b: (b, 0, 0)),
        scratch_shapes=[pltpu.VMEM((C4, P), jnp.float32)],     # zero-padded GELU(conv1)
        compiler_params=pltpu.CompilerParams(
            dimension_semantics=("parallel",)),                # both TCs on v7x
    )(xpad, mask, w1k, b1k, w2k, b2k, wpk, bpk)

    # drop the 2 pad columns per row; the reshape is free (row-major contiguous)
    return out_flat.reshape(B, C, H, Wpad)[:, :, :, :W]


# -----------------------------------------------------------------------------
# pure-JAX reference (unfolded BN, exact erf GELU) for verification
# -----------------------------------------------------------------------------
def local_att_ref(x, params, eps=1e-5):
    def conv(y, w, b):
        pad = w.shape[2] // 2
        out = lax.conv_general_dilated(
            y, w, window_strides=(1, 1), padding=[(pad, pad), (pad, pad)],
            dimension_numbers=("NCHW", "OIHW", "NCHW"),
            precision=lax.Precision.HIGHEST)
        return out + b[None, :, None, None]

    def bn(y, bnp):
        g, bt, m, v = bnp
        s = g / jnp.sqrt(v + eps)
        return (y - m[None, :, None, None]) * s[None, :, None, None] + bt[None, :, None, None]

    gelu = lambda t: jax.nn.gelu(t, approximate=False)

    s = bn(conv(x, params["w1"], params["b1"]), params["bn1"])
    s = bn(conv(gelu(s), params["w2"], params["b2"]), params["bn2"])
    c = gelu(bn(conv(x, params["wp"], params["bp"]), params["bnp"]))
    return gelu(s * c)                       # LocalAtt: act(dw_conv(x) * pw_conv(x))


# -----------------------------------------------------------------------------
# deterministic parameter construction
# -----------------------------------------------------------------------------
def init_params(key, dim):
    # TODO(synk): BatchNorm2d is implemented in eval mode (running stats folded
    # into the convs); training-mode batch statistics are not implemented.
    # Conv biases are small random (PyTorch init zeroes them) to exercise the path.
    C, C4 = dim, dim // 4
    ks = jax.random.split(key, 9)

    def conv_w(k, co, ci, kh, kw):
        fan_out = kh * kw * co
        return (jnp.sqrt(2.0 / fan_out)
                * jax.random.normal(k, (co, ci, kh, kw))).astype(jnp.float32)

    def bn_p(k, c):
        k1, k2, k3, k4 = jax.random.split(k, 4)
        return ((1.0 + 0.1 * jax.random.normal(k1, (c,))).astype(jnp.float32),
                (0.1 * jax.random.normal(k2, (c,))).astype(jnp.float32),
                (0.1 * jax.random.normal(k3, (c,))).astype(jnp.float32),
                (0.5 + jnp.abs(jax.random.normal(k4, (c,)))).astype(jnp.float32))

    return dict(
        w1=conv_w(ks[0], C4, C, 3, 3),
        b1=(0.05 * jax.random.normal(ks[1], (C4,))).astype(jnp.float32),
        bn1=bn_p(ks[2], C4),
        w2=conv_w(ks[3], C, C4, 3, 3),
        b2=(0.05 * jax.random.normal(ks[4], (C,))).astype(jnp.float32),
        bn2=bn_p(ks[5], C),
        wp=conv_w(ks[6], C, C, 1, 1),
        bp=(0.05 * jax.random.normal(ks[7], (C,))).astype(jnp.float32),
        bnp=bn_p(ks[8], C),
    )
    # note: LocalAtt.proj_2 exists in __init__ but is unused in forward -> omitted.


# -----------------------------------------------------------------------------
if __name__ == "__main__":
    B, dim, H, W = 2, 8, 16, 16              # small shapes consistent with LocalAtt(dim=8)

    k_in, k_par = jax.random.split(jax.random.PRNGKey(0))
    x = jax.random.normal(k_in, (B, dim, H, W), jnp.float32)
    params = init_params(k_par, dim)

    out = jax.jit(local_att_forward)(x, params)
    out = jax.block_until_ready(out)

    ref = local_att_ref(x, params)
    assert out.shape == (B, dim, H, W), out.shape
    err = float(jnp.max(jnp.abs(out - ref)))
    assert jnp.allclose(out, ref, atol=3e-3, rtol=3e-3), err
    print("KERNEL_OK")
</pallas_src>

<mosaic_0001>
module attributes {stable_mosaic.version = 11 : i64} {
  func.func @kernel(%arg0: i32, %arg1: memref<1x8x326xf32, #tpu.memory_space<vmem>>, %arg2: memref<1x288xf32, #tpu.memory_space<vmem>>, %arg3: memref<9x2x8xf32, #tpu.memory_space<vmem>>, %arg4: memref<2x1xf32, #tpu.memory_space<vmem>>, %arg5: memref<9x8x2xf32, #tpu.memory_space<vmem>>, %arg6: memref<8x1xf32, #tpu.memory_space<vmem>>, %arg7: memref<8x8xf32, #tpu.memory_space<vmem>>, %arg8: memref<8x1xf32, #tpu.memory_space<vmem>>, %arg9: memref<1x8x288xf32, #tpu.memory_space<vmem>>, %arg10: memref<2x326xf32, #tpu.memory_space<vmem>>) attributes {dimension_semantics = [#tpu.dimension_semantics<parallel>], iteration_bounds = array<i64: 2>, scalar_prefetch = 0 : i64, scratch_operands = 1 : i64, tpu.core_type = #tpu.core_type<tc>, window_params = [{transform_indices = @transform_0, window_bounds = array<i64: 1, 8, 326>}, {pipeline_mode = #tpu.pipeline_mode<synchronous>, transform_indices = @transform_1, window_bounds = array<i64: 1, 288>}, {pipeline_mode = #tpu.pipeline_mode<synchronous>, transform_indices = @transform_2, window_bounds = array<i64: 9, 2, 8>}, {pipeline_mode = #tpu.pipeline_mode<synchronous>, transform_indices = @transform_3, window_bounds = array<i64: 2, 1>}, {pipeline_mode = #tpu.pipeline_mode<synchronous>, transform_indices = @transform_4, window_bounds = array<i64: 9, 8, 2>}, {pipeline_mode = #tpu.pipeline_mode<synchronous>, transform_indices = @transform_5, window_bounds = array<i64: 8, 1>}, {pipeline_mode = #tpu.pipeline_mode<synchronous>, transform_indices = @transform_6, window_bounds = array<i64: 8, 8>}, {pipeline_mode = #tpu.pipeline_mode<synchronous>, transform_indices = @transform_7, window_bounds = array<i64: 8, 1>}, {transform_indices = @transform_8, window_bounds = array<i64: 1, 8, 288>}]} {
    %cst = arith.constant 0.000000e+00 : f32
    %0 = vector.broadcast %cst : f32 to vector<2x288xf32>
    %c0 = arith.constant 0 : index
    %c0_0 = arith.constant 0 : index
    %c0_1 = arith.constant 0 : index
    %1 = vector.load %arg3[%c0, %c0_0, %c0_1] : memref<9x2x8xf32, #tpu.memory_space<vmem>>, vector<1x2x8xf32>
    %2 = vector.shape_cast %1 : vector<1x2x8xf32> to vector<2x8xf32>
    %c0_2 = arith.constant 0 : index
    %c0_3 = arith.constant 0 : index
    %c0_4 = arith.constant 0 : index
    %3 = vector.load %arg1[%c0_2, %c0_3, %c0_4] : memref<1x8x326xf32, #tpu.memory_space<vmem>>, vector<1x8x288xf32>
    %4 = vector.shape_cast %3 : vector<1x8x288xf32> to vector<8x288xf32>
    %cst_5 = arith.constant dense<0.000000e+00> : vector<2x288xf32>
    %5 = tpu.matmul %2, %4, %cst_5 {dimension_numbers = #tpu.dot_dimension_numbers<[1], [0], [0], [1], [0, 0, 1, 1], [], []>} : vector<2x8xf32>, vector<8x288xf32>, vector<2x288xf32> -> vector<2x288xf32>
    %6 = arith.addf %0, %5 : vector<2x288xf32>
    %c1 = arith.constant 1 : index
    %c0_6 = arith.constant 0 : index
    %c0_7 = arith.constant 0 : index
    %7 = vector.load %arg3[%c1, %c0_6, %c0_7] : memref<9x2x8xf32, #tpu.memory_space<vmem>>, vector<1x2x8xf32>
    %8 = vector.shape_cast %7 : vector<1x2x8xf32> to vector<2x8xf32>
    %c0_8 = arith.constant 0 : index
    %c0_9 = arith.constant 0 : index
    %c1_10 = arith.constant 1 : index
    %9 = vector.load %arg1[%c0_8, %c0_9, %c1_10] : memref<1x8x326xf32, #tpu.memory_space<vmem>>, vector<1x8x288xf32>
    %10 = vector.shape_cast %9 : vector<1x8x288xf32> to vector<8x288xf32>
    %cst_11 = arith.constant dense<0.000000e+00> : vector<2x288xf32>
    %11 = tpu.matmul %8, %10, %cst_11 {dimension_numbers = #tpu.dot_dimension_numbers<[1], [0], [0], [1], [0, 0, 1, 1], [], []>} : vector<2x8xf32>, vector<8x288xf32>, vector<2x288xf32> -> vector<2x288xf32>
    %12 = arith.addf %6, %11 : vector<2x288xf32>
    %c2 = arith.constant 2 : index
    %c0_12 = arith.constant 0 : index
    %c0_13 = arith.constant 0 : index
    %13 = vector.load %arg3[%c2, %c0_12, %c0_13] : memref<9x2x8xf32, #tpu.memory_space<vmem>>, vector<1x2x8xf32>
    %14 = vector.shape_cast %13 : vector<1x2x8xf32> to vector<2x8xf32>
    %c0_14 = arith.constant 0 : index
    %c0_15 = arith.constant 0 : index
    %c2_16 = arith.constant 2 : index
    %15 = vector.load %arg1[%c0_14, %c0_15, %c2_16] : memref<1x8x326xf32, #tpu.memory_space<vmem>>, vector<1x8x288xf32>
    %16 = vector.shape_cast %15 : vector<1x8x288xf32> to vector<8x288xf32>
    %cst_17 = arith.constant dense<0.000000e+00> : vector<2x288xf32>
    %17 = tpu.matmul %14, %16, %cst_17 {dimension_numbers = #tpu.dot_dimension_numbers<[1], [0], [0], [1], [0, 0, 1, 1], [], []>} : vector<2x8xf32>, vector<8x288xf32>, vector<2x288xf32> -> vector<2x288xf32>
    %18 = arith.addf %12, %17 : vector<2x288xf32>
    %c3 = arith.constant 3 : index
    %c0_18 = arith.constant 0 : index
    %c0_19 = arith.constant 0 : index
    %19 = vector.load %arg3[%c3, %c0_18, %c0_19] : memref<9x2x8xf32, #tpu.memory_space<vmem>>, vector<1x2x8xf32>
    %20 = vector.shape_cast %19 : vector<1x2x8xf32> to vector<2x8xf32>
    %c0_20 = arith.constant 0 : index
    %c0_21 = arith.constant 0 : index
    %c18 = arith.constant 18 : index
    %21 = vector.load %arg1[%c0_20, %c0_21, %c18] : memref<1x8x326xf32, #tpu.memory_space<vmem>>, vector<1x8x288xf32>
    %22 = vector.shape_cast %21 : vector<1x8x288xf32> to vector<8x288xf32>
    %cst_22 = arith.constant dense<0.000000e+00> : vector<2x288xf32>
    %23 = tpu.matmul %20, %22, %cst_22 {dimension_numbers = #tpu.dot_dimension_numbers<[1], [0], [0], [1], [0, 0, 1, 1], [], []>} : vector<2x8xf32>, vector<8x288xf32>, vector<2x288xf32> -> vector<2x288xf32>
    %24 = arith.addf %18, %23 : vector<2x288xf32>
    %c4 = arith.constant 4 : index
    %c0_23 = arith.constant 0 : index
    %c0_24 = arith.constant 0 : index
    %25 = vector.load %arg3[%c4, %c0_23, %c0_24] : memref<9x2x8xf32, #tpu.memory_space<vmem>>, vector<1x2x8xf32>
    %26 = vector.shape_cast %25 : vector<1x2x8xf32> to vector<2x8xf32>
    %c0_25 = arith.constant 0 : index
    %c0_26 = arith.constant 0 : index
    %c19 = arith.constant 19 : index
    %27 = vector.load %arg1[%c0_25, %c0_26, %c19] : memref<1x8x326xf32, #tpu.memory_space<vmem>>, vector<1x8x288xf32>
    %28 = vector.shape_cast %27 : vector<1x8x288xf32> to vector<8x288xf32>
    %cst_27 = arith.constant dense<0.000000e+00> : vector<2x288xf32>
    %29 = tpu.matmul %26, %28, %cst_27 {dimension_numbers = #tpu.dot_dimension_numbers<[1], [0], [0], [1], [0, 0, 1, 1], [], []>} : vector<2x8xf32>, vector<8x288xf32>, vector<2x288xf32> -> vector<2x288xf32>
    %30 = arith.addf %24, %29 : vector<2x288xf32>
    %c5 = arith.constant 5 : index
    %c0_28 = arith.constant 0 : index
    %c0_29 = arith.constant 0 : index
    %31 = vector.load %arg3[%c5, %c0_28, %c0_29] : memref<9x2x8xf32, #tpu.memory_space<vmem>>, vector<1x2x8xf32>
    %32 = vector.shape_cast %31 : vector<1x2x8xf32> to vector<2x8xf32>
    %c0_30 = arith.constant 0 : index
    %c0_31 = arith.constant 0 : index
    %c20 = arith.constant 20 : index
    %33 = vector.load %arg1[%c0_30, %c0_31, %c20] : memref<1x8x326xf32, #tpu.memory_space<vmem>>, vector<1x8x288xf32>
    %34 = vector.shape_cast %33 : vector<1x8x288xf32> to vector<8x288xf32>
    %cst_32 = arith.constant dense<0.000000e+00> : vector<2x288xf32>
    %35 = tpu.matmul %32, %34, %cst_32 {dimension_numbers = #tpu.dot_dimension_numbers<[1], [0], [0], [1], [0, 0, 1, 1], [], []>} : vector<2x8xf32>, vector<8x288xf32>, vector<2x288xf32> -> vector<2x288xf32>
    %36 = arith.addf %30, %35 : vector<2x288xf32>
    %c6 = arith.constant 6 : index
    %c0_33 = arith.constant 0 : index
    %c0_34 = arith.constant 0 : index
    %37 = vector.load %arg3[%c6, %c0_33, %c0_34] : memref<9x2x8xf32, #tpu.memory_space<vmem>>, vector<1x2x8xf32>
    %38 = vector.shape_cast %37 : vector<1x2x8xf32> to vector<2x8xf32>
    %c0_35 = arith.constant 0 : index
    %c0_36 = arith.constant 0 : index
    %c36 = arith.constant 36 : index
    %39 = vector.load %arg1[%c0_35, %c0_36, %c36] : memref<1x8x326xf32, #tpu.memory_space<vmem>>, vector<1x8x288xf32>
    %40 = vector.shape_cast %39 : vector<1x8x288xf32> to vector<8x288xf32>
    %cst_37 = arith.constant dense<0.000000e+00> : vector<2x288xf32>
    %41 = tpu.matmul %38, %40, %cst_37 {dimension_numbers = #tpu.dot_dimension_numbers<[1], [0], [0], [1], [0, 0, 1, 1], [], []>} : vector<2x8xf32>, vector<8x288xf32>, vector<2x288xf32> -> vector<2x288xf32>
    %42 = arith.addf %36, %41 : vector<2x288xf32>
    %c7 = arith.constant 7 : index
    %c0_38 = arith.constant 0 : index
    %c0_39 = arith.constant 0 : index
    %43 = vector.load %arg3[%c7, %c0_38, %c0_39] : memref<9x2x8xf32, #tpu.memory_space<vmem>>, vector<1x2x8xf32>
    %44 = vector.shape_cast %43 : vector<1x2x8xf32> to vector<2x8xf32>
    %c0_40 = arith.constant 0 : index
    %c0_41 = arith.constant 0 : index
    %c37 = arith.constant 37 : index
    %45 = vector.load %arg1[%c0_40, %c0_41, %c37] : memref<1x8x326xf32, #tpu.memory_space<vmem>>, vector<1x8x288xf32>
    %46 = vector.shape_cast %45 : vector<1x8x288xf32> to vector<8x288xf32>
    %cst_42 = arith.constant dense<0.000000e+00> : vector<2x288xf32>
    %47 = tpu.matmul %44, %46, %cst_42 {dimension_numbers = #tpu.dot_dimension_numbers<[1], [0], [0], [1], [0, 0, 1, 1], [], []>} : vector<2x8xf32>, vector<8x288xf32>, vector<2x288xf32> -> vector<2x288xf32>
    %48 = arith.addf %42, %47 : vector<2x288xf32>
    %c8 = arith.constant 8 : index
    %c0_43 = arith.constant 0 : index
    %c0_44 = arith.constant 0 : index
    %49 = vector.load %arg3[%c8, %c0_43, %c0_44] : memref<9x2x8xf32, #tpu.memory_space<vmem>>, vector<1x2x8xf32>
    %50 = vector.shape_cast %49 : vector<1x2x8xf32> to vector<2x8xf32>
    %c0_45 = arith.constant 0 : index
    %c0_46 = arith.constant 0 : index
    %c38 = arith.constant 38 : index
    %51 = vector.load %arg1[%c0_45, %c0_46, %c38] : memref<1x8x326xf32, #tpu.memory_space<vmem>>, vector<1x8x288xf32>
    %52 = vector.shape_cast %51 : vector<1x8x288xf32> to vector<8x288xf32>
    %cst_47 = arith.constant dense<0.000000e+00> : vector<2x288xf32>
    %53 = tpu.matmul %50, %52, %cst_47 {dimension_numbers = #tpu.dot_dimension_numbers<[1], [0], [0], [1], [0, 0, 1, 1], [], []>} : vector<2x8xf32>, vector<8x288xf32>, vector<2x288xf32> -> vector<2x288xf32>
    %54 = arith.addf %48, %53 : vector<2x288xf32>
    %c0_48 = arith.constant 0 : index
    %c0_49 = arith.constant 0 : index
    %55 = vector.load %arg4[%c0_48, %c0_49] : memref<2x1xf32, #tpu.memory_space<vmem>>, vector<2x1xf32>
    %56 = vector.broadcast %55 : vector<2x1xf32> to vector<2x288xf32>
    %57 = arith.addf %54, %56 : vector<2x288xf32>
    %cst_50 = arith.constant 5.000000e-01 : f32
    %58 = vector.broadcast %cst_50 : f32 to vector<2x288xf32>
    %59 = arith.mulf %58, %57 : vector<2x288xf32>
    %cst_51 = arith.constant 0.707106769 : f32
    %60 = vector.broadcast %cst_51 : f32 to vector<2x288xf32>
    %61 = arith.mulf %57, %60 : vector<2x288xf32>
    %62 = math.absf %61 : vector<2x288xf32>
    %cst_52 = arith.constant 0.327591091 : f32
    %63 = vector.broadcast %cst_52 : f32 to vector<2x288xf32>
    %64 = arith.mulf %63, %62 : vector<2x288xf32>
    %cst_53 = arith.constant 1.000000e+00 : f32
    %65 = vector.broadcast %cst_53 : f32 to vector<2x288xf32>
    %66 = arith.addf %65, %64 : vector<2x288xf32>
    %cst_54 = arith.constant 1.000000e+00 : f32
    %67 = vector.broadcast %cst_54 : f32 to vector<2x288xf32>
    %68 = arith.divf %67, %66 : vector<2x288xf32>
    %cst_55 = arith.constant 1.06140542 : f32
    %69 = vector.broadcast %cst_55 : f32 to vector<2x288xf32>
    %70 = arith.mulf %69, %68 : vector<2x288xf32>
    %cst_56 = arith.constant -1.45315206 : f32
    %71 = vector.broadcast %cst_56 : f32 to vector<2x288xf32>
    %72 = arith.addf %70, %71 : vector<2x288xf32>
    %73 = arith.mulf %72, %68 : vector<2x288xf32>
    %cst_57 = arith.constant 1.42141378 : f32
    %74 = vector.broadcast %cst_57 : f32 to vector<2x288xf32>
    %75 = arith.addf %73, %74 : vector<2x288xf32>
    %76 = arith.mulf %75, %68 : vector<2x288xf32>
    %cst_58 = arith.constant -0.284496725 : f32
    %77 = vector.broadcast %cst_58 : f32 to vector<2x288xf32>
    %78 = arith.addf %76, %77 : vector<2x288xf32>
    %79 = arith.mulf %78, %68 : vector<2x288xf32>
    %cst_59 = arith.constant 0.254829586 : f32
    %80 = vector.broadcast %cst_59 : f32 to vector<2x288xf32>
    %81 = arith.addf %79, %80 : vector<2x288xf32>
    %82 = arith.mulf %81, %68 : vector<2x288xf32>
    %cst_60 = arith.constant 0.000000e+00 : f32
    %83 = vector.broadcast %cst_60 : f32 to vector<2x288xf32>
    %84 = arith.subf %83, %62 : vector<2x288xf32>
    %85 = arith.mulf %84, %62 : vector<2x288xf32>
    %86 = math.exp %85 : vector<2x288xf32>
    %87 = arith.mulf %82, %86 : vector<2x288xf32>
    %cst_61 = arith.constant 1.000000e+00 : f32
    %88 = vector.broadcast %cst_61 : f32 to vector<2x288xf32>
    %89 = arith.subf %88, %87 : vector<2x288xf32>
    %cst_62 = arith.constant 0.000000e+00 : f32
    %90 = vector.broadcast %cst_62 : f32 to vector<2x288xf32>
    %91 = arith.cmpf olt, %61, %90 : vector<2x288xf32>
    %cst_63 = arith.constant 0.000000e+00 : f32
    %92 = vector.broadcast %cst_63 : f32 to vector<2x288xf32>
    %93 = arith.subf %92, %89 : vector<2x288xf32>
    %94 = arith.select %91, %93, %89 : vector<2x288xi1>, vector<2x288xf32>
    %cst_64 = arith.constant 1.000000e+00 : f32
    %95 = vector.broadcast %cst_64 : f32 to vector<2x288xf32>
    %96 = arith.addf %95, %94 : vector<2x288xf32>
    %97 = arith.mulf %59, %96 : vector<2x288xf32>
    %cst_65 = arith.constant 0.000000e+00 : f32
    %98 = vector.broadcast %cst_65 : f32 to vector<2x326xf32>
    %c0_66 = arith.constant 0 : index
    %c0_67 = arith.constant 0 : index
    %99 = vector.load %arg10[%c0_66, %c0_67] : memref<2x326xf32, #tpu.memory_space<vmem>>, vector<2x326xf32>
    tpu.vector_store %arg10[%c0_66, %c0_67], %98 {strides = array<i32>} : memref<2x326xf32, #tpu.memory_space<vmem>>, vector<2x326xf32>,
    %c0_68 = arith.constant 0 : index
    %c0_69 = arith.constant 0 : index
    %100 = vector.load %arg2[%c0_68, %c0_69] : memref<1x288xf32, #tpu.memory_space<vmem>>, vector<1x288xf32>
    %101 = vector.broadcast %100 : vector<1x288xf32> to vector<2x288xf32>
    %102 = arith.mulf %97, %101 : vector<2x288xf32>
    %c0_70 = arith.constant 0 : index
    %c19_71 = arith.constant 19 : index
    %103 = vector.load %arg10[%c0_70, %c19_71] : memref<2x326xf32, #tpu.memory_space<vmem>>, vector<2x288xf32>
    tpu.vector_store %arg10[%c0_70, %c19_71], %102 {strides = array<i32>} : memref<2x326xf32, #tpu.memory_space<vmem>>, vector<2x288xf32>,
    %cst_72 = arith.constant 0.000000e+00 : f32
    %104 = vector.broadcast %cst_72 : f32 to vector<8x288xf32>
    %c0_73 = arith.constant 0 : index
    %c0_74 = arith.constant 0 : index
    %c0_75 = arith.constant 0 : index
    %105 = vector.load %arg5[%c0_73, %c0_74, %c0_75] : memref<9x8x2xf32, #tpu.memory_space<vmem>>, vector<1x8x2xf32>
    %106 = vector.shape_cast %105 : vector<1x8x2xf32> to vector<8x2xf32>
    %c0_76 = arith.constant 0 : index
    %c0_77 = arith.constant 0 : index
    %107 = vector.load %arg10[%c0_76, %c0_77] : memref<2x326xf32, #tpu.memory_space<vmem>>, vector<2x288xf32>
    %cst_78 = arith.constant dense<0.000000e+00> : vector<8x288xf32>
    %108 = tpu.matmul %106, %107, %cst_78 {dimension_numbers = #tpu.dot_dimension_numbers<[1], [0], [0], [1], [0, 0, 1, 1], [], []>} : vector<8x2xf32>, vector<2x288xf32>, vector<8x288xf32> -> vector<8x288xf32>
    %109 = arith.addf %104, %108 : vector<8x288xf32>
    %c1_79 = arith.constant 1 : index
    %c0_80 = arith.constant 0 : index
    %c0_81 = arith.constant 0 : index
    %110 = vector.load %arg5[%c1_79, %c0_80, %c0_81] : memref<9x8x2xf32, #tpu.memory_space<vmem>>, vector<1x8x2xf32>
    %111 = vector.shape_cast %110 : vector<1x8x2xf32> to vector<8x2xf32>
    %c0_82 = arith.constant 0 : index
    %c1_83 = arith.constant 1 : index
    %112 = vector.load %arg10[%c0_82, %c1_83] : memref<2x326xf32, #tpu.memory_space<vmem>>, vector<2x288xf32>
    %cst_84 = arith.constant dense<0.000000e+00> : vector<8x288xf32>
    %113 = tpu.matmul %111, %112, %cst_84 {dimension_numbers = #tpu.dot_dimension_numbers<[1], [0], [0], [1], [0, 0, 1, 1], [], []>} : vector<8x2xf32>, vector<2x288xf32>, vector<8x288xf32> -> vector<8x288xf32>
    %114 = arith.addf %109, %113 : vector<8x288xf32>
    %c2_85 = arith.constant 2 : index
    %c0_86 = arith.constant 0 : index
    %c0_87 = arith.constant 0 : index
    %115 = vector.load %arg5[%c2_85, %c0_86, %c0_87] : memref<9x8x2xf32, #tpu.memory_space<vmem>>, vector<1x8x2xf32>
    %116 = vector.shape_cast %115 : vector<1x8x2xf32> to vector<8x2xf32>
    %c0_88 = arith.constant 0 : index
    %c2_89 = arith.constant 2 : index
    %117 = vector.load %arg10[%c0_88, %c2_89] : memref<2x326xf32, #tpu.memory_space<vmem>>, vector<2x288xf32>
    %cst_90 = arith.constant dense<0.000000e+00> : vector<8x288xf32>
    %118 = tpu.matmul %116, %117, %cst_90 {dimension_numbers = #tpu.dot_dimension_numbers<[1], [0], [0], [1], [0, 0, 1, 1], [], []>} : vector<8x2xf32>, vector<2x288xf32>, vector<8x288xf32> -> vector<8x288xf32>
    %119 = arith.addf %114, %118 : vector<8x288xf32>
    %c3_91 = arith.constant 3 : index
    %c0_92 = arith.constant 0 : index
    %c0_93 = arith.constant 0 : index
    %120 = vector.load %arg5[%c3_91, %c0_92, %c0_93] : memref<9x8x2xf32, #tpu.memory_space<vmem>>, vector<1x8x2xf32>
    %121 = vector.shape_cast %120 : vector<1x8x2xf32> to vector<8x2xf32>
    %c0_94 = arith.constant 0 : index
    %c18_95 = arith.constant 18 : index
    %122 = vector.load %arg10[%c0_94, %c18_95] : memref<2x326xf32, #tpu.memory_space<vmem>>, vector<2x288xf32>
    %cst_96 = arith.constant dense<0.000000e+00> : vector<8x288xf32>
    %123 = tpu.matmul %121, %122, %cst_96 {dimension_numbers = #tpu.dot_dimension_numbers<[1], [0], [0], [1], [0, 0, 1, 1], [], []>} : vector<8x2xf32>, vector<2x288xf32>, vector<8x288xf32> -> vector<8x288xf32>
    %124 = arith.addf %119, %123 : vector<8x288xf32>
    %c4_97 = arith.constant 4 : index
    %c0_98 = arith.constant 0 : index
    %c0_99 = arith.constant 0 : index
    %125 = vector.load %arg5[%c4_97, %c0_98, %c0_99] : memref<9x8x2xf32, #tpu.memory_space<vmem>>, vector<1x8x2xf32>
    %126 = vector.shape_cast %125 : vector<1x8x2xf32> to vector<8x2xf32>
    %c0_100 = arith.constant 0 : index
    %c19_101 = arith.constant 19 : index
    %127 = vector.load %arg10[%c0_100, %c19_101] : memref<2x326xf32, #tpu.memory_space<vmem>>, vector<2x288xf32>
    %cst_102 = arith.constant dense<0.000000e+00> : vector<8x288xf32>
    %128 = tpu.matmul %126, %127, %cst_102 {dimension_numbers = #tpu.dot_dimension_numbers<[1], [0], [0], [1], [0, 0, 1, 1], [], []>} : vector<8x2xf32>, vector<2x288xf32>, vector<8x288xf32> -> vector<8x288xf32>
    %129 = arith.addf %124, %128 : vector<8x288xf32>
    %c5_103 = arith.constant 5 : index
    %c0_104 = arith.constant 0 : index
    %c0_105 = arith.constant 0 : index
    %130 = vector.load %arg5[%c5_103, %c0_104, %c0_105] : memref<9x8x2xf32, #tpu.memory_space<vmem>>, vector<1x8x2xf32>
    %131 = vector.shape_cast %130 : vector<1x8x2xf32> to vector<8x2xf32>
    %c0_106 = arith.constant 0 : index
    %c20_107 = arith.constant 20 : index
    %132 = vector.load %arg10[%c0_106, %c20_107] : memref<2x326xf32, #tpu.memory_space<vmem>>, vector<2x288xf32>
    %cst_108 = arith.constant dense<0.000000e+00> : vector<8x288xf32>
    %133 = tpu.matmul %131, %132, %cst_108 {dimension_numbers = #tpu.dot_dimension_numbers<[1], [0], [0], [1], [0, 0, 1, 1], [], []>} : vector<8x2xf32>, vector<2x288xf32>, vector<8x288xf32> -> vector<8x288xf32>
    %134 = arith.addf %129, %133 : vector<8x288xf32>
    %c6_109 = arith.constant 6 : index
    %c0_110 = arith.constant 0 : index
    %c0_111 = arith.constant 0 : index
    %135 = vector.load %arg5[%c6_109, %c0_110, %c0_111] : memref<9x8x2xf32, #tpu.memory_space<vmem>>, vector<1x8x2xf32>
    %136 = vector.shape_cast %135 : vector<1x8x2xf32> to vector<8x2xf32>
    %c0_112 = arith.constant 0 : index
    %c36_113 = arith.constant 36 : index
    %137 = vector.load %arg10[%c0_112, %c36_113] : memref<2x326xf32, #tpu.memory_space<vmem>>, vector<2x288xf32>
    %cst_114 = arith.constant dense<0.000000e+00> : vector<8x288xf32>
    %138 = tpu.matmul %136, %137, %cst_114 {dimension_numbers = #tpu.dot_dimension_numbers<[1], [0], [0], [1], [0, 0, 1, 1], [], []>} : vector<8x2xf32>, vector<2x288xf32>, vector<8x288xf32> -> vector<8x288xf32>
    %139 = arith.addf %134, %138 : vector<8x288xf32>
    %c7_115 = arith.constant 7 : index
    %c0_116 = arith.constant 0 : index
    %c0_117 = arith.constant 0 : index
    %140 = vector.load %arg5[%c7_115, %c0_116, %c0_117] : memref<9x8x2xf32, #tpu.memory_space<vmem>>, vector<1x8x2xf32>
    %141 = vector.shape_cast %140 : vector<1x8x2xf32> to vector<8x2xf32>
    %c0_118 = arith.constant 0 : index
    %c37_119 = arith.constant 37 : index
    %142 = vector.load %arg10[%c0_118, %c37_119] : memref<2x326xf32, #tpu.memory_space<vmem>>, vector<2x288xf32>
    %cst_120 = arith.constant dense<0.000000e+00> : vector<8x288xf32>
    %143 = tpu.matmul %141, %142, %cst_120 {dimension_numbers = #tpu.dot_dimension_numbers<[1], [0], [0], [1], [0, 0, 1, 1], [], []>} : vector<8x2xf32>, vector<2x288xf32>, vector<8x288xf32> -> vector<8x288xf32>
    %144 = arith.addf %139, %143 : vector<8x288xf32>
    %c8_121 = arith.constant 8 : index
    %c0_122 = arith.constant 0 : index
    %c0_123 = arith.constant 0 : index
    %145 = vector.load %arg5[%c8_121, %c0_122, %c0_123] : memref<9x8x2xf32, #tpu.memory_space<vmem>>, vector<1x8x2xf32>
    %146 = vector.shape_cast %145 : vector<1x8x2xf32> to vector<8x2xf32>
    %c0_124 = arith.constant 0 : index
    %c38_125 = arith.constant 38 : index
    %147 = vector.load %arg10[%c0_124, %c38_125] : memref<2x326xf32, #tpu.memory_space<vmem>>, vector<2x288xf32>
    %cst_126 = arith.constant dense<0.000000e+00> : vector<8x288xf32>
    %148 = tpu.matmul %146, %147, %cst_126 {dimension_numbers = #tpu.dot_dimension_numbers<[1], [0], [0], [1], [0, 0, 1, 1], [], []>} : vector<8x2xf32>, vector<2x288xf32>, vector<8x288xf32> -> vector<8x288xf32>
    %149 = arith.addf %144, %148 : vector<8x288xf32>
    %c0_127 = arith.constant 0 : index
    %c0_128 = arith.constant 0 : index
    %150 = vector.load %arg6[%c0_127, %c0_128] : memref<8x1xf32, #tpu.memory_space<vmem>>, vector<8x1xf32>
    %151 = vector.broadcast %150 : vector<8x1xf32> to vector<8x288xf32>
    %152 = arith.addf %149, %151 : vector<8x288xf32>
    %c0_129 = arith.constant 0 : index
    %c0_130 = arith.constant 0 : index
    %153 = vector.load %arg7[%c0_129, %c0_130] : memref<8x8xf32, #tpu.memory_space<vmem>>, vector<8x8xf32>
    %c0_131 = arith.constant 0 : index
    %c0_132 = arith.constant 0 : index
    %c19_133 = arith.constant 19 : index
    %154 = vector.load %arg1[%c0_131, %c0_132, %c19_133] : memref<1x8x326xf32, #tpu.memory_space<vmem>>, vector<1x8x288xf32>
    %155 = vector.shape_cast %154 : vector<1x8x288xf32> to vector<8x288xf32>
    %cst_134 = arith.constant dense<0.000000e+00> : vector<8x288xf32>
    %156 = tpu.matmul %153, %155, %cst_134 {dimension_numbers = #tpu.dot_dimension_numbers<[1], [0], [0], [1], [0, 0, 1, 1], [], []>} : vector<8x8xf32>, vector<8x288xf32>, vector<8x288xf32> -> vector<8x288xf32>
    %c0_135 = arith.constant 0 : index
    %c0_136 = arith.constant 0 : index
    %157 = vector.load %arg8[%c0_135, %c0_136] : memref<8x1xf32, #tpu.memory_space<vmem>>, vector<8x1xf32>
    %158 = vector.broadcast %157 : vector<8x1xf32> to vector<8x288xf32>
    %159 = arith.addf %156, %158 : vector<8x288xf32>
    %cst_137 = arith.constant 5.000000e-01 : f32
    %160 = vector.broadcast %cst_137 : f32 to vector<8x288xf32>
    %161 = arith.mulf %160, %159 : vector<8x288xf32>
    %cst_138 = arith.constant 0.707106769 : f32
    %162 = vector.broadcast %cst_138 : f32 to vector<8x288xf32>
    %163 = arith.mulf %159, %162 : vector<8x288xf32>
    %164 = math.absf %163 : vector<8x288xf32>
    %cst_139 = arith.constant 0.327591091 : f32
    %165 = vector.broadcast %cst_139 : f32 to vector<8x288xf32>
    %166 = arith.mulf %165, %164 : vector<8x288xf32>
    %cst_140 = arith.constant 1.000000e+00 : f32
    %167 = vector.broadcast %cst_140 : f32 to vector<8x288xf32>
    %168 = arith.addf %167, %166 : vector<8x288xf32>
    %cst_141 = arith.constant 1.000000e+00 : f32
    %169 = vector.broadcast %cst_141 : f32 to vector<8x288xf32>
    %170 = arith.divf %169, %168 : vector<8x288xf32>
    %cst_142 = arith.constant 1.06140542 : f32
    %171 = vector.broadcast %cst_142 : f32 to vector<8x288xf32>
    %172 = arith.mulf %171, %170 : vector<8x288xf32>
    %cst_143 = arith.constant -1.45315206 : f32
    %173 = vector.broadcast %cst_143 : f32 to vector<8x288xf32>
    %174 = arith.addf %172, %173 : vector<8x288xf32>
    %175 = arith.mulf %174, %170 : vector<8x288xf32>
    %cst_144 = arith.constant 1.42141378 : f32
    %176 = vector.broadcast %cst_144 : f32 to vector<8x288xf32>
    %177 = arith.addf %175, %176 : vector<8x288xf32>
    %178 = arith.mulf %177, %170 : vector<8x288xf32>
    %cst_145 = arith.constant -0.284496725 : f32
    %179 = vector.broadcast %cst_145 : f32 to vector<8x288xf32>
    %180 = arith.addf %178, %179 : vector<8x288xf32>
    %181 = arith.mulf %180, %170 : vector<8x288xf32>
    %cst_146 = arith.constant 0.254829586 : f32
    %182 = vector.broadcast %cst_146 : f32 to vector<8x288xf32>
    %183 = arith.addf %181, %182 : vector<8x288xf32>
    %184 = arith.mulf %183, %170 : vector<8x288xf32>
    %cst_147 = arith.constant 0.000000e+00 : f32
    %185 = vector.broadcast %cst_147 : f32 to vector<8x288xf32>
    %186 = arith.subf %185, %164 : vector<8x288xf32>
    %187 = arith.mulf %186, %164 : vector<8x288xf32>
    %188 = math.exp %187 : vector<8x288xf32>
    %189 = arith.mulf %184, %188 : vector<8x288xf32>
    %cst_148 = arith.constant 1.000000e+00 : f32
    %190 = vector.broadcast %cst_148 : f32 to vector<8x288xf32>
    %191 = arith.subf %190, %189 : vector<8x288xf32>
    %cst_149 = arith.constant 0.000000e+00 : f32
    %192 = vector.broadcast %cst_149 : f32 to vector<8x288xf32>
    %193 = arith.cmpf olt, %163, %192 : vector<8x288xf32>
    %cst_150 = arith.constant 0.000000e+00 : f32
    %194 = vector.broadcast %cst_150 : f32 to vector<8x288xf32>
    %195 = arith.subf %194, %191 : vector<8x288xf32>
    %196 = arith.select %193, %195, %191 : vector<8x288xi1>, vector<8x288xf32>
    %cst_151 = arith.constant 1.000000e+00 : f32
    %197 = vector.broadcast %cst_151 : f32 to vector<8x288xf32>
    %198 = arith.addf %197, %196 : vector<8x288xf32>
    %199 = arith.mulf %161, %198 : vector<8x288xf32>
    %200 = arith.mulf %152, %199 : vector<8x288xf32>
    %cst_152 = arith.constant 5.000000e-01 : f32
    %201 = vector.broadcast %cst_152 : f32 to vector<8x288xf32>
    %202 = arith.mulf %201, %200 : vector<8x288xf32>
    %cst_153 = arith.constant 0.707106769 : f32
    %203 = vector.broadcast %cst_153 : f32 to vector<8x288xf32>
    %204 = arith.mulf %200, %203 : vector<8x288xf32>
    %205 = math.absf %204 : vector<8x288xf32>
    %cst_154 = arith.constant 0.327591091 : f32
    %206 = vector.broadcast %cst_154 : f32 to vector<8x288xf32>
    %207 = arith.mulf %206, %205 : vector<8x288xf32>
    %cst_155 = arith.constant 1.000000e+00 : f32
    %208 = vector.broadcast %cst_155 : f32 to vector<8x288xf32>
    %209 = arith.addf %208, %207 : vector<8x288xf32>
    %cst_156 = arith.constant 1.000000e+00 : f32
    %210 = vector.broadcast %cst_156 : f32 to vector<8x288xf32>
    %211 = arith.divf %210, %209 : vector<8x288xf32>
    %cst_157 = arith.constant 1.06140542 : f32
    %212 = vector.broadcast %cst_157 : f32 to vector<8x288xf32>
    %213 = arith.mulf %212, %211 : vector<8x288xf32>
    %cst_158 = arith.constant -1.45315206 : f32
    %214 = vector.broadcast %cst_158 : f32 to vector<8x288xf32>
    %215 = arith.addf %213, %214 : vector<8x288xf32>
    %216 = arith.mulf %215, %211 : vector<8x288xf32>
    %cst_159 = arith.constant 1.42141378 : f32
    %217 = vector.broadcast %cst_159 : f32 to vector<8x288xf32>
    %218 = arith.addf %216, %217 : vector<8x288xf32>
    %219 = arith.mulf %218, %211 : vector<8x288xf32>
    %cst_160 = arith.constant -0.284496725 : f32
    %220 = vector.broadcast %cst_160 : f32 to vector<8x288xf32>
    %221 = arith.addf %219, %220 : vector<8x288xf32>
    %222 = arith.mulf %221, %211 : vector<8x288xf32>
    %cst_161 = arith.constant 0.254829586 : f32
    %223 = vector.broadcast %cst_161 : f32 to vector<8x288xf32>
    %224 = arith.addf %222, %223 : vector<8x288xf32>
    %225 = arith.mulf %224, %211 : vector<8x288xf32>
    %cst_162 = arith.constant 0.000000e+00 : f32
    %226 = vector.broadcast %cst_162 : f32 to vector<8x288xf32>
    %227 = arith.subf %226, %205 : vector<8x288xf32>
    %228 = arith.mulf %227, %205 : vector<8x288xf32>
    %229 = math.exp %228 : vector<8x288xf32>
    %230 = arith.mulf %225, %229 : vector<8x288xf32>
    %cst_163 = arith.constant 1.000000e+00 : f32
    %231 = vector.broadcast %cst_163 : f32 to vector<8x288xf32>
    %232 = arith.subf %231, %230 : vector<8x288xf32>
    %cst_164 = arith.constant 0.000000e+00 : f32
    %233 = vector.broadcast %cst_164 : f32 to vector<8x288xf32>
    %234 = arith.cmpf olt, %204, %233 : vector<8x288xf32>
    %cst_165 = arith.constant 0.000000e+00 : f32
    %235 = vector.broadcast %cst_165 : f32 to vector<8x288xf32>
    %236 = arith.subf %235, %232 : vector<8x288xf32>
    %237 = arith.select %234, %236, %232 : vector<8x288xi1>, vector<8x288xf32>
    %cst_166 = arith.constant 1.000000e+00 : f32
    %238 = vector.broadcast %cst_166 : f32 to vector<8x288xf32>
    %239 = arith.addf %238, %237 : vector<8x288xf32>
    %240 = arith.mulf %202, %239 : vector<8x288xf32>
    %c0_167 = arith.constant 0 : index
    %c0_168 = arith.constant 0 : index
    %c0_169 = arith.constant 0 : index
    %241 = vector.load %arg9[%c0_167, %c0_168, %c0_169] : memref<1x8x288xf32, #tpu.memory_space<vmem>>, vector<1x8x288xf32>
    %242 = vector.shape_cast %241 : vector<1x8x288xf32> to vector<8x288xf32>
    %243 = vector.shape_cast %240 : vector<8x288xf32> to vector<1x8x288xf32>
    tpu.vector_store %arg9[%c0_167, %c0_168, %c0_169], %243 {strides = array<i32>} : memref<1x8x288xf32, #tpu.memory_space<vmem>>, vector<1x8x288xf32>,
    return
  }
  func.func @transform_0(%arg0: i32) -> (i32, i32, i32) {
    %c0_i32 = arith.constant 0 : i32
    %c0_i32_0 = arith.constant 0 : i32
    %c0_i32_1 = arith.constant 0 : i32
    return %arg0, %c0_i32, %c0_i32_0 : i32, i32, i32
  }
  func.func @transform_1(%arg0: i32) -> (i32, i32) {
    %c0_i32 = arith.constant 0 : i32
    %c0_i32_0 = arith.constant 0 : i32
    %c0_i32_1 = arith.constant 0 : i32
    return %c0_i32, %c0_i32_0 : i32, i32
  }
  func.func @transform_2(%arg0: i32) -> (i32, i32, i32) {
    %c0_i32 = arith.constant 0 : i32
    %c0_i32_0 = arith.constant 0 : i32
    %c0_i32_1 = arith.constant 0 : i32
    %c0_i32_2 = arith.constant 0 : i32
    return %c0_i32, %c0_i32_0, %c0_i32_1 : i32, i32, i32
  }
  func.func @transform_3(%arg0: i32) -> (i32, i32) {
    %c0_i32 = arith.constant 0 : i32
    %c0_i32_0 = arith.constant 0 : i32
    %c0_i32_1 = arith.constant 0 : i32
    return %c0_i32, %c0_i32_0 : i32, i32
  }
  func.func @transform_4(%arg0: i32) -> (i32, i32, i32) {
    %c0_i32 = arith.constant 0 : i32
    %c0_i32_0 = arith.constant 0 : i32
    %c0_i32_1 = arith.constant 0 : i32
    %c0_i32_2 = arith.constant 0 : i32
    return %c0_i32, %c0_i32_0, %c0_i32_1 : i32, i32, i32
  }
  func.func @transform_5(%arg0: i32) -> (i32, i32) {
    %c0_i32 = arith.constant 0 : i32
    %c0_i32_0 = arith.constant 0 : i32
    %c0_i32_1 = arith.constant 0 : i32
    return %c0_i32, %c0_i32_0 : i32, i32
  }
  func.func @transform_6(%arg0: i32) -> (i32, i32) {
    %c0_i32 = arith.constant 0 : i32
    %c0_i32_0 = arith.constant 0 : i32
    %c0_i32_1 = arith.constant 0 : i32
    return %c0_i32, %c0_i32_0 : i32, i32
  }
  func.func @transform_7(%arg0: i32) -> (i32, i32) {
    %c0_i32 = arith.constant 0 : i32
    %c0_i32_0 = arith.constant 0 : i32
    %c0_i32_1 = arith.constant 0 : i32
    return %c0_i32, %c0_i32_0 : i32, i32
  }
  func.func @transform_8(%arg0: i32) -> (i32, i32, i32) {
    %c0_i32 = arith.constant 0 : i32
    %c0_i32_0 = arith.constant 0 : i32
    %c0_i32_1 = arith.constant 0 : i32
    return %arg0, %c0_i32, %c0_i32_0 : i32, i32, i32
  }
}

</mosaic_0001>

<llo_original>
// kernel: local_att_forward.1
$region0: #{local_att_forward.1}
  #allocation0 [shape = 'u32[]', space=smem, size = 0x4, offset = 0x4, fixed_abs, tag = 'smem constant byte address 0x4 - core index']
  #allocation1 [shape = 'u32[144,128]{1,0:T(1,128)}', space=vmem, size = 0x12000, scoped, tag = 'internal scratch']
  #allocation2 [shape = 'f32[2,326]{1,0:T(2,128)}', space=vmem, size = 0xc00, scoped, tag = 'scratch operand']
  %s0 = inlined_call_operand.vmem [shape: f32[2,8,326], index: 0, kind: input, shape index: {}]
  %s1 = inlined_call_operand.vmem [shape: f32[1,288], index: 1, kind: input, shape index: {}]
  %s2 = inlined_call_operand.vmem [shape: f32[9,2,8], index: 2, kind: input, shape index: {}]
  %s3 = inlined_call_operand.vmem [shape: f32[2,1], index: 3, kind: input, shape index: {}]
  %s4 = inlined_call_operand.vmem [shape: f32[9,8,2], index: 4, kind: input, shape index: {}]
  %s5 = inlined_call_operand.vmem [shape: f32[8,1], index: 5, kind: input, shape index: {}]
  %s6 = inlined_call_operand.vmem [shape: f32[8,8], index: 6, kind: input, shape index: {}]
  %s7 = inlined_call_operand.vmem [shape: f32[8,1], index: 7, kind: input, shape index: {}]
  %s8 = inlined_call_operand.vmem [shape: f32[2,8,288], index: 8, kind: output, shape index: {}]
  %s9 = sld [smem:[#allocation0]]
  $region65: #{local_att_forward.1} parent=0
    _
  %s11 = ssub.s32 1, %s9
  %s12 = scalar_select 0, %s11, %s9
  loop: start=0, step=1, limit=4
  $region2: #{local_att_forward.1} parent=0 // loop_pre_header
    _
  $region3: #{local_att_forward.1} parent=0 // loop_header
    %s14 = sphi 0, %s18
    %p15 = scmp.ge.s32.totalorder %s14, 4
    %s24 = sphi 0, %s26
    %s27 = sphi 0, %s24
    %s28 = sphi 0, %s27
    %s44 = sphi 0, %s28
    %s48 = sphi 0, %s48
    %s50 = sphi 0, %s48
    %s51 = sphi 0, %s50
    %s65 = sphi 0, %s51
    %s69 = sphi 0, %s69
    %s71 = sphi 0, %s69
    %s72 = sphi 0, %s71
    %s86 = sphi 0, %s72
    %s90 = sphi 0, %s90
    %s92 = sphi 0, %s90
    %s93 = sphi 0, %s92
    %s107 = sphi 0, %s93
    %s111 = sphi 0, %s111
    %s113 = sphi 0, %s111
    %s114 = sphi 0, %s113
    %s128 = sphi 0, %s114
    %s132 = sphi 0, %s132
    %s134 = sphi 0, %s132
    %s135 = sphi 0, %s134
    %s149 = sphi 0, %s135
    %s153 = sphi 0, %s153
    %s155 = sphi 0, %s153
    %s156 = sphi 0, %s155
    %s170 = sphi 0, %s156
    %s174 = sphi 0, %s174
    %s176 = sphi 0, %s174
    %s177 = sphi 0, %s176
    %s191 = sphi 0, %s177
    %s197 = sphi 0, %s199
    %s200 = sphi 0, %s197
    %s201 = sphi 0, %s200
    %s217 = sphi 0, %s201
  $region4: #{local_att_forward.1} parent=0 // loop_header_branch
    %17 = sbr.rel (%p15) target = $region8
  $region5: #{local_att_forward.1} parent=0 // loop_body
    %s19 = ssub.s32 %s14, 1
    %s20 = ssub.s32 %s14, 2
    %s21 = sadd.s32 %s14, 1
    %s22 = ssub.s32 %s14, %s21
    %p23 = scmp.eq.s32.totalorder %s22, 0
    %s25 = sadd.s32 %s24, 1
    %s26 = scalar_select %p23, %s24, %s25
    %p29 = pneg %p23
    %p30 = scmp.eq.s32.totalorder %s14, 1
    %p31 = por %p29, %p30
    %p32 = scmp.ne.s32.totalorder %s24, %s27
    %p33 = scmp.eq.s32.totalorder %s14, 0
    %p34 = por %p32, %p33
    %p35 = scmp.ne.s32.totalorder %s24, %s27
    %p36 = scmp.eq.s32.totalorder %s19, 1
    %p37 = por %p35, %p36
    %p38 = scmp.ne.s32.totalorder %s27, %s28
    %p39 = scmp.eq.s32.totalorder %s19, 0
    %p40 = por %p38, %p39
    %p41 = scmp.ne.s32.totalorder %s27, %s28
    %p42 = scmp.eq.s32.totalorder %s20, 1
    %p43 = por %p41, %p42
    %p45 = scmp.ne.s32.totalorder %s28, %s44
    %p46 = scmp.eq.s32.totalorder %s20, 0
    %p47 = por %p45, %p46
    %s49 = sadd.s32 %s48, 1
    %p52 = scmp.eq.s32.totalorder %s14, 1
    %p53 = scmp.ne.s32.totalorder %s48, %s50
    %p54 = scmp.eq.s32.totalorder %s14, 0
    %p55 = por %p53, %p54
    %p56 = scmp.ne.s32.totalorder %s48, %s50
    %p57 = scmp.eq.s32.totalorder %s19, 1
    %p58 = por %p56, %p57
    %p59 = scmp.ne.s32.totalorder %s50, %s51
    %p60 = scmp.eq.s32.totalorder %s19, 0
    %p61 = por %p59, %p60
    %p62 = scmp.ne.s32.totalorder %s50, %s51
    %p63 = scmp.eq.s32.totalorder %s20, 1
    %p64 = por %p62, %p63
    %p66 = scmp.ne.s32.totalorder %s51, %s65
    %p67 = scmp.eq.s32.totalorder %s20, 0
    %p68 = por %p66, %p67
    %s70 = sadd.s32 %s69, 1
    %p73 = scmp.eq.s32.totalorder %s14, 1
    %p74 = scmp.ne.s32.totalorder %s69, %s71
    %p75 = scmp.eq.s32.totalorder %s14, 0
    %p76 = por %p74, %p75
    %p77 = scmp.ne.s32.totalorder %s69, %s71
    %p78 = scmp.eq.s32.totalorder %s19, 1
    %p79 = por %p77, %p78
    %p80 = scmp.ne.s32.totalorder %s71, %s72
    %p81 = scmp.eq.s32.totalorder %s19, 0
    %p82 = por %p80, %p81
    %p83 = scmp.ne.s32.totalorder %s71, %s72
    %p84 = scmp.eq.s32.totalorder %s20, 1
    %p85 = por %p83, %p84
    %p87 = scmp.ne.s32.totalorder %s72, %s86
    %p88 = scmp.eq.s32.totalorder %s20, 0
    %p89 = por %p87, %p88
    %s91 = sadd.s32 %s90, 1
    %p94 = scmp.eq.s32.totalorder %s14, 1
    %p95 = scmp.ne.s32.totalorder %s90, %s92
    %p96 = scmp.eq.s32.totalorder %s14, 0
    %p97 = por %p95, %p96
    %p98 = scmp.ne.s32.totalorder %s90, %s92
    %p99 = scmp.eq.s32.totalorder %s19, 1
    %p100 = por %p98, %p99
    %p101 = scmp.ne.s32.totalorder %s92, %s93
    %p102 = scmp.eq.s32.totalorder %s19, 0
    %p103 = por %p101, %p102
    %p104 = scmp.ne.s32.totalorder %s92, %s93
    %p105 = scmp.eq.s32.totalorder %s20, 1
    %p106 = por %p104, %p105
    %p108 = scmp.ne.s32.totalorder %s93, %s107
    %p109 = scmp.eq.s32.totalorder %s20, 0
    %p110 = por %p108, %p109
    %s112 = sadd.s32 %s111, 1
    %p115 = scmp.eq.s32.totalorder %s14, 1
    %p116 = scmp.ne.s32.totalorder %s111, %s113
    %p117 = scmp.eq.s32.totalorder %s14, 0
    %p118 = por %p116, %p117
    %p119 = scmp.ne.s32.totalorder %s111, %s113
    %p120 = scmp.eq.s32.totalorder %s19, 1
    %p121 = por %p119, %p120
    %p122 = scmp.ne.s32.totalorder %s113, %s114
    %p123 = scmp.eq.s32.totalorder %s19, 0
    %p124 = por %p122, %p123
    %p125 = scmp.ne.s32.totalorder %s113, %s114
    %p126 = scmp.eq.s32.totalorder %s20, 1
    %p127 = por %p125, %p126
    %p129 = scmp.ne.s32.totalorder %s114, %s128
    %p130 = scmp.eq.s32.totalorder %s20, 0
    %p131 = por %p129, %p130
    %s133 = sadd.s32 %s132, 1
    %p136 = scmp.eq.s32.totalorder %s14, 1
    %p137 = scmp.ne.s32.totalorder %s132, %s134
    %p138 = scmp.eq.s32.totalorder %s14, 0
    %p139 = por %p137, %p138
    %p140 = scmp.ne.s32.totalorder %s132, %s134
    %p141 = scmp.eq.s32.totalorder %s19, 1
    %p142 = por %p140, %p141
    %p143 = scmp.ne.s32.totalorder %s134, %s135
    %p144 = scmp.eq.s32.totalorder %s19, 0
    %p145 = por %p143, %p144
    %p146 = scmp.ne.s32.totalorder %s134, %s135
    %p147 = scmp.eq.s32.totalorder %s20, 1
    %p148 = por %p146, %p147
    %p150 = scmp.ne.s32.totalorder %s135, %s149
    %p151 = scmp.eq.s32.totalorder %s20, 0
    %p152 = por %p150, %p151
    %s154 = sadd.s32 %s153, 1
    %p157 = scmp.eq.s32.totalorder %s14, 1
    %p158 = scmp.ne.s32.totalorder %s153, %s155
    %p159 = scmp.eq.s32.totalorder %s14, 0
    %p160 = por %p158, %p159
    %p161 = scmp.ne.s32.totalorder %s153, %s155
    %p162 = scmp.eq.s32.totalorder %s19, 1
    %p163 = por %p161, %p162
    %p164 = scmp.ne.s32.totalorder %s155, %s156
    %p165 = scmp.eq.s32.totalorder %s19, 0
    %p166 = por %p164, %p165
    %p167 = scmp.ne.s32.totalorder %s155, %s156
    %p168 = scmp.eq.s32.totalorder %s20, 1
    %p169 = por %p167, %p168
    %p171 = scmp.ne.s32.totalorder %s156, %s170
    %p172 = scmp.eq.s32.totalorder %s20, 0
    %p173 = por %p171, %p172
    %s175 = sadd.s32 %s174, 1
    %p178 = scmp.eq.s32.totalorder %s14, 1
    %p179 = scmp.ne.s32.totalorder %s174, %s176
    %p180 = scmp.eq.s32.totalorder %s14, 0
    %p181 = por %p179, %p180
    %p182 = scmp.ne.s32.totalorder %s174, %s176
    %p183 = scmp.eq.s32.totalorder %s19, 1
    %p184 = por %p182, %p183
    %p185 = scmp.ne.s32.totalorder %s176, %s177
    %p186 = scmp.eq.s32.totalorder %s19, 0
    %p187 = por %p185, %p186
    %p188 = scmp.ne.s32.totalorder %s176, %s177
    %p189 = scmp.eq.s32.totalorder %s20, 1
    %p190 = por %p188, %p189
    %p192 = scmp.ne.s32.totalorder %s177, %s191
    %p193 = scmp.eq.s32.totalorder %s20, 0
    %p194 = por %p192, %p193
    %s195 = ssub.s32 %s14, %s21
    %p196 = scmp.eq.s32.totalorder %s195, 0
    %s198 = sadd.s32 %s197, 1
    %s199 = scalar_select %p196, %s197, %s198
    %p202 = pneg %p196
    %p203 = scmp.eq.s32.totalorder %s14, 1
    %p204 = por %p202, %p203
    %p205 = scmp.ne.s32.totalorder %s197, %s200
    %p206 = scmp.eq.s32.totalorder %s14, 0
    %p207 = por %p205, %p206
    %p208 = scmp.ne.s32.totalorder %s197, %s200
    %p209 = scmp.eq.s32.totalorder %s19, 1
    %p210 = por %p208, %p209
    %p211 = scmp.ne.s32.totalorder %s200, %s201
    %p212 = scmp.eq.s32.totalorder %s19, 0
    %p213 = por %p211, %p212
    %p214 = scmp.ne.s32.totalorder %s200, %s201
    %p215 = scmp.eq.s32.totalorder %s20, 1
    %p216 = por %p214, %p215
    %p218 = scmp.ne.s32.totalorder %s201, %s217
    %p219 = scmp.eq.s32.totalorder %s20, 0
    %p220 = por %p218, %p219
    %p221 = scmp.le.s32.totalorder 1, %s14
    %p222 = scmp.lt.s32.totalorder %s14, 3
    %p223 = pnand %p221, %p222
    %p224 = pneg %p223
    // Predicated region
    $region9: #{local_att_forward.1} parent=5 // pred_check
      _
    $region10: #{local_att_forward.1} parent=5 // pred_check_branch
      %226 = sbr.rel (%p223) target = $region12
    $region11: #{local_att_forward.1} parent=5 // pred_region
      %s227 = ssub.s32 %s14, 1
      // Predicated region
      $region13: #{local_att_forward.1} parent=11 // pred_check
        %p228 = pneg %p61
      $region14: #{local_att_forward.1} parent=11 // pred_check_branch
        %230 = sbr.rel (%p228) target = $region16
      $region15: #{local_att_forward.1} parent=11 // pred_region
        _
      $region16: #{local_att_forward.1} parent=11 // pred_fallthru
        _
      // Predicated region
      $region17: #{local_att_forward.1} parent=11 // pred_check
        %p231 = pneg %p82
      $region18: #{local_att_forward.1} parent=11 // pred_check_branch
        %233 = sbr.rel (%p231) target = $region20
      $region19: #{local_att_forward.1} parent=11 // pred_region
        _
      $region20: #{local_att_forward.1} parent=11 // pred_fallthru
        _
      // Predicated region
      $region21: #{local_att_forward.1} parent=11 // pred_check
        %p234 = pneg %p103
      $region22: #{local_att_forward.1} parent=11 // pred_check_branch
        %236 = sbr.rel (%p234) target = $region24
      $region23: #{local_att_forward.1} parent=11 // pred_region
        _
      $region24: #{local_att_forward.1} parent=11 // pred_fallthru
        _
      // Predicated region
      $region25: #{local_att_forward.1} parent=11 // pred_check
        %p237 = pneg %p124
      $region26: #{local_att_forward.1} parent=11 // pred_check_branch
        %239 = sbr.rel (%p237) target = $region28
      $region27: #{local_att_forward.1} parent=11 // pred_region
        _
      $region28: #{local_att_forward.1} parent=11 // pred_fallthru
        _
      // Predicated region
      $region29: #{local_att_forward.1} parent=11 // pred_check
        %p240 = pneg %p145
      $region30: #{local_att_forward.1} parent=11 // pred_check_branch
        %242 = sbr.rel (%p240) target = $region32
      $region31: #{local_att_forward.1} parent=11 // pred_region
        _
      $region32: #{local_att_forward.1} parent=11 // pred_fallthru
        _
      // Predicated region
      $region33: #{local_att_forward.1} parent=11 // pred_check
        %p243 = pneg %p166
      $region34: #{local_att_forward.1} parent=11 // pred_check_branch
        %245 = sbr.rel (%p243) target = $region36
      $region35: #{local_att_forward.1} parent=11 // pred_region
        _
      $region36: #{local_att_forward.1} parent=11 // pred_fallthru
        _
      // Predicated region
      $region37: #{local_att_forward.1} parent=11 // pred_check
        %p246 = pneg %p187
      $region38: #{local_att_forward.1} parent=11 // pred_check_branch
        %248 = sbr.rel (%p246) target = $region40
      $region39: #{local_att_forward.1} parent=11 // pred_region
        _
      $region40: #{local_att_forward.1} parent=11 // pred_fallthru
        _
    $region12: #{local_att_forward.1} parent=5 // pred_fallthru
      _
    %p249 = scmp.lt.s32.totalorder %s14, 2
    // Predicated region
    $region41: #{local_att_forward.1} parent=5 // pred_check
      %p250 = pneg %p249
    $region42: #{local_att_forward.1} parent=5 // pred_check_branch
      %252 = sbr.rel (%p250) target = $region44
    $region43: #{local_att_forward.1} parent=5 // pred_region
      // Predicated region
      $region45: #{local_att_forward.1} parent=43 // pred_check
        %p253 = pneg %p34
      $region46: #{local_att_forward.1} parent=43 // pred_check_branch
        %255 = sbr.rel (%p253) target = $region48
      $region47: #{local_att_forward.1} parent=43 // pred_region
        %p256 = scmp.lt.s32.totalorder %s14, 1
        %s257 = scalar_select %p256, %s14, 1
        %s258 = smul.addr %s257, 3
        %s259 = smul.addr %s258, 8
        %s260 = scalar_lea.vmem %s0, %s259
      $region48: #{local_att_forward.1} parent=43 // pred_fallthru
        _
    $region44: #{local_att_forward.1} parent=5 // pred_fallthru
      _
    %p261 = scmp.le.s32.totalorder 1, %s14
    %p262 = scmp.lt.s32.totalorder %s14, 3
    %p263 = pnand %p261, %p262
    %p264 = pneg %p263
    // Predicated region
    $region49: #{local_att_forward.1} parent=5 // pred_check
      _
    $region50: #{local_att_forward.1} parent=5 // pred_check_branch
      %266 = sbr.rel (%p263) target = $region52
    $region51: #{local_att_forward.1} parent=5 // pred_region
      %s267 = ssub.s32 %s14, 1
      %p268 = scmp.lt.s32.totalorder %s19, 1
      %s269 = scalar_select %p268, %s19, 1
      %s270 = smul.addr %s269, 3
      %s271 = smul.addr %s270, 8
      %s272 = scalar_lea.vmem %s0, %s271
      %p273 = pneg %p40
      %p274 = pneg %p37
      %p275 = pneg %p61
      %p276 = pneg %p58
      %p277 = pneg %p82
      %p278 = pneg %p79
      %p279 = pneg %p103
      %p280 = pneg %p100
      %p281 = pneg %p124
      %p282 = pneg %p121
      %p283 = pneg %p145
      %p284 = pneg %p142
      %p285 = pneg %p166
      %p286 = pneg %p163
      %p287 = pneg %p187
      %p288 = pneg %p184
      %p289 = pneg %p213
      %p290 = pneg %p210
      %p291 = scmp.lt.s32.totalorder %s19, 1
      %s292 = scalar_select %p291, %s19, 1
      %s293 = smul.addr %s292, 3
      %s294 = smul.addr %s293, 8
      %s295 = scalar_lea.vmem %s8, %s294
      %p296 = scmp.lt.s32.totalorder %s19, 1
      %s297 = scalar_select %p296, %s19, 1
      %s298 = smul.addr %s297, 3
      %s299 = smul.addr %s298, 8
      %s300 = scalar_lea.vmem %s0, %s299
      %p301 = scmp.lt.s32.totalorder %s19, 1
      %s302 = scalar_select %p301, %s19, 1
      %s303 = smul.addr %s302, 3
      %s304 = smul.addr %s303, 8
      %s305 = scalar_lea.vmem %s8, %s304
      %v306 = vld [vmem:[%s2] sm:$0x3]
      %v307 = vld [vmem:[%s300] sm:$0xff]
      %v308 = vld [vmem:[%s300 + $0x8] sm:$0xff]
      %v309 = vld [vmem:[%s300 + $0x10] sm:$0xff]
      %s310 = scalar_lea.vmem %s2, 2
      %v311 = vld [vmem:[%s310] sm:$0x3]
      %315 = vrot.lane.b32.xlu0 %v307, 127
      %v316 = vpop.permute.xlu0 %315
      %317 = vrot.lane.b32.xlu0 %v308, 127
      %v318 = vpop.permute.xlu0 %317
      %319 = vrot.lane.b32.xlu0 %v309, 127
      %v320 = vpop.permute.xlu0 %319
      %vm321 = vcmask 1039360
      %v322 = vsel %vm321, %v316, %v318
      %v323 = vsel %vm321, %v318, %v320
      %vm327 = vcmask 64512
      %v329 = vsel %vm327, %v311, 0
      %331 = vmatprep.subr.mxu0 %v323
      %332 = vmatpush1.msra.mxu0 %v322
      %333 = vmatprep.subr.mxu0 0.0
      %334 = vmatpush1.msra.mxu0 0.0
      %335 = vmatprep.subr.mxu0 0.0
      %336 = vmatpush1.msra.mxu0 0.0
      %337 = vmatprep.subr.mxu0 0.0
      %338 = vmatpush1.msra.mxu0 0.0
      %339 = vmatprep.subr.mxu0 0.0
      %340 = vmatpush1.msra.mxu0 0.0
      %341 = vmatprep.subr.mxu0 0.0
      %342 = vmatpush1.msra.mxu0 0.0
      %343 = vmatprep.subr.mxu0 0.0
      %344 = vmatpush1.msra.mxu0 0.0
      %345 = vmatprep.subr.mxu0 0.0
      %346 = vmatpush1.msra.mxu0 0.0
      %347 = vmatprep.subr.mxu0 0.0
      %348 = vmatpush1.msra.mxu0 0.0
      %349 = vmatprep.subr.mxu0 0.0
      %350 = vmatpush1.msra.mxu0 0.0
      %351 = vmatprep.subr.mxu0 0.0
      %352 = vmatpush1.msra.mxu0 0.0
      %353 = vmatprep.subr.mxu0 0.0
      %354 = vmatpush1.msra.mxu0 0.0
      %355 = vmatprep.subr.mxu0 0.0
      %356 = vmatpush1.msra.mxu0 0.0
      %357 = vmatprep.subr.mxu0 0.0
      %358 = vmatpush1.msra.mxu0 0.0
      %359 = vmatprep.subr.mxu0 0.0
      %360 = vmatpush1.msra.mxu0 0.0
      %361 = vmatprep.subr.mxu0 0.0
      %362 = vmatpush1.msra.mxu0 0.0
      %363 = vmatprep.subr.mxu0 0.0
      %364 = vmatpush1.msra.mxu0 0.0
      %365 = vmatprep.subr.mxu0 0.0
      %366 = vmatpush1.msra.mxu0 0.0
      %367 = vmatprep.subr.mxu0 0.0
      %368 = vmatpush1.msra.mxu0 0.0
      %369 = vmatprep.subr.mxu0 0.0
      %370 = vmatpush1.msra.mxu0 0.0
      %371 = vmatprep.subr.mxu0 0.0
      %372 = vmatpush1.msra.mxu0 0.0
      %373 = vmatprep.subr.mxu0 0.0
      %374 = vmatpush1.msra.mxu0 0.0
      %375 = vmatprep.subr.mxu0 0.0
      %376 = vmatpush1.msra.mxu0 0.0
      %377 = vmatprep.subr.mxu0 0.0
      %378 = vmatpush1.msra.mxu0 0.0
      %379 = vmatprep.subr.mxu0 0.0
      %380 = vmatpush1.msra.mxu0 0.0
      %381 = vmatprep.subr.mxu0 0.0
      %382 = vmatpush1.msra.mxu0 0.0
      %383 = vmatprep.subr.mxu0 0.0
      %384 = vmatpush1.msra.mxu0 0.0
      %385 = vmatprep.subr.mxu0 0.0
      %386 = vmatpush1.msra.mxu0 0.0
      %387 = vmatprep.subr.mxu0 0.0
      %388 = vmatpush1.msra.mxu0 0.0
      %389 = vmatprep.subr.mxu0 0.0
      %390 = vmatpush1.msra.mxu0 0.0
      %391 = vmatprep.subr.mxu0 0.0
      %392 = vmatpush1.msra.mxu0 0.0
      %393 = vmatprep.subr.mxu0 0.0
      %394 = vmatpush1.msra.mxu0 0.0
      %395 = vmatprep.mubr.f32.mxu0 0.0
      %396 = vmatmul.mubr.f32.gmra.mrb[0].mxu0 %v329
      %v397 = vpop.f32.mrb[0].mxu0
      %v398 = vadd.f32 0.0, %v397
      %v399 = vpop.f32.mrb[0].mxu0
      %v400 = vadd.f32 0.0, %v399
      %401 = vdwg.mxu0
      %402 = vmatprep.subr.mxu0 0.0
      %403 = vmatpush1.msra.mxu0 %v320
      %404 = vmatprep.subr.mxu0 0.0
      %405 = vmatpush1.msra.mxu0 0.0
      %406 = vmatprep.subr.mxu0 0.0
      %407 = vmatpush1.msra.mxu0 0.0
      %408 = vmatprep.subr.mxu0 0.0
      %409 = vmatpush1.msra.mxu0 0.0
      %410 = vmatprep.subr.mxu0 0.0
      %411 = vmatpush1.msra.mxu0 0.0
      %412 = vmatprep.subr.mxu0 0.0
      %413 = vmatpush1.msra.mxu0 0.0
      %414 = vmatprep.subr.mxu0 0.0
      %415 = vmatpush1.msra.mxu0 0.0
      %416 = vmatprep.subr.mxu0 0.0
      %417 = vmatpush1.msra.mxu0 0.0
      %418 = vmatprep.subr.mxu0 0.0
      %419 = vmatpush1.msra.mxu0 0.0
      %420 = vmatprep.subr.mxu0 0.0
      %421 = vmatpush1.msra.mxu0 0.0
      %422 = vmatprep.subr.mxu0 0.0
      %423 = vmatpush1.msra.mxu0 0.0
      %424 = vmatprep.subr.mxu0 0.0
      %425 = vmatpush1.msra.mxu0 0.0
      %426 = vmatprep.subr.mxu0 0.0
      %427 = vmatpush1.msra.mxu0 0.0
      %428 = vmatprep.subr.mxu0 0.0
      %429 = vmatpush1.msra.mxu0 0.0
      %430 = vmatprep.subr.mxu0 0.0
      %431 = vmatpush1.msra.mxu0 0.0
      %432 = vmatprep.subr.mxu0 0.0
      %433 = vmatpush1.msra.mxu0 0.0
      %434 = vmatprep.subr.mxu0 0.0
      %435 = vmatpush1.msra.mxu0 0.0
      %436 = vmatprep.subr.mxu0 0.0
      %437 = vmatpush1.msra.mxu0 0.0
      %438 = vmatprep.subr.mxu0 0.0
      %439 = vmatpush1.msra.mxu0 0.0
      %440 = vmatprep.subr.mxu0 0.0
      %441 = vmatpush1.msra.mxu0 0.0
      %442 = vmatprep.subr.mxu0 0.0
      %443 = vmatpush1.msra.mxu0 0.0
      %444 = vmatprep.subr.mxu0 0.0
      %445 = vmatpush1.msra.mxu0 0.0
      %446 = vmatprep.subr.mxu0 0.0
      %447 = vmatpush1.msra.mxu0 0.0
      %448 = vmatprep.subr.mxu0 0.0
      %449 = vmatpush1.msra.mxu0 0.0
      %450 = vmatprep.subr.mxu0 0.0
      %451 = vmatpush1.msra.mxu0 0.0
      %452 = vmatprep.subr.mxu0 0.0
      %453 = vmatpush1.msra.mxu0 0.0
      %454 = vmatprep.subr.mxu0 0.0
      %455 = vmatpush1.msra.mxu0 0.0
      %456 = vmatprep.subr.mxu0 0.0
      %457 = vmatpush1.msra.mxu0 0.0
      %458 = vmatprep.subr.mxu0 0.0
      %459 = vmatpush1.msra.mxu0 0.0
      %460 = vmatprep.subr.mxu0 0.0
      %461 = vmatpush1.msra.mxu0 0.0
      %462 = vmatprep.subr.mxu0 0.0
      %463 = vmatpush1.msra.mxu0 0.0
      %464 = vmatprep.subr.mxu0 0.0
      %465 = vmatpush1.msra.mxu0 0.0
      %466 = vmatprep.mubr.f32.mxu0 0.0
      %467 = vmatmul.mubr.f32.gmra.mrb[0].mxu0 %v329
      %v468 = vpop.f32.mrb[0].mxu0
      %v469 = vadd.f32 0.0, %v468
      %v470 = vpop.f32.mrb[0].mxu0
      %471 = vdwg.mxu0
      %v473 = vsel %vm327, %v306, 0
      %475 = vmatprep.subr.mxu0 %v308
      %476 = vmatpush1.msra.mxu0 %v307
      %477 = vmatprep.subr.mxu0 0.0
      %478 = vmatpush1.msra.mxu0 0.0
      %479 = vmatprep.subr.mxu0 0.0
      %480 = vmatpush1.msra.mxu0 0.0
      %481 = vmatprep.subr.mxu0 0.0
      %482 = vmatpush1.msra.mxu0 0.0
      %483 = vmatprep.subr.mxu0 0.0
      %484 = vmatpush1.msra.mxu0 0.0
      %485 = vmatprep.subr.mxu0 0.0
      %486 = vmatpush1.msra.mxu0 0.0
      %487 = vmatprep.subr.mxu0 0.0
      %488 = vmatpush1.msra.mxu0 0.0
      %489 = vmatprep.subr.mxu0 0.0
      %490 = vmatpush1.msra.mxu0 0.0
      %491 = vmatprep.subr.mxu0 0.0
      %492 = vmatpush1.msra.mxu0 0.0
      %493 = vmatprep.subr.mxu0 0.0
      %494 = vmatpush1.msra.mxu0 0.0
      %495 = vmatprep.subr.mxu0 0.0
      %496 = vmatpush1.msra.mxu0 0.0
      %497 = vmatprep.subr.mxu0 0.0
      %498 = vmatpush1.msra.mxu0 0.0
      %499 = vmatprep.subr.mxu0 0.0
      %500 = vmatpush1.msra.mxu0 0.0
      %501 = vmatprep.subr.mxu0 0.0
      %502 = vmatpush1.msra.mxu0 0.0
      %503 = vmatprep.subr.mxu0 0.0
      %504 = vmatpush1.msra.mxu0 0.0
      %505 = vmatprep.subr.mxu0 0.0
      %506 = vmatpush1.msra.mxu0 0.0
      %507 = vmatprep.subr.mxu0 0.0
      %508 = vmatpush1.msra.mxu0 0.0
      %509 = vmatprep.subr.mxu0 0.0
      %510 = vmatpush1.msra.mxu0 0.0
      %511 = vmatprep.subr.mxu0 0.0
      %512 = vmatpush1.msra.mxu0 0.0
      %513 = vmatprep.subr.mxu0 0.0
      %514 = vmatpush1.msra.mxu0 0.0
      %515 = vmatprep.subr.mxu0 0.0
      %516 = vmatpush1.msra.mxu0 0.0
      %517 = vmatprep.subr.mxu0 0.0
      %518 = vmatpush1.msra.mxu0 0.0
      %519 = vmatprep.subr.mxu0 0.0
      %520 = vmatpush1.msra.mxu0 0.0
      %521 = vmatprep.subr.mxu0 0.0
      %522 = vmatpush1.msra.mxu0 0.0
      %523 = vmatprep.subr.mxu0 0.0
      %524 = vmatpush1.msra.mxu0 0.0
      %525 = vmatprep.subr.mxu0 0.0
      %526 = vmatpush1.msra.mxu0 0.0
      %527 = vmatprep.subr.mxu0 0.0
      %528 = vmatpush1.msra.mxu0 0.0
      %529 = vmatprep.subr.mxu0 0.0
      %530 = vmatpush1.msra.mxu0 0.0
      %531 = vmatprep.subr.mxu0 0.0
      %532 = vmatpush1.msra.mxu0 0.0
      %533 = vmatprep.subr.mxu0 0.0
      %534 = vmatpush1.msra.mxu0 0.0
      %535 = vmatprep.subr.mxu0 0.0
      %536 = vmatpush1.msra.mxu0 0.0
      %537 = vmatprep.subr.mxu0 0.0
      %538 = vmatpush1.msra.mxu0 0.0
      %539 = vmatprep.mubr.f32.mxu0 0.0
      %540 = vmatmul.mubr.f32.gmra.mrb[0].mxu0 %v473
      %v541 = vpop.f32.mrb[0].mxu0
      %v542 = vadd.f32 %v398, %v541
      %v543 = vpop.f32.mrb[0].mxu0
      %v544 = vadd.f32 %v400, %v543
      %545 = vdwg.mxu0
      %546 = vmatprep.subr.mxu0 0.0
      %547 = vmatpush1.msra.mxu0 %v309
      %548 = vmatprep.subr.mxu0 0.0
      %549 = vmatpush1.msra.mxu0 0.0
      %550 = vmatprep.subr.mxu0 0.0
      %551 = vmatpush1.msra.mxu0 0.0
      %552 = vmatprep.subr.mxu0 0.0
      %553 = vmatpush1.msra.mxu0 0.0
      %554 = vmatprep.subr.mxu0 0.0
      %555 = vmatpush1.msra.mxu0 0.0
      %556 = vmatprep.subr.mxu0 0.0
      %557 = vmatpush1.msra.mxu0 0.0
      %558 = vmatprep.subr.mxu0 0.0
      %559 = vmatpush1.msra.mxu0 0.0
      %560 = vmatprep.subr.mxu0 0.0
      %561 = vmatpush1.msra.mxu0 0.0
      %562 = vmatprep.subr.mxu0 0.0
      %563 = vmatpush1.msra.mxu0 0.0
      %564 = vmatprep.subr.mxu0 0.0
      %565 = vmatpush1.msra.mxu0 0.0
      %566 = vmatprep.subr.mxu0 0.0
      %567 = vmatpush1.msra.mxu0 0.0
      %568 = vmatprep.subr.mxu0 0.0
      %569 = vmatpush1.msra.mxu0 0.0
      %570 = vmatprep.subr.mxu0 0.0
      %571 = vmatpush1.msra.mxu0 0.0
      %572 = vmatprep.subr.mxu0 0.0
      %573 = vmatpush1.msra.mxu0 0.0
      %574 = vmatprep.subr.mxu0 0.0
      %575 = vmatpush1.msra.mxu0 0.0
      %576 = vmatprep.subr.mxu0 0.0
      %577 = vmatpush1.msra.mxu0 0.0
      %578 = vmatprep.subr.mxu0 0.0
      %579 = vmatpush1.msra.mxu0 0.0
      %580 = vmatprep.subr.mxu0 0.0
      %581 = vmatpush1.msra.mxu0 0.0
      %582 = vmatprep.subr.mxu0 0.0
      %583 = vmatpush1.msra.mxu0 0.0
      %584 = vmatprep.subr.mxu0 0.0
      %585 = vmatpush1.msra.mxu0 0.0
      %586 = vmatprep.subr.mxu0 0.0
      %587 = vmatpush1.msra.mxu0 0.0
      %588 = vmatprep.subr.mxu0 0.0
      %589 = vmatpush1.msra.mxu0 0.0
      %590 = vmatprep.subr.mxu0 0.0
      %591 = vmatpush1.msra.mxu0 0.0
      %592 = vmatprep.subr.mxu0 0.0
      %593 = vmatpush1.msra.mxu0 0.0
      %594 = vmatprep.subr.mxu0 0.0
      %595 = vmatpush1.msra.mxu0 0.0
      %596 = vmatprep.subr.mxu0 0.0
      %597 = vmatpush1.msra.mxu0 0.0
      %598 = vmatprep.subr.mxu0 0.0
      %599 = vmatpush1.msra.mxu0 0.0
      %600 = vmatprep.subr.mxu0 0.0
      %601 = vmatpush1.msra.mxu0 0.0
      %602 = vmatprep.subr.mxu0 0.0
      %603 = vmatpush1.msra.mxu0 0.0
      %604 = vmatprep.subr.mxu0 0.0
      %605 = vmatpush1.msra.mxu0 0.0
      %606 = vmatprep.subr.mxu0 0.0
      %607 = vmatpush1.msra.mxu0 0.0
      %608 = vmatprep.subr.mxu0 0.0
      %609 = vmatpush1.msra.mxu0 0.0
      %610 = vmatprep.mubr.f32.mxu0 0.0
      %611 = vmatmul.mubr.f32.gmra.mrb[0].mxu0 %v473
      %v612 = vpop.f32.mrb[0].mxu0
      %v613 = vadd.f32 %v469, %v612
      %v614 = vpop.f32.mrb[0].mxu0
      %615 = vdwg.mxu0
      %s616 = scalar_lea.vmem %s2, 4
      %v617 = vld [vmem:[%s616] sm:$0x3]
      %618 = vrot.lane.b32.xlu0 %v307, 126
      %v619 = vpop.permute.xlu0 %618
      %620 = vrot.lane.b32.xlu0 %v308, 126
      %v621 = vpop.permute.xlu0 %620
      %622 = vrot.lane.b32.xlu0 %v309, 126
      %v623 = vpop.permute.xlu0 %622
      %vm624 = vcmask 1031168
      %v625 = vsel %vm624, %v619, %v621
      %v626 = vsel %vm624, %v621, %v623
      %v631 = vsel %vm327, %v617, 0
      %633 = vmatprep.subr.mxu0 %v626
      %634 = vmatpush1.msra.mxu0 %v625
      %635 = vmatprep.subr.mxu0 0.0
      %636 = vmatpush1.msra.mxu0 0.0
      %637 = vmatprep.subr.mxu0 0.0
      %638 = vmatpush1.msra.mxu0 0.0
      %639 = vmatprep.subr.mxu0 0.0
      %640 = vmatpush1.msra.mxu0 0.0
      %641 = vmatprep.subr.mxu0 0.0
      %642 = vmatpush1.msra.mxu0 0.0
      %643 = vmatprep.subr.mxu0 0.0
      %644 = vmatpush1.msra.mxu0 0.0
      %645 = vmatprep.subr.mxu0 0.0
      %646 = vmatpush1.msra.mxu0 0.0
      %647 = vmatprep.subr.mxu0 0.0
      %648 = vmatpush1.msra.mxu0 0.0
      %649 = vmatprep.subr.mxu0 0.0
      %650 = vmatpush1.msra.mxu0 0.0
      %651 = vmatprep.subr.mxu0 0.0
      %652 = vmatpush1.msra.mxu0 0.0
      %653 = vmatprep.subr.mxu0 0.0
      %654 = vmatpush1.msra.mxu0 0.0
      %655 = vmatprep.subr.mxu0 0.0
      %656 = vmatpush1.msra.mxu0 0.0
      %657 = vmatprep.subr.mxu0 0.0
      %658 = vmatpush1.msra.mxu0 0.0
      %659 = vmatprep.subr.mxu0 0.0
      %660 = vmatpush1.msra.mxu0 0.0
      %661 = vmatprep.subr.mxu0 0.0
      %662 = vmatpush1.msra.mxu0 0.0
      %663 = vmatprep.subr.mxu0 0.0
      %664 = vmatpush1.msra.mxu0 0.0
      %665 = vmatprep.subr.mxu0 0.0
      %666 = vmatpush1.msra.mxu0 0.0
      %667 = vmatprep.subr.mxu0 0.0
      %668 = vmatpush1.msra.mxu0 0.0
      %669 = vmatprep.subr.mxu0 0.0
      %670 = vmatpush1.msra.mxu0 0.0
      %671 = vmatprep.subr.mxu0 0.0
      %672 = vmatpush1.msra.mxu0 0.0
      %673 = vmatprep.subr.mxu0 0.0
      %674 = vmatpush1.msra.mxu0 0.0
      %675 = vmatprep.subr.mxu0 0.0
      %676 = vmatpush1.msra.mxu0 0.0
      %677 = vmatprep.subr.mxu0 0.0
      %678 = vmatpush1.msra.mxu0 0.0
      %679 = vmatprep.subr.mxu0 0.0
      %680 = vmatpush1.msra.mxu0 0.0
      %681 = vmatprep.subr.mxu0 0.0
      %682 = vmatpush1.msra.mxu0 0.0
      %683 = vmatprep.subr.mxu0 0.0
      %684 = vmatpush1.msra.mxu0 0.0
      %685 = vmatprep.subr.mxu0 0.0
      %686 = vmatpush1.msra.mxu0 0.0
      %687 = vmatprep.subr.mxu0 0.0
      %688 = vmatpush1.msra.mxu0 0.0
      %689 = vmatprep.subr.mxu0 0.0
      %690 = vmatpush1.msra.mxu0 0.0
      %691 = vmatprep.subr.mxu0 0.0
      %692 = vmatpush1.msra.mxu0 0.0
      %693 = vmatprep.subr.mxu0 0.0
      %694 = vmatpush1.msra.mxu0 0.0
      %695 = vmatprep.subr.mxu0 0.0
      %696 = vmatpush1.msra.mxu0 0.0
      %697 = vmatprep.mubr.f32.mxu0 0.0
      %698 = vmatmul.mubr.f32.gmra.mrb[0].mxu0 %v631
      %v699 = vpop.f32.mrb[0].mxu0
      %v700 = vadd.f32 0.0, %v699
      %v701 = vpop.f32.mrb[0].mxu0
      %v702 = vadd.f32 0.0, %v701
      %703 = vdwg.mxu0
      %704 = vmatprep.subr.mxu0 0.0
      %705 = vmatpush1.msra.mxu0 %v623
      %706 = vmatprep.subr.mxu0 0.0
      %707 = vmatpush1.msra.mxu0 0.0
      %708 = vmatprep.subr.mxu0 0.0
      %709 = vmatpush1.msra.mxu0 0.0
      %710 = vmatprep.subr.mxu0 0.0
      %711 = vmatpush1.msra.mxu0 0.0
      %712 = vmatprep.subr.mxu0 0.0
      %713 = vmatpush1.msra.mxu0 0.0
      %714 = vmatprep.subr.mxu0 0.0
      %715 = vmatpush1.msra.mxu0 0.0
      %716 = vmatprep.subr.mxu0 0.0
      %717 = vmatpush1.msra.mxu0 0.0
      %718 = vmatprep.subr.mxu0 0.0
      %719 = vmatpush1.msra.mxu0 0.0
      %720 = vmatprep.subr.mxu0 0.0
      %721 = vmatpush1.msra.mxu0 0.0
      %722 = vmatprep.subr.mxu0 0.0
      %723 = vmatpush1.msra.mxu0 0.0
      %724 = vmatprep.subr.mxu0 0.0
      %725 = vmatpush1.msra.mxu0 0.0
      %726 = vmatprep.subr.mxu0 0.0
      %727 = vmatpush1.msra.mxu0 0.0
      %728 = vmatprep.subr.mxu0 0.0
      %729 = vmatpush1.msra.mxu0 0.0
      %730 = vmatprep.subr.mxu0 0.0
      %731 = vmatpush1.msra.mxu0 0.0
      %732 = vmatprep.subr.mxu0 0.0
      %733 = vmatpush1.msra.mxu0 0.0
      %734 = vmatprep.subr.mxu0 0.0
      %735 = vmatpush1.msra.mxu0 0.0
      %736 = vmatprep.subr.mxu0 0.0
      %737 = vmatpush1.msra.mxu0 0.0
      %738 = vmatprep.subr.mxu0 0.0
      %739 = vmatpush1.msra.mxu0 0.0
      %740 = vmatprep.subr.mxu0 0.0
      %741 = vmatpush1.msra.mxu0 0.0
      %742 = vmatprep.subr.mxu0 0.0
      %743 = vmatpush1.msra.mxu0 0.0
      %744 = vmatprep.subr.mxu0 0.0
      %745 = vmatpush1.msra.mxu0 0.0
      %746 = vmatprep.subr.mxu0 0.0
      %747 = vmatpush1.msra.mxu0 0.0
      %748 = vmatprep.subr.mxu0 0.0
      %749 = vmatpush1.msra.mxu0 0.0
      %750 = vmatprep.subr.mxu0 0.0
      %751 = vmatpush1.msra.mxu0 0.0
      %752 = vmatprep.subr.mxu0 0.0
      %753 = vmatpush1.msra.mxu0 0.0
      %754 = vmatprep.subr.mxu0 0.0
      %755 = vmatpush1.msra.mxu0 0.0
      %756 = vmatprep.subr.mxu0 0.0
      %757 = vmatpush1.msra.mxu0 0.0
      %758 = vmatprep.subr.mxu0 0.0
      %759 = vmatpush1.msra.mxu0 0.0
      %760 = vmatprep.subr.mxu0 0.0
      %761 = vmatpush1.msra.mxu0 0.0
      %762 = vmatprep.subr.mxu0 0.0
      %763 = vmatpush1.msra.mxu0 0.0
      %764 = vmatprep.subr.mxu0 0.0
      %765 = vmatpush1.msra.mxu0 0.0
      %766 = vmatprep.subr.mxu0 0.0
      %767 = vmatpush1.msra.mxu0 0.0
      %768 = vmatprep.mubr.f32.mxu0 0.0
      %769 = vmatmul.mubr.f32.gmra.mrb[0].mxu0 %v631
      %v770 = vpop.f32.mrb[0].mxu0
      %v771 = vadd.f32 0.0, %v770
      %v772 = vpop.f32.mrb[0].mxu0
      %773 = vdwg.mxu0
      %v774 = vadd.f32 %v542, %v700
      %v775 = vadd.f32 %v544, %v702
      %v776 = vadd.f32 %v613, %v771
      %s777 = scalar_lea.vmem %s2, 6
      %v778 = vld [vmem:[%s777] sm:$0x3]
      %779 = vrot.lane.b32.xlu0 %v307, 110
      %v780 = vpop.permute.xlu0 %779
      %781 = vrot.lane.b32.xlu0 %v308, 110
      %v782 = vpop.permute.xlu0 %781
      %783 = vrot.lane.b32.xlu0 %v309, 110
      %v784 = vpop.permute.xlu0 %783
      %vm785 = vcmask 900096
      %v786 = vsel %vm785, %v780, %v782
      %v787 = vsel %vm785, %v782, %v784
      %v792 = vsel %vm327, %v778, 0
      %794 = vmatprep.subr.mxu0 %v787
      %795 = vmatpush1.msra.mxu0 %v786
      %796 = vmatprep.subr.mxu0 0.0
      %797 = vmatpush1.msra.mxu0 0.0
      %798 = vmatprep.subr.mxu0 0.0
      %799 = vmatpush1.msra.mxu0 0.0
      %800 = vmatprep.subr.mxu0 0.0
      %801 = vmatpush1.msra.mxu0 0.0
      %802 = vmatprep.subr.mxu0 0.0
      %803 = vmatpush1.msra.mxu0 0.0
      %804 = vmatprep.subr.mxu0 0.0
      %805 = vmatpush1.msra.mxu0 0.0
      %806 = vmatprep.subr.mxu0 0.0
      %807 = vmatpush1.msra.mxu0 0.0
      %808 = vmatprep.subr.mxu0 0.0
      %809 = vmatpush1.msra.mxu0 0.0
      %810 = vmatprep.subr.mxu0 0.0
      %811 = vmatpush1.msra.mxu0 0.0
      %812 = vmatprep.subr.mxu0 0.0
      %813 = vmatpush1.msra.mxu0 0.0
      %814 = vmatprep.subr.mxu0 0.0
      %815 = vmatpush1.msra.mxu0 0.0
      %816 = vmatprep.subr.mxu0 0.0
      %817 = vmatpush1.msra.mxu0 0.0
      %818 = vmatprep.subr.mxu0 0.0
      %819 = vmatpush1.msra.mxu0 0.0
      %820 = vmatprep.subr.mxu0 0.0
      %821 = vmatpush1.msra.mxu0 0.0
      %822 = vmatprep.subr.mxu0 0.0
      %823 = vmatpush1.msra.mxu0 0.0
      %824 = vmatprep.subr.mxu0 0.0
      %825 = vmatpush1.msra.mxu0 0.0
      %826 = vmatprep.subr.mxu0 0.0
      %827 = vmatpush1.msra.mxu0 0.0
      %828 = vmatprep.subr.mxu0 0.0
      %829 = vmatpush1.msra.mxu0 0.0
      %830 = vmatprep.subr.mxu0 0.0
      %831 = vmatpush1.msra.mxu0 0.0
      %832 = vmatprep.subr.mxu0 0.0
      %833 = vmatpush1.msra.mxu0 0.0
      %834 = vmatprep.subr.mxu0 0.0
      %835 = vmatpush1.msra.mxu0 0.0
      %836 = vmatprep.subr.mxu0 0.0
      %837 = vmatpush1.msra.mxu0 0.0
      %838 = vmatprep.subr.mxu0 0.0
      %839 = vmatpush1.msra.mxu0 0.0
      %840 = vmatprep.subr.mxu0 0.0
      %841 = vmatpush1.msra.mxu0 0.0
      %842 = vmatprep.subr.mxu0 0.0
      %843 = vmatpush1.msra.mxu0 0.0
      %844 = vmatprep.subr.mxu0 0.0
      %845 = vmatpush1.msra.mxu0 0.0
      %846 = vmatprep.subr.mxu0 0.0
      %847 = vmatpush1.msra.mxu0 0.0
      %848 = vmatprep.subr.mxu0 0.0
      %849 = vmatpush1.msra.mxu0 0.0
      %850 = vmatprep.subr.mxu0 0.0
      %851 = vmatpush1.msra.mxu0 0.0
      %852 = vmatprep.subr.mxu0 0.0
      %853 = vmatpush1.msra.mxu0 0.0
      %854 = vmatprep.subr.mxu0 0.0
      %855 = vmatpush1.msra.mxu0 0.0
      %856 = vmatprep.subr.mxu0 0.0
      %857 = vmatpush1.msra.mxu0 0.0
      %858 = vmatprep.mubr.f32.mxu0 0.0
      %859 = vmatmul.mubr.f32.gmra.mrb[0].mxu0 %v792
      %v860 = vpop.f32.mrb[0].mxu0
      %v861 = vadd.f32 0.0, %v860
      %v862 = vpop.f32.mrb[0].mxu0
      %v863 = vadd.f32 0.0, %v862
      %864 = vdwg.mxu0
      %865 = vmatprep.subr.mxu0 0.0
      %866 = vmatpush1.msra.mxu0 %v784
      %867 = vmatprep.subr.mxu0 0.0
      %868 = vmatpush1.msra.mxu0 0.0
      %869 = vmatprep.subr.mxu0 0.0
      %870 = vmatpush1.msra.mxu0 0.0
      %871 = vmatprep.subr.mxu0 0.0
      %872 = vmatpush1.msra.mxu0 0.0
      %873 = vmatprep.subr.mxu0 0.0
      %874 = vmatpush1.msra.mxu0 0.0
      %875 = vmatprep.subr.mxu0 0.0
      %876 = vmatpush1.msra.mxu0 0.0
      %877 = vmatprep.subr.mxu0 0.0
      %878 = vmatpush1.msra.mxu0 0.0
      %879 = vmatprep.subr.mxu0 0.0
      %880 = vmatpush1.msra.mxu0 0.0
      %881 = vmatprep.subr.mxu0 0.0
      %882 = vmatpush1.msra.mxu0 0.0
      %883 = vmatprep.subr.mxu0 0.0
      %884 = vmatpush1.msra.mxu0 0.0
      %885 = vmatprep.subr.mxu0 0.0
      %886 = vmatpush1.msra.mxu0 0.0
      %887 = vmatprep.subr.mxu0 0.0
      %888 = vmatpush1.msra.mxu0 0.0
      %889 = vmatprep.subr.mxu0 0.0
      %890 = vmatpush1.msra.mxu0 0.0
      %891 = vmatprep.subr.mxu0 0.0
      %892 = vmatpush1.msra.mxu0 0.0
      %893 = vmatprep.subr.mxu0 0.0
      %894 = vmatpush1.msra.mxu0 0.0
      %895 = vmatprep.subr.mxu0 0.0
      %896 = vmatpush1.msra.mxu0 0.0
      %897 = vmatprep.subr.mxu0 0.0
      %898 = vmatpush1.msra.mxu0 0.0
      %899 = vmatprep.subr.mxu0 0.0
      %900 = vmatpush1.msra.mxu0 0.0
      %901 = vmatprep.subr.mxu0 0.0
      %902 = vmatpush1.msra.mxu0 0.0
      %903 = vmatprep.subr.mxu0 0.0
      %904 = vmatpush1.msra.mxu0 0.0
      %905 = vmatprep.subr.mxu0 0.0
      %906 = vmatpush1.msra.mxu0 0.0
      %907 = vmatprep.subr.mxu0 0.0
      %908 = vmatpush1.msra.mxu0 0.0
      %909 = vmatprep.subr.mxu0 0.0
      %910 = vmatpush1.msra.mxu0 0.0
      %911 = vmatprep.subr.mxu0 0.0
      %912 = vmatpush1.msra.mxu0 0.0
      %913 = vmatprep.subr.mxu0 0.0
      %914 = vmatpush1.msra.mxu0 0.0
      %915 = vmatprep.subr.mxu0 0.0
      %916 = vmatpush1.msra.mxu0 0.0
      %917 = vmatprep.subr.mxu0 0.0
      %918 = vmatpush1.msra.mxu0 0.0
      %919 = vmatprep.subr.mxu0 0.0
      %920 = vmatpush1.msra.mxu0 0.0
      %921 = vmatprep.subr.mxu0 0.0
      %922 = vmatpush1.msra.mxu0 0.0
      %923 = vmatprep.subr.mxu0 0.0
      %924 = vmatpush1.msra.mxu0 0.0
      %925 = vmatprep.subr.mxu0 0.0
      %926 = vmatpush1.msra.mxu0 0.0
      %927 = vmatprep.subr.mxu0 0.0
      %928 = vmatpush1.msra.mxu0 0.0
      %929 = vmatprep.mubr.f32.mxu0 0.0
      %930 = vmatmul.mubr.f32.gmra.mrb[0].mxu0 %v792
      %v931 = vpop.f32.mrb[0].mxu0
      %v932 = vadd.f32 0.0, %v931
      %v933 = vpop.f32.mrb[0].mxu0
      %934 = vdwg.mxu0
      %v935 = vadd.f32 %v774, %v861
      %v936 = vadd.f32 %v775, %v863
      %v937 = vadd.f32 %v776, %v932
      %s938 = scalar_lea.vmem %s2, 8
      %v939 = vld [vmem:[%s938] sm:$0x3]
      %940 = vrot.lane.b32.xlu0 %v307, 109
      %v941 = vpop.permute.xlu0 %940
      %942 = vrot.lane.b32.xlu0 %v308, 109
      %v943 = vpop.permute.xlu0 %942
      %944 = vrot.lane.b32.xlu0 %v309, 109
      %v945 = vpop.permute.xlu0 %944
      %vm946 = vcmask 891904
      %v947 = vsel %vm946, %v941, %v943
      %v948 = vsel %vm946, %v943, %v945
      %v953 = vsel %vm327, %v939, 0
      %955 = vmatprep.subr.mxu0 %v948
      %956 = vmatpush1.msra.mxu0 %v947
      %957 = vmatprep.subr.mxu0 0.0
      %958 = vmatpush1.msra.mxu0 0.0
      %959 = vmatprep.subr.mxu0 0.0
      %960 = vmatpush1.msra.mxu0 0.0
      %961 = vmatprep.subr.mxu0 0.0
      %962 = vmatpush1.msra.mxu0 0.0
      %963 = vmatprep.subr.mxu0 0.0
      %964 = vmatpush1.msra.mxu0 0.0
      %965 = vmatprep.subr.mxu0 0.0
      %966 = vmatpush1.msra.mxu0 0.0
      %967 = vmatprep.subr.mxu0 0.0
      %968 = vmatpush1.msra.mxu0 0.0
      %969 = vmatprep.subr.mxu0 0.0
      %970 = vmatpush1.msra.mxu0 0.0
      %971 = vmatprep.subr.mxu0 0.0
      %972 = vmatpush1.msra.mxu0 0.0
      %973 = vmatprep.subr.mxu0 0.0
      %974 = vmatpush1.msra.mxu0 0.0
      %975 = vmatprep.subr.mxu0 0.0
      %976 = vmatpush1.msra.mxu0 0.0
      %977 = vmatprep.subr.mxu0 0.0
      %978 = vmatpush1.msra.mxu0 0.0
      %979 = vmatprep.subr.mxu0 0.0
      %980 = vmatpush1.msra.mxu0 0.0
      %981 = vmatprep.subr.mxu0 0.0
      %982 = vmatpush1.msra.mxu0 0.0
      %983 = vmatprep.subr.mxu0 0.0
      %984 = vmatpush1.msra.mxu0 0.0
      %985 = vmatprep.subr.mxu0 0.0
      %986 = vmatpush1.msra.mxu0 0.0
      %987 = vmatprep.subr.mxu0 0.0
      %988 = vmatpush1.msra.mxu0 0.0
      %989 = vmatprep.subr.mxu0 0.0
      %990 = vmatpush1.msra.mxu0 0.0
      %991 = vmatprep.subr.mxu0 0.0
      %992 = vmatpush1.msra.mxu0 0.0
      %993 = vmatprep.subr.mxu0 0.0
      %994 = vmatpush1.msra.mxu0 0.0
      %995 = vmatprep.subr.mxu0 0.0
      %996 = vmatpush1.msra.mxu0 0.0
      %997 = vmatprep.subr.mxu0 0.0
      %998 = vmatpush1.msra.mxu0 0.0
      %999 = vmatprep.subr.mxu0 0.0
      %1000 = vmatpush1.msra.mxu0 0.0
      %1001 = vmatprep.subr.mxu0 0.0
      %1002 = vmatpush1.msra.mxu0 0.0
      %1003 = vmatprep.subr.mxu0 0.0
      %1004 = vmatpush1.msra.mxu0 0.0
      %1005 = vmatprep.subr.mxu0 0.0
      %1006 = vmatpush1.msra.mxu0 0.0
      %1007 = vmatprep.subr.mxu0 0.0
      %1008 = vmatpush1.msra.mxu0 0.0
      %1009 = vmatprep.subr.mxu0 0.0
      %1010 = vmatpush1.msra.mxu0 0.0
      %1011 = vmatprep.subr.mxu0 0.0
      %1012 = vmatpush1.msra.mxu0 0.0
      %1013 = vmatprep.subr.mxu0 0.0
      %1014 = vmatpush1.msra.mxu0 0.0
      %1015 = vmatprep.subr.mxu0 0.0
      %1016 = vmatpush1.msra.mxu0 0.0
      %1017 = vmatprep.subr.mxu0 0.0
      %1018 = vmatpush1.msra.mxu0 0.0
      %1019 = vmatprep.mubr.f32.mxu0 0.0
      %1020 = vmatmul.mubr.f32.gmra.mrb[0].mxu0 %v953
      %v1021 = vpop.f32.mrb[0].mxu0
      %v1022 = vadd.f32 0.0, %v1021
      %v1023 = vpop.f32.mrb[0].mxu0
      %v1024 = vadd.f32 0.0, %v1023
      %1025 = vdwg.mxu0
      %1026 = vmatprep.subr.mxu0 0.0
      %1027 = vmatpush1.msra.mxu0 %v945
      %1028 = vmatprep.subr.mxu0 0.0
      %1029 = vmatpush1.msra.mxu0 0.0
      %1030 = vmatprep.subr.mxu0 0.0
      %1031 = vmatpush1.msra.mxu0 0.0
      %1032 = vmatprep.subr.mxu0 0.0
      %1033 = vmatpush1.msra.mxu0 0.0
      %1034 = vmatprep.subr.mxu0 0.0
      %1035 = vmatpush1.msra.mxu0 0.0
      %1036 = vmatprep.subr.mxu0 0.0
      %1037 = vmatpush1.msra.mxu0 0.0
      %1038 = vmatprep.subr.mxu0 0.0
      %1039 = vmatpush1.msra.mxu0 0.0
      %1040 = vmatprep.subr.mxu0 0.0
      %1041 = vmatpush1.msra.mxu0 0.0
      %1042 = vmatprep.subr.mxu0 0.0
      %1043 = vmatpush1.msra.mxu0 0.0
      %1044 = vmatprep.subr.mxu0 0.0
      %1045 = vmatpush1.msra.mxu0 0.0
      %1046 = vmatprep.subr.mxu0 0.0
      %1047 = vmatpush1.msra.mxu0 0.0
      %1048 = vmatprep.subr.mxu0 0.0
      %1049 = vmatpush1.msra.mxu0 0.0
      %1050 = vmatprep.subr.mxu0 0.0
      %1051 = vmatpush1.msra.mxu0 0.0
      %1052 = vmatprep.subr.mxu0 0.0
      %1053 = vmatpush1.msra.mxu0 0.0
      %1054 = vmatprep.subr.mxu0 0.0
      %1055 = vmatpush1.msra.mxu0 0.0
      %1056 = vmatprep.subr.mxu0 0.0
      %1057 = vmatpush1.msra.mxu0 0.0
      %1058 = vmatprep.subr.mxu0 0.0
      %1059 = vmatpush1.msra.mxu0 0.0
      %1060 = vmatprep.subr.mxu0 0.0
      %1061 = vmatpush1.msra.mxu0 0.0
      %1062 = vmatprep.subr.mxu0 0.0
      %1063 = vmatpush1.msra.mxu0 0.0
      %1064 = vmatprep.subr.mxu0 0.0
      %1065 = vmatpush1.msra.mxu0 0.0
      %1066 = vmatprep.subr.mxu0 0.0
      %1067 = vmatpush1.msra.mxu0 0.0
      %1068 = vmatprep.subr.mxu0 0.0
      %1069 = vmatpush1.msra.mxu0 0.0
      %1070 = vmatprep.subr.mxu0 0.0
      %1071 = vmatpush1.msra.mxu0 0.0
      %1072 = vmatprep.subr.mxu0 0.0
      %1073 = vmatpush1.msra.mxu0 0.0
      %1074 = vmatprep.subr.mxu0 0.0
      %1075 = vmatpush1.msra.mxu0 0.0
      %1076 = vmatprep.subr.mxu0 0.0
      %1077 = vmatpush1.msra.mxu0 0.0
      %1078 = vmatprep.subr.mxu0 0.0
      %1079 = vmatpush1.msra.mxu0 0.0
      %1080 = vmatprep.subr.mxu0 0.0
      %1081 = vmatpush1.msra.mxu0 0.0
      %1082 = vmatprep.subr.mxu0 0.0
      %1083 = vmatpush1.msra.mxu0 0.0
      %1084 = vmatprep.subr.mxu0 0.0
      %1085 = vmatpush1.msra.mxu0 0.0
      %1086 = vmatprep.subr.mxu0 0.0
      %1087 = vmatpush1.msra.mxu0 0.0
      %1088 = vmatprep.subr.mxu0 0.0
      %1089 = vmatpush1.msra.mxu0 0.0
      %1090 = vmatprep.mubr.f32.mxu0 0.0
      %1091 = vmatmul.mubr.f32.gmra.mrb[0].mxu0 %v953
      %v1092 = vpop.f32.mrb[0].mxu0
      %v1093 = vadd.f32 0.0, %v1092
      %v1094 = vpop.f32.mrb[0].mxu0
      %1095 = vdwg.mxu0
      %v1096 = vadd.f32 %v935, %v1022
      %v1097 = vadd.f32 %v936, %v1024
      %v1098 = vadd.f32 %v937, %v1093
      %s1099 = scalar_lea.vmem %s2, 10
      %v1100 = vld [vmem:[%s1099] sm:$0x3]
      %1101 = vrot.lane.b32.xlu0 %v307, 108
      %v1102 = vpop.permute.xlu0 %1101
      %1103 = vrot.lane.b32.xlu0 %v308, 108
      %v1104 = vpop.permute.xlu0 %1103
      %1105 = vrot.lane.b32.xlu0 %v309, 108
      %v1106 = vpop.permute.xlu0 %1105
      %vm1107 = vcmask 883712
      %v1108 = vsel %vm1107, %v1102, %v1104
      %v1109 = vsel %vm1107, %v1104, %v1106
      %v1114 = vsel %vm327, %v1100, 0
      %1116 = vmatprep.subr.mxu0 %v1109
      %1117 = vmatpush1.msra.mxu0 %v1108
      %1118 = vmatprep.subr.mxu0 0.0
      %1119 = vmatpush1.msra.mxu0 0.0
      %1120 = vmatprep.subr.mxu0 0.0
      %1121 = vmatpush1.msra.mxu0 0.0
      %1122 = vmatprep.subr.mxu0 0.0
      %1123 = vmatpush1.msra.mxu0 0.0
      %1124 = vmatprep.subr.mxu0 0.0
      %1125 = vmatpush1.msra.mxu0 0.0
      %1126 = vmatprep.subr.mxu0 0.0
      %1127 = vmatpush1.msra.mxu0 0.0
      %1128 = vmatprep.subr.mxu0 0.0
      %1129 = vmatpush1.msra.mxu0 0.0
      %1130 = vmatprep.subr.mxu0 0.0
      %1131 = vmatpush1.msra.mxu0 0.0
      %1132 = vmatprep.subr.mxu0 0.0
      %1133 = vmatpush1.msra.mxu0 0.0
      %1134 = vmatprep.subr.mxu0 0.0
      %1135 = vmatpush1.msra.mxu0 0.0
      %1136 = vmatprep.subr.mxu0 0.0
      %1137 = vmatpush1.msra.mxu0 0.0
      %1138 = vmatprep.subr.mxu0 0.0
      %1139 = vmatpush1.msra.mxu0 0.0
      %1140 = vmatprep.subr.mxu0 0.0
      %1141 = vmatpush1.msra.mxu0 0.0
      %1142 = vmatprep.subr.mxu0 0.0
      %1143 = vmatpush1.msra.mxu0 0.0
      %1144 = vmatprep.subr.mxu0 0.0
      %1145 = vmatpush1.msra.mxu0 0.0
      %1146 = vmatprep.subr.mxu0 0.0
      %1147 = vmatpush1.msra.mxu0 0.0
      %1148 = vmatprep.subr.mxu0 0.0
      %1149 = vmatpush1.msra.mxu0 0.0
      %1150 = vmatprep.subr.mxu0 0.0
      %1151 = vmatpush1.msra.mxu0 0.0
      %1152 = vmatprep.subr.mxu0 0.0
      %1153 = vmatpush1.msra.mxu0 0.0
      %1154 = vmatprep.subr.mxu0 0.0
      %1155 = vmatpush1.msra.mxu0 0.0
      %1156 = vmatprep.subr.mxu0 0.0
      %1157 = vmatpush1.msra.mxu0 0.0
      %1158 = vmatprep.subr.mxu0 0.0
      %1159 = vmatpush1.msra.mxu0 0.0
      %1160 = vmatprep.subr.mxu0 0.0
      %1161 = vmatpush1.msra.mxu0 0.0
      %1162 = vmatprep.subr.mxu0 0.0
      %1163 = vmatpush1.msra.mxu0 0.0
      %1164 = vmatprep.subr.mxu0 0.0
      %1165 = vmatpush1.msra.mxu0 0.0
      %1166 = vmatprep.subr.mxu0 0.0
      %1167 = vmatpush1.msra.mxu0 0.0
      %1168 = vmatprep.subr.mxu0 0.0
      %1169 = vmatpush1.msra.mxu0 0.0
      %1170 = vmatprep.subr.mxu0 0.0
      %1171 = vmatpush1.msra.mxu0 0.0
      %1172 = vmatprep.subr.mxu0 0.0
      %1173 = vmatpush1.msra.mxu0 0.0
      %1174 = vmatprep.subr.mxu0 0.0
      %1175 = vmatpush1.msra.mxu0 0.0
      %1176 = vmatprep.subr.mxu0 0.0
      %1177 = vmatpush1.msra.mxu0 0.0
      %1178 = vmatprep.subr.mxu0 0.0
      %1179 = vmatpush1.msra.mxu0 0.0
      %1180 = vmatprep.mubr.f32.mxu0 0.0
      %1181 = vmatmul.mubr.f32.gmra.mrb[0].mxu0 %v1114
      %v1182 = vpop.f32.mrb[0].mxu0
      %v1183 = vadd.f32 0.0, %v1182
      %v1184 = vpop.f32.mrb[0].mxu0
      %v1185 = vadd.f32 0.0, %v1184
      %1186 = vdwg.mxu0
      %1187 = vmatprep.subr.mxu0 0.0
      %1188 = vmatpush1.msra.mxu0 %v1106
      %1189 = vmatprep.subr.mxu0 0.0
      %1190 = vmatpush1.msra.mxu0 0.0
      %1191 = vmatprep.subr.mxu0 0.0
      %1192 = vmatpush1.msra.mxu0 0.0
      %1193 = vmatprep.subr.mxu0 0.0
      %1194 = vmatpush1.msra.mxu0 0.0
      %1195 = vmatprep.subr.mxu0 0.0
      %1196 = vmatpush1.msra.mxu0 0.0
      %1197 = vmatprep.subr.mxu0 0.0
      %1198 = vmatpush1.msra.mxu0 0.0
      %1199 = vmatprep.subr.mxu0 0.0
      %1200 = vmatpush1.msra.mxu0 0.0
      %1201 = vmatprep.subr.mxu0 0.0
      %1202 = vmatpush1.msra.mxu0 0.0
      %1203 = vmatprep.subr.mxu0 0.0
      %1204 = vmatpush1.msra.mxu0 0.0
      %1205 = vmatprep.subr.mxu0 0.0
      %1206 = vmatpush1.msra.mxu0 0.0
      %1207 = vmatprep.subr.mxu0 0.0
      %1208 = vmatpush1.msra.mxu0 0.0
      %1209 = vmatprep.subr.mxu0 0.0
      %1210 = vmatpush1.msra.mxu0 0.0
      %1211 = vmatprep.subr.mxu0 0.0
      %1212 = vmatpush1.msra.mxu0 0.0
      %1213 = vmatprep.subr.mxu0 0.0
      %1214 = vmatpush1.msra.mxu0 0.0
      %1215 = vmatprep.subr.mxu0 0.0
      %1216 = vmatpush1.msra.mxu0 0.0
      %1217 = vmatprep.subr.mxu0 0.0
      %1218 = vmatpush1.msra.mxu0 0.0
      %1219 = vmatprep.subr.mxu0 0.0
      %1220 = vmatpush1.msra.mxu0 0.0
      %1221 = vmatprep.subr.mxu0 0.0
      %1222 = vmatpush1.msra.mxu0 0.0
      %1223 = vmatprep.subr.mxu0 0.0
      %1224 = vmatpush1.msra.mxu0 0.0
      %1225 = vmatprep.subr.mxu0 0.0
      %1226 = vmatpush1.msra.mxu0 0.0
      %1227 = vmatprep.subr.mxu0 0.0
      %1228 = vmatpush1.msra.mxu0 0.0
      %1229 = vmatprep.subr.mxu0 0.0
      %1230 = vmatpush1.msra.mxu0 0.0
      %1231 = vmatprep.subr.mxu0 0.0
      %1232 = vmatpush1.msra.mxu0 0.0
      %1233 = vmatprep.subr.mxu0 0.0
      %1234 = vmatpush1.msra.mxu0 0.0
      %1235 = vmatprep.subr.mxu0 0.0
      %1236 = vmatpush1.msra.mxu0 0.0
      %1237 = vmatprep.subr.mxu0 0.0
      %1238 = vmatpush1.msra.mxu0 0.0
      %1239 = vmatprep.subr.mxu0 0.0
      %1240 = vmatpush1.msra.mxu0 0.0
      %1241 = vmatprep.subr.mxu0 0.0
      %1242 = vmatpush1.msra.mxu0 0.0
      %1243 = vmatprep.subr.mxu0 0.0
      %1244 = vmatpush1.msra.mxu0 0.0
      %1245 = vmatprep.subr.mxu0 0.0
      %1246 = vmatpush1.msra.mxu0 0.0
      %1247 = vmatprep.subr.mxu0 0.0
      %1248 = vmatpush1.msra.mxu0 0.0
      %1249 = vmatprep.subr.mxu0 0.0
      %1250 = vmatpush1.msra.mxu0 0.0
      %1251 = vmatprep.mubr.f32.mxu0 0.0
      %1252 = vmatmul.mubr.f32.gmra.mrb[0].mxu0 %v1114
      %v1253 = vpop.f32.mrb[0].mxu0
      %v1254 = vadd.f32 0.0, %v1253
      %v1255 = vpop.f32.mrb[0].mxu0
      %1256 = vdwg.mxu0
      %v1257 = vadd.f32 %v1096, %v1183
      %v1258 = vadd.f32 %v1097, %v1185
      %v1259 = vadd.f32 %v1098, %v1254
      %s1260 = scalar_lea.vmem %s2, 12
      %v1261 = vld [vmem:[%s1260] sm:$0x3]
      %1262 = vrot.lane.b32.xlu0 %v307, 92
      %v1263 = vpop.permute.xlu0 %1262
      %1264 = vrot.lane.b32.xlu0 %v308, 92
      %v1265 = vpop.permute.xlu0 %1264
      %1266 = vrot.lane.b32.xlu0 %v309, 92
      %v1267 = vpop.permute.xlu0 %1266
      %vm1268 = vcmask 752640
      %v1269 = vsel %vm1268, %v1263, %v1265
      %v1270 = vsel %vm1268, %v1265, %v1267
      %v1275 = vsel %vm327, %v1261, 0
      %1277 = vmatprep.subr.mxu0 %v1270
      %1278 = vmatpush1.msra.mxu0 %v1269
      %1279 = vmatprep.subr.mxu0 0.0
      %1280 = vmatpush1.msra.mxu0 0.0
      %1281 = vmatprep.subr.mxu0 0.0
      %1282 = vmatpush1.msra.mxu0 0.0
      %1283 = vmatprep.subr.mxu0 0.0
      %1284 = vmatpush1.msra.mxu0 0.0
      %1285 = vmatprep.subr.mxu0 0.0
      %1286 = vmatpush1.msra.mxu0 0.0
      %1287 = vmatprep.subr.mxu0 0.0
      %1288 = vmatpush1.msra.mxu0 0.0
      %1289 = vmatprep.subr.mxu0 0.0
      %1290 = vmatpush1.msra.mxu0 0.0
      %1291 = vmatprep.subr.mxu0 0.0
      %1292 = vmatpush1.msra.mxu0 0.0
      %1293 = vmatprep.subr.mxu0 0.0
      %1294 = vmatpush1.msra.mxu0 0.0
      %1295 = vmatprep.subr.mxu0 0.0
      %1296 = vmatpush1.msra.mxu0 0.0
      %1297 = vmatprep.subr.mxu0 0.0
      %1298 = vmatpush1.msra.mxu0 0.0
      %1299 = vmatprep.subr.mxu0 0.0
      %1300 = vmatpush1.msra.mxu0 0.0
      %1301 = vmatprep.subr.mxu0 0.0
      %1302 = vmatpush1.msra.mxu0 0.0
      %1303 = vmatprep.subr.mxu0 0.0
      %1304 = vmatpush1.msra.mxu0 0.0
      %1305 = vmatprep.subr.mxu0 0.0
      %1306 = vmatpush1.msra.mxu0 0.0
      %1307 = vmatprep.subr.mxu0 0.0
      %1308 = vmatpush1.msra.mxu0 0.0
      %1309 = vmatprep.subr.mxu0 0.0
      %1310 = vmatpush1.msra.mxu0 0.0
      %1311 = vmatprep.subr.mxu0 0.0
      %1312 = vmatpush1.msra.mxu0 0.0
      %1313 = vmatprep.subr.mxu0 0.0
      %1314 = vmatpush1.msra.mxu0 0.0
      %1315 = vmatprep.subr.mxu0 0.0
      %1316 = vmatpush1.msra.mxu0 0.0
      %1317 = vmatprep.subr.mxu0 0.0
      %1318 = vmatpush1.msra.mxu0 0.0
      %1319 = vmatprep.subr.mxu0 0.0
      %1320 = vmatpush1.msra.mxu0 0.0
      %1321 = vmatprep.subr.mxu0 0.0
      %1322 = vmatpush1.msra.mxu0 0.0
      %1323 = vmatprep.subr.mxu0 0.0
      %1324 = vmatpush1.msra.mxu0 0.0
      %1325 = vmatprep.subr.mxu0 0.0
      %1326 = vmatpush1.msra.mxu0 0.0
      %1327 = vmatprep.subr.mxu0 0.0
      %1328 = vmatpush1.msra.mxu0 0.0
      %1329 = vmatprep.subr.mxu0 0.0
      %1330 = vmatpush1.msra.mxu0 0.0
      %1331 = vmatprep.subr.mxu0 0.0
      %1332 = vmatpush1.msra.mxu0 0.0
      %1333 = vmatprep.subr.mxu0 0.0
      %1334 = vmatpush1.msra.mxu0 0.0
      %1335 = vmatprep.subr.mxu0 0.0
      %1336 = vmatpush1.msra.mxu0 0.0
      %1337 = vmatprep.subr.mxu0 0.0
      %1338 = vmatpush1.msra.mxu0 0.0
      %1339 = vmatprep.subr.mxu0 0.0
      %1340 = vmatpush1.msra.mxu0 0.0
      %1341 = vmatprep.mubr.f32.mxu0 0.0
      %1342 = vmatmul.mubr.f32.gmra.mrb[0].mxu0 %v1275
      %v1343 = vpop.f32.mrb[0].mxu0
      %v1344 = vadd.f32 0.0, %v1343
      %v1345 = vpop.f32.mrb[0].mxu0
      %v1346 = vadd.f32 0.0, %v1345
      %1347 = vdwg.mxu0
      %1348 = vmatprep.subr.mxu0 0.0
      %1349 = vmatpush1.msra.mxu0 %v1267
      %1350 = vmatprep.subr.mxu0 0.0
      %1351 = vmatpush1.msra.mxu0 0.0
      %1352 = vmatprep.subr.mxu0 0.0
      %1353 = vmatpush1.msra.mxu0 0.0
      %1354 = vmatprep.subr.mxu0 0.0
      %1355 = vmatpush1.msra.mxu0 0.0
      %1356 = vmatprep.subr.mxu0 0.0
      %1357 = vmatpush1.msra.mxu0 0.0
      %1358 = vmatprep.subr.mxu0 0.0
      %1359 = vmatpush1.msra.mxu0 0.0
      %1360 = vmatprep.subr.mxu0 0.0
      %1361 = vmatpush1.msra.mxu0 0.0
      %1362 = vmatprep.subr.mxu0 0.0
      %1363 = vmatpush1.msra.mxu0 0.0
      %1364 = vmatprep.subr.mxu0 0.0
      %1365 = vmatpush1.msra.mxu0 0.0
      %1366 = vmatprep.subr.mxu0 0.0
      %1367 = vmatpush1.msra.mxu0 0.0
      %1368 = vmatprep.subr.mxu0 0.0
      %1369 = vmatpush1.msra.mxu0 0.0
      %1370 = vmatprep.subr.mxu0 0.0
      %1371 = vmatpush1.msra.mxu0 0.0
      %1372 = vmatprep.subr.mxu0 0.0
      %1373 = vmatpush1.msra.mxu0 0.0
      %1374 = vmatprep.subr.mxu0 0.0
      %1375 = vmatpush1.msra.mxu0 0.0
      %1376 = vmatprep.subr.mxu0 0.0
      %1377 = vmatpush1.msra.mxu0 0.0
      %1378 = vmatprep.subr.mxu0 0.0
      %1379 = vmatpush1.msra.mxu0 0.0
      %1380 = vmatprep.subr.mxu0 0.0
      %1381 = vmatpush1.msra.mxu0 0.0
      %1382 = vmatprep.subr.mxu0 0.0
      %1383 = vmatpush1.msra.mxu0 0.0
      %1384 = vmatprep.subr.mxu0 0.0
      %1385 = vmatpush1.msra.mxu0 0.0
      %1386 = vmatprep.subr.mxu0 0.0
      %1387 = vmatpush1.msra.mxu0 0.0
      %1388 = vmatprep.subr.mxu0 0.0
      %1389 = vmatpush1.msra.mxu0 0.0
      %1390 = vmatprep.subr.mxu0 0.0
      %1391 = vmatpush1.msra.mxu0 0.0
      %1392 = vmatprep.subr.mxu0 0.0
      %1393 = vmatpush1.msra.mxu0 0.0
      %1394 = vmatprep.subr.mxu0 0.0
      %1395 = vmatpush1.msra.mxu0 0.0
      %1396 = vmatprep.subr.mxu0 0.0
      %1397 = vmatpush1.msra.mxu0 0.0
      %1398 = vmatprep.subr.mxu0 0.0
      %1399 = vmatpush1.msra.mxu0 0.0
      %1400 = vmatprep.subr.mxu0 0.0
      %1401 = vmatpush1.msra.mxu0 0.0
      %1402 = vmatprep.subr.mxu0 0.0
      %1403 = vmatpush1.msra.mxu0 0.0
      %1404 = vmatprep.subr.mxu0 0.0
      %1405 = vmatpush1.msra.mxu0 0.0
      %1406 = vmatprep.subr.mxu0 0.0
      %1407 = vmatpush1.msra.mxu0 0.0
      %1408 = vmatprep.subr.mxu0 0.0
      %1409 = vmatpush1.msra.mxu0 0.0
      %1410 = vmatprep.subr.mxu0 0.0
      %1411 = vmatpush1.msra.mxu0 0.0
      %1412 = vmatprep.mubr.f32.mxu0 0.0
      %1413 = vmatmul.mubr.f32.gmra.mrb[0].mxu0 %v1275
      %v1414 = vpop.f32.mrb[0].mxu0
      %v1415 = vadd.f32 0.0, %v1414
      %v1416 = vpop.f32.mrb[0].mxu0
      %1417 = vdwg.mxu0
      %v1418 = vadd.f32 %v1257, %v1344
      %v1419 = vadd.f32 %v1258, %v1346
      %v1420 = vadd.f32 %v1259, %v1415
      %s1421 = scalar_lea.vmem %s2, 14
      %v1422 = vld [vmem:[%s1421] sm:$0x3]
      %1423 = vrot.lane.b32.xlu0 %v307, 91
      %v1424 = vpop.permute.xlu0 %1423
      %1425 = vrot.lane.b32.xlu0 %v308, 91
      %v1426 = vpop.permute.xlu0 %1425
      %1427 = vrot.lane.b32.xlu0 %v309, 91
      %v1428 = vpop.permute.xlu0 %1427
      %vm1429 = vcmask 744448
      %v1430 = vsel %vm1429, %v1424, %v1426
      %v1431 = vsel %vm1429, %v1426, %v1428
      %v1436 = vsel %vm327, %v1422, 0
      %1438 = vmatprep.subr.mxu0 %v1431
      %1439 = vmatpush1.msra.mxu0 %v1430
      %1440 = vmatprep.subr.mxu0 0.0
      %1441 = vmatpush1.msra.mxu0 0.0
      %1442 = vmatprep.subr.mxu0 0.0
      %1443 = vmatpush1.msra.mxu0 0.0
      %1444 = vmatprep.subr.mxu0 0.0
      %1445 = vmatpush1.msra.mxu0 0.0
      %1446 = vmatprep.subr.mxu0 0.0
      %1447 = vmatpush1.msra.mxu0 0.0
      %1448 = vmatprep.subr.mxu0 0.0
      %1449 = vmatpush1.msra.mxu0 0.0
      %1450 = vmatprep.subr.mxu0 0.0
      %1451 = vmatpush1.msra.mxu0 0.0
      %1452 = vmatprep.subr.mxu0 0.0
      %1453 = vmatpush1.msra.mxu0 0.0
      %1454 = vmatprep.subr.mxu0 0.0
      %1455 = vmatpush1.msra.mxu0 0.0
      %1456 = vmatprep.subr.mxu0 0.0
      %1457 = vmatpush1.msra.mxu0 0.0
      %1458 = vmatprep.subr.mxu0 0.0
      %1459 = vmatpush1.msra.mxu0 0.0
      %1460 = vmatprep.subr.mxu0 0.0
      %1461 = vmatpush1.msra.mxu0 0.0
      %1462 = vmatprep.subr.mxu0 0.0
      %1463 = vmatpush1.msra.mxu0 0.0
      %1464 = vmatprep.subr.mxu0 0.0
      %1465 = vmatpush1.msra.mxu0 0.0
      %1466 = vmatprep.subr.mxu0 0.0
      %1467 = vmatpush1.msra.mxu0 0.0
      %1468 = vmatprep.subr.mxu0 0.0
      %1469 = vmatpush1.msra.mxu0 0.0
      %1470 = vmatprep.subr.mxu0 0.0
      %1471 = vmatpush1.msra.mxu0 0.0
      %1472 = vmatprep.subr.mxu0 0.0
      %1473 = vmatpush1.msra.mxu0 0.0
      %1474 = vmatprep.subr.mxu0 0.0
      %1475 = vmatpush1.msra.mxu0 0.0
      %1476 = vmatprep.subr.mxu0 0.0
      %1477 = vmatpush1.msra.mxu0 0.0
      %1478 = vmatprep.subr.mxu0 0.0
      %1479 = vmatpush1.msra.mxu0 0.0
      %1480 = vmatprep.subr.mxu0 0.0
      %1481 = vmatpush1.msra.mxu0 0.0
      %1482 = vmatprep.subr.mxu0 0.0
      %1483 = vmatpush1.msra.mxu0 0.0
      %1484 = vmatprep.subr.mxu0 0.0
      %1485 = vmatpush1.msra.mxu0 0.0
      %1486 = vmatprep.subr.mxu0 0.0
      %1487 = vmatpush1.msra.mxu0 0.0
      %1488 = vmatprep.subr.mxu0 0.0
      %1489 = vmatpush1.msra.mxu0 0.0
      %1490 = vmatprep.subr.mxu0 0.0
      %1491 = vmatpush1.msra.mxu0 0.0
      %1492 = vmatprep.subr.mxu0 0.0
      %1493 = vmatpush1.msra.mxu0 0.0
      %1494 = vmatprep.subr.mxu0 0.0
      %1495 = vmatpush1.msra.mxu0 0.0
      %1496 = vmatprep.subr.mxu0 0.0
      %1497 = vmatpush1.msra.mxu0 0.0
      %1498 = vmatprep.subr.mxu0 0.0
      %1499 = vmatpush1.msra.mxu0 0.0
      %1500 = vmatprep.subr.mxu0 0.0
      %1501 = vmatpush1.msra.mxu0 0.0
      %1502 = vmatprep.mubr.f32.mxu0 0.0
      %1503 = vmatmul.mubr.f32.gmra.mrb[0].mxu0 %v1436
      %v1504 = vpop.f32.mrb[0].mxu0
      %v1505 = vadd.f32 0.0, %v1504
      %v1506 = vpop.f32.mrb[0].mxu0
      %v1507 = vadd.f32 0.0, %v1506
      %1508 = vdwg.mxu0
      %1509 = vmatprep.subr.mxu0 0.0
      %1510 = vmatpush1.msra.mxu0 %v1428
      %1511 = vmatprep.subr.mxu0 0.0
      %1512 = vmatpush1.msra.mxu0 0.0
      %1513 = vmatprep.subr.mxu0 0.0
      %1514 = vmatpush1.msra.mxu0 0.0
      %1515 = vmatprep.subr.mxu0 0.0
      %1516 = vmatpush1.msra.mxu0 0.0
      %1517 = vmatprep.subr.mxu0 0.0
      %1518 = vmatpush1.msra.mxu0 0.0
      %1519 = vmatprep.subr.mxu0 0.0
      %1520 = vmatpush1.msra.mxu0 0.0
      %1521 = vmatprep.subr.mxu0 0.0
      %1522 = vmatpush1.msra.mxu0 0.0
      %1523 = vmatprep.subr.mxu0 0.0
      %1524 = vmatpush1.msra.mxu0 0.0
      %1525 = vmatprep.subr.mxu0 0.0
      %1526 = vmatpush1.msra.mxu0 0.0
      %1527 = vmatprep.subr.mxu0 0.0
      %1528 = vmatpush1.msra.mxu0 0.0
      %1529 = vmatprep.subr.mxu0 0.0
      %1530 = vmatpush1.msra.mxu0 0.0
      %1531 = vmatprep.subr.mxu0 0.0
      %1532 = vmatpush1.msra.mxu0 0.0
      %1533 = vmatprep.subr.mxu0 0.0
      %1534 = vmatpush1.msra.mxu0 0.0
      %1535 = vmatprep.subr.mxu0 0.0
      %1536 = vmatpush1.msra.mxu0 0.0
      %1537 = vmatprep.subr.mxu0 0.0
      %1538 = vmatpush1.msra.mxu0 0.0
      %1539 = vmatprep.subr.mxu0 0.0
      %1540 = vmatpush1.msra.mxu0 0.0
      %1541 = vmatprep.subr.mxu0 0.0
      %1542 = vmatpush1.msra.mxu0 0.0
      %1543 = vmatprep.subr.mxu0 0.0
      %1544 = vmatpush1.msra.mxu0 0.0
      %1545 = vmatprep.subr.mxu0 0.0
      %1546 = vmatpush1.msra.mxu0 0.0
      %1547 = vmatprep.subr.mxu0 0.0
      %1548 = vmatpush1.msra.mxu0 0.0
      %1549 = vmatprep.subr.mxu0 0.0
      %1550 = vmatpush1.msra.mxu0 0.0
      %1551 = vmatprep.subr.mxu0 0.0
      %1552 = vmatpush1.msra.mxu0 0.0
      %1553 = vmatprep.subr.mxu0 0.0
      %1554 = vmatpush1.msra.mxu0 0.0
      %1555 = vmatprep.subr.mxu0 0.0
      %1556 = vmatpush1.msra.mxu0 0.0
      %1557 = vmatprep.subr.mxu0 0.0
      %1558 = vmatpush1.msra.mxu0 0.0
      %1559 = vmatprep.subr.mxu0 0.0
      %1560 = vmatpush1.msra.mxu0 0.0
      %1561 = vmatprep.subr.mxu0 0.0
      %1562 = vmatpush1.msra.mxu0 0.0
      %1563 = vmatprep.subr.mxu0 0.0
      %1564 = vmatpush1.msra.mxu0 0.0
      %1565 = vmatprep.subr.mxu0 0.0
      %1566 = vmatpush1.msra.mxu0 0.0
      %1567 = vmatprep.subr.mxu0 0.0
      %1568 = vmatpush1.msra.mxu0 0.0
      %1569 = vmatprep.subr.mxu0 0.0
      %1570 = vmatpush1.msra.mxu0 0.0
      %1571 = vmatprep.subr.mxu0 0.0
      %1572 = vmatpush1.msra.mxu0 0.0
      %1573 = vmatprep.mubr.f32.mxu0 0.0
      %1574 = vmatmul.mubr.f32.gmra.mrb[0].mxu0 %v1436
      %v1575 = vpop.f32.mrb[0].mxu0
      %v1576 = vadd.f32 0.0, %v1575
      %v1577 = vpop.f32.mrb[0].mxu0
      %1578 = vdwg.mxu0
      %v1579 = vadd.f32 %v1418, %v1505
      %v1580 = vadd.f32 %v1419, %v1507
      %v1581 = vadd.f32 %v1420, %v1576
      %s1582 = scalar_lea.vmem %s2, 16
      %v1583 = vld [vmem:[%s1582] sm:$0x3]
      %1584 = vrot.lane.b32.xlu0 %v307, 90
      %v1585 = vpop.permute.xlu0 %1584
      %1586 = vrot.lane.b32.xlu0 %v308, 90
      %v1587 = vpop.permute.xlu0 %1586
      %1588 = vrot.lane.b32.xlu0 %v309, 90
      %v1589 = vpop.permute.xlu0 %1588
      %vm1590 = vcmask 736256
      %v1591 = vsel %vm1590, %v1585, %v1587
      %v1592 = vsel %vm1590, %v1587, %v1589
      %v1597 = vsel %vm327, %v1583, 0
      %1599 = vmatprep.subr.mxu0 %v1592
      %1600 = vmatpush1.msra.mxu0 %v1591
      %1601 = vmatprep.subr.mxu0 0.0
      %1602 = vmatpush1.msra.mxu0 0.0
      %1603 = vmatprep.subr.mxu0 0.0
      %1604 = vmatpush1.msra.mxu0 0.0
      %1605 = vmatprep.subr.mxu0 0.0
      %1606 = vmatpush1.msra.mxu0 0.0
      %1607 = vmatprep.subr.mxu0 0.0
      %1608 = vmatpush1.msra.mxu0 0.0
      %1609 = vmatprep.subr.mxu0 0.0
      %1610 = vmatpush1.msra.mxu0 0.0
      %1611 = vmatprep.subr.mxu0 0.0
      %1612 = vmatpush1.msra.mxu0 0.0
      %1613 = vmatprep.subr.mxu0 0.0
      %1614 = vmatpush1.msra.mxu0 0.0
      %1615 = vmatprep.subr.mxu0 0.0
      %1616 = vmatpush1.msra.mxu0 0.0
      %1617 = vmatprep.subr.mxu0 0.0
      %1618 = vmatpush1.msra.mxu0 0.0
      %1619 = vmatprep.subr.mxu0 0.0
      %1620 = vmatpush1.msra.mxu0 0.0
      %1621 = vmatprep.subr.mxu0 0.0
      %1622 = vmatpush1.msra.mxu0 0.0
      %1623 = vmatprep.subr.mxu0 0.0
      %1624 = vmatpush1.msra.mxu0 0.0
      %1625 = vmatprep.subr.mxu0 0.0
      %1626 = vmatpush1.msra.mxu0 0.0
      %1627 = vmatprep.subr.mxu0 0.0
      %1628 = vmatpush1.msra.mxu0 0.0
      %1629 = vmatprep.subr.mxu0 0.0
      %1630 = vmatpush1.msra.mxu0 0.0
      %1631 = vmatprep.subr.mxu0 0.0
      %1632 = vmatpush1.msra.mxu0 0.0
      %1633 = vmatprep.subr.mxu0 0.0
      %1634 = vmatpush1.msra.mxu0 0.0
      %1635 = vmatprep.subr.mxu0 0.0
      %1636 = vmatpush1.msra.mxu0 0.0
      %1637 = vmatprep.subr.mxu0 0.0
      %1638 = vmatpush1.msra.mxu0 0.0
      %1639 = vmatprep.subr.mxu0 0.0
      %1640 = vmatpush1.msra.mxu0 0.0
      %1641 = vmatprep.subr.mxu0 0.0
      %1642 = vmatpush1.msra.mxu0 0.0
      %1643 = vmatprep.subr.mxu0 0.0
      %1644 = vmatpush1.msra.mxu0 0.0
      %1645 = vmatprep.subr.mxu0 0.0
      %1646 = vmatpush1.msra.mxu0 0.0
      %1647 = vmatprep.subr.mxu0 0.0
      %1648 = vmatpush1.msra.mxu0 0.0
      %1649 = vmatprep.subr.mxu0 0.0
      %1650 = vmatpush1.msra.mxu0 0.0
      %1651 = vmatprep.subr.mxu0 0.0
      %1652 = vmatpush1.msra.mxu0 0.0
      %1653 = vmatprep.subr.mxu0 0.0
      %1654 = vmatpush1.msra.mxu0 0.0
      %1655 = vmatprep.subr.mxu0 0.0
      %1656 = vmatpush1.msra.mxu0 0.0
      %1657 = vmatprep.subr.mxu0 0.0
      %1658 = vmatpush1.msra.mxu0 0.0
      %1659 = vmatprep.subr.mxu0 0.0
      %1660 = vmatpush1.msra.mxu0 0.0
      %1661 = vmatprep.subr.mxu0 0.0
      %1662 = vmatpush1.msra.mxu0 0.0
      %1663 = vmatprep.mubr.f32.mxu0 0.0
      %1664 = vmatmul.mubr.f32.gmra.mrb[0].mxu0 %v1597
      %v1665 = vpop.f32.mrb[0].mxu0
      %v1666 = vadd.f32 0.0, %v1665
      %v1667 = vpop.f32.mrb[0].mxu0
      %v1668 = vadd.f32 0.0, %v1667
      %1669 = vdwg.mxu0
      %1670 = vmatprep.subr.mxu0 0.0
      %1671 = vmatpush1.msra.mxu0 %v1589
      %1672 = vmatprep.subr.mxu0 0.0
      %1673 = vmatpush1.msra.mxu0 0.0
      %1674 = vmatprep.subr.mxu0 0.0
      %1675 = vmatpush1.msra.mxu0 0.0
      %1676 = vmatprep.subr.mxu0 0.0
      %1677 = vmatpush1.msra.mxu0 0.0
      %1678 = vmatprep.subr.mxu0 0.0
      %1679 = vmatpush1.msra.mxu0 0.0
      %1680 = vmatprep.subr.mxu0 0.0
      %1681 = vmatpush1.msra.mxu0 0.0
      %1682 = vmatprep.subr.mxu0 0.0
      %1683 = vmatpush1.msra.mxu0 0.0
      %1684 = vmatprep.subr.mxu0 0.0
      %1685 = vmatpush1.msra.mxu0 0.0
      %1686 = vmatprep.subr.mxu0 0.0
      %1687 = vmatpush1.msra.mxu0 0.0
      %1688 = vmatprep.subr.mxu0 0.0
      %1689 = vmatpush1.msra.mxu0 0.0
      %1690 = vmatprep.subr.mxu0 0.0
      %1691 = vmatpush1.msra.mxu0 0.0
      %1692 = vmatprep.subr.mxu0 0.0
      %1693 = vmatpush1.msra.mxu0 0.0
      %1694 = vmatprep.subr.mxu0 0.0
      %1695 = vmatpush1.msra.mxu0 0.0
      %1696 = vmatprep.subr.mxu0 0.0
      %1697 = vmatpush1.msra.mxu0 0.0
      %1698 = vmatprep.subr.mxu0 0.0
      %1699 = vmatpush1.msra.mxu0 0.0
      %1700 = vmatprep.subr.mxu0 0.0
      %1701 = vmatpush1.msra.mxu0 0.0
      %1702 = vmatprep.subr.mxu0 0.0
      %1703 = vmatpush1.msra.mxu0 0.0
      %1704 = vmatprep.subr.mxu0 0.0
      %1705 = vmatpush1.msra.mxu0 0.0
      %1706 = vmatprep.subr.mxu0 0.0
      %1707 = vmatpush1.msra.mxu0 0.0
      %1708 = vmatprep.subr.mxu0 0.0
      %1709 = vmatpush1.msra.mxu0 0.0
      %1710 = vmatprep.subr.mxu0 0.0
      %1711 = vmatpush1.msra.mxu0 0.0
      %1712 = vmatprep.subr.mxu0 0.0
      %1713 = vmatpush1.msra.mxu0 0.0
      %1714 = vmatprep.subr.mxu0 0.0
      %1715 = vmatpush1.msra.mxu0 0.0
      %1716 = vmatprep.subr.mxu0 0.0
      %1717 = vmatpush1.msra.mxu0 0.0
      %1718 = vmatprep.subr.mxu0 0.0
      %1719 = vmatpush1.msra.mxu0 0.0
      %1720 = vmatprep.subr.mxu0 0.0
      %1721 = vmatpush1.msra.mxu0 0.0
      %1722 = vmatprep.subr.mxu0 0.0
      %1723 = vmatpush1.msra.mxu0 0.0
      %1724 = vmatprep.subr.mxu0 0.0
      %1725 = vmatpush1.msra.mxu0 0.0
      %1726 = vmatprep.subr.mxu0 0.0
      %1727 = vmatpush1.msra.mxu0 0.0
      %1728 = vmatprep.subr.mxu0 0.0
      %1729 = vmatpush1.msra.mxu0 0.0
      %1730 = vmatprep.subr.mxu0 0.0
      %1731 = vmatpush1.msra.mxu0 0.0
      %1732 = vmatprep.subr.mxu0 0.0
      %1733 = vmatpush1.msra.mxu0 0.0
      %1734 = vmatprep.mubr.f32.mxu0 0.0
      %1735 = vmatmul.mubr.f32.gmra.mrb[0].mxu0 %v1597
      %v1736 = vpop.f32.mrb[0].mxu0
      %v1737 = vadd.f32 0.0, %v1736
      %v1738 = vpop.f32.mrb[0].mxu0
      %1739 = vdwg.mxu0
      %v1740 = vadd.f32 %v1579, %v1666
      %v1741 = vadd.f32 %v1580, %v1668
      %v1742 = vadd.f32 %v1581, %v1737
      %v1743 = vld [vmem:[%s3] sm:$0x3]
      %1745 = vset.pattern.permute.xlu0 0
      %1746 = vperm.xlu0 %1745, %v1743
      %v1747 = vpop.permute.xlu0 %1746
      %v1749 = vadd.f32 %v1740, %v1747
      %v1750 = vadd.f32 %v1741, %v1747
      %v1751 = vadd.f32 %v1742, %v1747
      %v1752 = vmul.f32 %v1749, 0.5
      %v1753 = vmul.f32 %v1750, 0.5
      %v1754 = vmul.f32 %v1751, 0.5
      %v1755 = vmul.f32 %v1749, 0.70710677
      %v1756 = vmul.f32 %v1750, 0.70710677
      %v1757 = vmul.f32 %v1751, 0.70710677
      %v1758 = vand.u32 2147483647, %v1755
      %v1759 = vand.u32 2147483647, %v1756
      %v1760 = vand.u32 2147483647, %v1757
      %v1761 = vmul.f32 %v1758, 0.3275911
      %v1762 = vmul.f32 %v1759, 0.3275911
      %v1763 = vmul.f32 %v1760, 0.3275911
      %v1764 = vadd.f32 %v1761, 1.0
      %v1765 = vadd.f32 %v1762, 1.0
      %v1766 = vadd.f32 %v1763, 1.0
      %v1767 = vrcp.pop %v1764
      %v1768 = vmul.f32 1.0, %v1767
      %v1769 = vrcp.pop %v1765
      %v1770 = vmul.f32 1.0, %v1769
      %v1771 = vrcp.pop %v1766
      %v1772 = vmul.f32 1.0, %v1771
      %v1773 = vmul.f32 %v1768, 1.0614054
      %v1774 = vmul.f32 %v1770, 1.0614054
      %v1775 = vmul.f32 %v1772, 1.0614054
      %v1776 = vadd.f32 %v1773, -1.4531521
      %v1777 = vadd.f32 %v1774, -1.4531521
      %v1778 = vadd.f32 %v1775, -1.4531521
      %v1779 = vmul.f32 %v1776, %v1768
      %v1780 = vmul.f32 %v1777, %v1770
      %v1781 = vmul.f32 %v1778, %v1772
      %v1782 = vadd.f32 %v1779, 1.4214138
      %v1783 = vadd.f32 %v1780, 1.4214138
      %v1784 = vadd.f32 %v1781, 1.4214138
      %v1785 = vmul.f32 %v1782, %v1768
      %v1786 = vmul.f32 %v1783, %v1770
      %v1787 = vmul.f32 %v1784, %v1772
      %v1788 = vadd.f32 %v1785, -0.28449672
      %v1789 = vadd.f32 %v1786, -0.28449672
      %v1790 = vadd.f32 %v1787, -0.28449672
      %v1791 = vmul.f32 %v1788, %v1768
      %v1792 = vmul.f32 %v1789, %v1770
      %v1793 = vmul.f32 %v1790, %v1772
      %v1794 = vadd.f32 %v1791, 0.2548296
      %v1795 = vadd.f32 %v1792, 0.2548296
      %v1796 = vadd.f32 %v1793, 0.2548296
      %v1797 = vmul.f32 %v1794, %v1768
      %v1798 = vmul.f32 %v1795, %v1770
      %v1799 = vmul.f32 %v1796, %v1772
      %v1800 = vsub.f32 0.0, %v1758
      %v1801 = vsub.f32 0.0, %v1759
      %v1802 = vsub.f32 0.0, %v1760
      %v1803 = vmul.f32 %v1800, %v1758
      %v1804 = vmul.f32 %v1801, %v1759
      %v1805 = vmul.f32 %v1802, %v1760
      %v1806 = vmul.f32 %v1803, 1.442695
      %v1807 = vpow.pop %v1806
      %v1808 = vmul.f32 %v1804, 1.442695
      %v1809 = vpow.pop %v1808
      %v1810 = vmul.f32 %v1805, 1.442695
      %v1811 = vpow.pop %v1810
      %v1812 = vmul.f32 %v1797, %v1807
      %v1813 = vmul.f32 %v1798, %v1809
      %v1814 = vmul.f32 %v1799, %v1811
      %v1815 = vsub.f32 1.0, %v1812
      %v1816 = vsub.f32 1.0, %v1813
      %v1817 = vsub.f32 1.0, %v1814
      %vm1818 = vcmp.lt.f32.partialorder %v1755, 0.0
      %vm1819 = vcmp.lt.f32.partialorder %v1756, 0.0
      %vm1820 = vcmp.lt.f32.partialorder %v1757, 0.0
      %v1821 = vsub.f32 0.0, %v1815
      %v1822 = vsub.f32 0.0, %v1816
      %v1823 = vsub.f32 0.0, %v1817
      %v1824 = vsel %vm1818, %v1821, %v1815
      %v1825 = vsel %vm1819, %v1822, %v1816
      %v1826 = vsel %vm1820, %v1823, %v1817
      %v1827 = vadd.f32 %v1824, 1.0
      %v1828 = vadd.f32 %v1825, 1.0
      %v1829 = vadd.f32 %v1826, 1.0
      %v1830 = vmul.f32 %v1752, %v1827
      %v1831 = vmul.f32 %v1753, %v1828
      %v1832 = vmul.f32 %v1754, %v1829
      %vm1833 = vcmask 1041408
      %vm1834 = vcmask 1043458
      %vm1835 = vmor %vm1834, %vm1833
      %vm1836 = vcmask 570372
      %vm1837 = vmor %vm1836, %vm1835
      %1838 = vst.msk [vmem:[#allocation2] sm:$0x3f] %vm1837, 0.0
      %v1839 = vld [vmem:[%s1] sm:$0x7]
      %v1841 = vlaneseq
      %v1842 = vshrl.u32 %v1841, 7
      %v1843 = vsub.s32 0, %v1842
      %v1844 = vrot.slane %v1839, %v1843
      %v1845 = vlaneseq
      %v1846 = vshrl.u32 %v1845, 7
      %v1847 = vsub.s32 1, %v1846
      %v1848 = vrot.slane %v1839, %v1847
      %v1849 = vlaneseq
      %v1850 = vshrl.u32 %v1849, 7
      %v1851 = vsub.s32 2, %v1850
      %v1852 = vrot.slane %v1839, %v1851
      %v1856 = vmul.f32 %v1830, %v1844
      %v1857 = vmul.f32 %v1831, %v1848
      %v1858 = vmul.f32 %v1832, %v1852
      %v1862 = vcombine.low %v1856, %v1857
      %v1864 = vunpack.c.l.s4 1983009808
      %v1865 = vunpack.c.0.s8 %v1864
      %v1866 = vlaneseq
      %v1867 = vshrl.u32 %v1866, 7
      %v1868 = vsub.s32 %v1865, %v1867
      %v1869 = vrot.slane %v1862, %v1868
      %v1871 = vunpack.c.l.s4 1983009808
      %v1872 = vunpack.c.0.s8 %v1871
      %v1873 = vlaneseq
      %v1874 = vshrl.u32 %v1873, 7
      %v1875 = vsub.s32 %v1872, %v1874
      %v1876 = vrot.slane %v1858, %v1875
      %v1877 = vcombine.low %v1869, %v1876
      %1878 = vrot.lane.b32.xlu0 %v1877, 19
      %v1879 = vpop.permute.xlu0 %1878
      %v1880 = vrot.slane %v1879, 6
      %vm1881 = vcmask 154624
      %v1882 = vsel %vm1881, %v1880, %v1879
      %vm1884 = vcmask 1041560
      %vm1885 = vmor %vm1834, %vm1884
      %vm1886 = vcmask 414724
      %vm1887 = vmor %vm1886, %vm1885
      %1888 = vst.msk [vmem:[#allocation2] sm:$0x3f] %vm1887, %v1882
      %v1889 = vld [vmem:[%s4] sm:$0xff]
      %v1890 = vld [vmem:[#allocation2] sm:$0x3f]
      %s1891 = scalar_lea.vmem %s4, 8
      %v1892 = vld [vmem:[%s1891] sm:$0xff]
      %v1894 = vcombine.high %v1890, %v1890
      %v1896 = vunpack.c.l.s4 1983009808
      %v1897 = vunpack.c.0.s8 %v1896
      %v1898 = vlaneseq
      %v1899 = vshrl.u32 %v1898, 7
      %v1900 = vsub.s32 %v1897, %v1899
      %v1901 = vrot.slane %v1890, %v1900
      %v1903 = vunpack.c.l.s4 1983009808
      %v1904 = vunpack.c.0.s8 %v1903
      %v1905 = vlaneseq
      %v1906 = vshrl.u32 %v1905, 7
      %v1907 = vsub.s32 %v1904, %v1906
      %v1908 = vrot.slane %v1894, %v1907
      %v1909 = vcombine.high %v1901, %v1901
      %1910 = vrot.lane.b32.xlu0 %v1901, 127
      %v1911 = vpop.permute.xlu0 %1910
      %1912 = vrot.lane.b32.xlu0 %v1909, 127
      %v1913 = vpop.permute.xlu0 %1912
      %1914 = vrot.lane.b32.xlu0 %v1908, 127
      %v1915 = vpop.permute.xlu0 %1914
      %v1916 = vsel %vm321, %v1911, %v1913
      %v1917 = vsel %vm321, %v1913, %v1915
      %vm1918 = vcmask 15360
      %v1920 = vsel %vm1918, %v1892, 0
      %v1922 = vsel %vm1833, %v1916, 0
      %v1924 = vsel %vm1833, %v1917, 0
      %v1926 = vsel %vm1833, %v1915, 0
      %1928 = vmatprep.subr.mxu0 %v1924
      %1929 = vmatpush1.msra.mxu0 %v1922
      %1930 = vmatprep.subr.mxu0 0.0
      %1931 = vmatpush1.msra.mxu0 0.0
      %1932 = vmatprep.subr.mxu0 0.0
      %1933 = vmatpush1.msra.mxu0 0.0
      %1934 = vmatprep.subr.mxu0 0.0
      %1935 = vmatpush1.msra.mxu0 0.0
      %1936 = vmatprep.subr.mxu0 0.0
      %1937 = vmatpush1.msra.mxu0 0.0
      %1938 = vmatprep.subr.mxu0 0.0
      %1939 = vmatpush1.msra.mxu0 0.0
      %1940 = vmatprep.subr.mxu0 0.0
      %1941 = vmatpush1.msra.mxu0 0.0
      %1942 = vmatprep.subr.mxu0 0.0
      %1943 = vmatpush1.msra.mxu0 0.0
      %1944 = vmatprep.subr.mxu0 0.0
      %1945 = vmatpush1.msra.mxu0 0.0
      %1946 = vmatprep.subr.mxu0 0.0
      %1947 = vmatpush1.msra.mxu0 0.0
      %1948 = vmatprep.subr.mxu0 0.0
      %1949 = vmatpush1.msra.mxu0 0.0
      %1950 = vmatprep.subr.mxu0 0.0
      %1951 = vmatpush1.msra.mxu0 0.0
      %1952 = vmatprep.subr.mxu0 0.0
      %1953 = vmatpush1.msra.mxu0 0.0
      %1954 = vmatprep.subr.mxu0 0.0
      %1955 = vmatpush1.msra.mxu0 0.0
      %1956 = vmatprep.subr.mxu0 0.0
      %1957 = vmatpush1.msra.mxu0 0.0
      %1958 = vmatprep.subr.mxu0 0.0
      %1959 = vmatpush1.msra.mxu0 0.0
      %1960 = vmatprep.subr.mxu0 0.0
      %1961 = vmatpush1.msra.mxu0 0.0
      %1962 = vmatprep.subr.mxu0 0.0
      %1963 = vmatpush1.msra.mxu0 0.0
      %1964 = vmatprep.subr.mxu0 0.0
      %1965 = vmatpush1.msra.mxu0 0.0
      %1966 = vmatprep.subr.mxu0 0.0
      %1967 = vmatpush1.msra.mxu0 0.0
      %1968 = vmatprep.subr.mxu0 0.0
      %1969 = vmatpush1.msra.mxu0 0.0
      %1970 = vmatprep.subr.mxu0 0.0
      %1971 = vmatpush1.msra.mxu0 0.0
      %1972 = vmatprep.subr.mxu0 0.0
      %1973 = vmatpush1.msra.mxu0 0.0
      %1974 = vmatprep.subr.mxu0 0.0
      %1975 = vmatpush1.msra.mxu0 0.0
      %1976 = vmatprep.subr.mxu0 0.0
      %1977 = vmatpush1.msra.mxu0 0.0
      %1978 = vmatprep.subr.mxu0 0.0
      %1979 = vmatpush1.msra.mxu0 0.0
      %1980 = vmatprep.subr.mxu0 0.0
      %1981 = vmatpush1.msra.mxu0 0.0
      %1982 = vmatprep.subr.mxu0 0.0
      %1983 = vmatpush1.msra.mxu0 0.0
      %1984 = vmatprep.subr.mxu0 0.0
      %1985 = vmatpush1.msra.mxu0 0.0
      %1986 = vmatprep.subr.mxu0 0.0
      %1987 = vmatpush1.msra.mxu0 0.0
      %1988 = vmatprep.subr.mxu0 0.0
      %1989 = vmatpush1.msra.mxu0 0.0
      %1990 = vmatprep.subr.mxu0 0.0
      %1991 = vmatpush1.msra.mxu0 0.0
      %1992 = vmatprep.mubr.f32.mxu0 0.0
      %1993 = vmatmul.mubr.f32.gmra.mrb[0].mxu0 %v1920
      %v1994 = vpop.f32.mrb[0].mxu0
      %v1995 = vadd.f32 0.0, %v1994
      %v1996 = vpop.f32.mrb[0].mxu0
      %v1997 = vadd.f32 0.0, %v1996
      %1998 = vdwg.mxu0
      %1999 = vmatprep.subr.mxu0 0.0
      %2000 = vmatpush1.msra.mxu0 %v1926
      %2001 = vmatprep.subr.mxu0 0.0
      %2002 = vmatpush1.msra.mxu0 0.0
      %2003 = vmatprep.subr.mxu0 0.0
      %2004 = vmatpush1.msra.mxu0 0.0
      %2005 = vmatprep.subr.mxu0 0.0
      %2006 = vmatpush1.msra.mxu0 0.0
      %2007 = vmatprep.subr.mxu0 0.0
      %2008 = vmatpush1.msra.mxu0 0.0
      %2009 = vmatprep.subr.mxu0 0.0
      %2010 = vmatpush1.msra.mxu0 0.0
      %2011 = vmatprep.subr.mxu0 0.0
      %2012 = vmatpush1.msra.mxu0 0.0
      %2013 = vmatprep.subr.mxu0 0.0
      %2014 = vmatpush1.msra.mxu0 0.0
      %2015 = vmatprep.subr.mxu0 0.0
      %2016 = vmatpush1.msra.mxu0 0.0
      %2017 = vmatprep.subr.mxu0 0.0
      %2018 = vmatpush1.msra.mxu0 0.0
      %2019 = vmatprep.subr.mxu0 0.0
      %2020 = vmatpush1.msra.mxu0 0.0
      %2021 = vmatprep.subr.mxu0 0.0
      %2022 = vmatpush1.msra.mxu0 0.0
      %2023 = vmatprep.subr.mxu0 0.0
      %2024 = vmatpush1.msra.mxu0 0.0
      %2025 = vmatprep.subr.mxu0 0.0
      %2026 = vmatpush1.msra.mxu0 0.0
      %2027 = vmatprep.subr.mxu0 0.0
      %2028 = vmatpush1.msra.mxu0 0.0
      %2029 = vmatprep.subr.mxu0 0.0
      %2030 = vmatpush1.msra.mxu0 0.0
      %2031 = vmatprep.subr.mxu0 0.0
      %2032 = vmatpush1.msra.mxu0 0.0
      %2033 = vmatprep.subr.mxu0 0.0
      %2034 = vmatpush1.msra.mxu0 0.0
      %2035 = vmatprep.subr.mxu0 0.0
      %2036 = vmatpush1.msra.mxu0 0.0
      %2037 = vmatprep.subr.mxu0 0.0
      %2038 = vmatpush1.msra.mxu0 0.0
      %2039 = vmatprep.subr.mxu0 0.0
      %2040 = vmatpush1.msra.mxu0 0.0
      %2041 = vmatprep.subr.mxu0 0.0
      %2042 = vmatpush1.msra.mxu0 0.0
      %2043 = vmatprep.subr.mxu0 0.0
      %2044 = vmatpush1.msra.mxu0 0.0
      %2045 = vmatprep.subr.mxu0 0.0
      %2046 = vmatpush1.msra.mxu0 0.0
      %2047 = vmatprep.subr.mxu0 0.0
      %2048 = vmatpush1.msra.mxu0 0.0
      %2049 = vmatprep.subr.mxu0 0.0
      %2050 = vmatpush1.msra.mxu0 0.0
      %2051 = vmatprep.subr.mxu0 0.0
      %2052 = vmatpush1.msra.mxu0 0.0
      %2053 = vmatprep.subr.mxu0 0.0
      %2054 = vmatpush1.msra.mxu0 0.0
      %2055 = vmatprep.subr.mxu0 0.0
      %2056 = vmatpush1.msra.mxu0 0.0
      %2057 = vmatprep.subr.mxu0 0.0
      %2058 = vmatpush1.msra.mxu0 0.0
      %2059 = vmatprep.subr.mxu0 0.0
      %2060 = vmatpush1.msra.mxu0 0.0
      %2061 = vmatprep.subr.mxu0 0.0
      %2062 = vmatpush1.msra.mxu0 0.0
      %2063 = vmatprep.mubr.f32.mxu0 0.0
      %2064 = vmatmul.mubr.f32.gmra.mrb[0].mxu0 %v1920
      %v2065 = vpop.f32.mrb[0].mxu0
      %v2066 = vadd.f32 0.0, %v2065
      %v2067 = vpop.f32.mrb[0].mxu0
      %2068 = vdwg.mxu0
      %v2070 = vsel %vm1918, %v1889, 0
      %v2072 = vsel %vm1833, %v1901, 0
      %v2074 = vsel %vm1833, %v1909, 0
      %v2076 = vsel %vm1833, %v1908, 0
      %2078 = vmatprep.subr.mxu0 %v2074
      %2079 = vmatpush1.msra.mxu0 %v2072
      %2080 = vmatprep.subr.mxu0 0.0
      %2081 = vmatpush1.msra.mxu0 0.0
      %2082 = vmatprep.subr.mxu0 0.0
      %2083 = vmatpush1.msra.mxu0 0.0
      %2084 = vmatprep.subr.mxu0 0.0
      %2085 = vmatpush1.msra.mxu0 0.0
      %2086 = vmatprep.subr.mxu0 0.0
      %2087 = vmatpush1.msra.mxu0 0.0
      %2088 = vmatprep.subr.mxu0 0.0
      %2089 = vmatpush1.msra.mxu0 0.0
      %2090 = vmatprep.subr.mxu0 0.0
      %2091 = vmatpush1.msra.mxu0 0.0
      %2092 = vmatprep.subr.mxu0 0.0
      %2093 = vmatpush1.msra.mxu0 0.0
      %2094 = vmatprep.subr.mxu0 0.0
      %2095 = vmatpush1.msra.mxu0 0.0
      %2096 = vmatprep.subr.mxu0 0.0
      %2097 = vmatpush1.msra.mxu0 0.0
      %2098 = vmatprep.subr.mxu0 0.0
      %2099 = vmatpush1.msra.mxu0 0.0
      %2100 = vmatprep.subr.mxu0 0.0
      %2101 = vmatpush1.msra.mxu0 0.0
      %2102 = vmatprep.subr.mxu0 0.0
      %2103 = vmatpush1.msra.mxu0 0.0
      %2104 = vmatprep.subr.mxu0 0.0
      %2105 = vmatpush1.msra.mxu0 0.0
      %2106 = vmatprep.subr.mxu0 0.0
      %2107 = vmatpush1.msra.mxu0 0.0
      %2108 = vmatprep.subr.mxu0 0.0
      %2109 = vmatpush1.msra.mxu0 0.0
      %2110 = vmatprep.subr.mxu0 0.0
      %2111 = vmatpush1.msra.mxu0 0.0
      %2112 = vmatprep.subr.mxu0 0.0
      %2113 = vmatpush1.msra.mxu0 0.0
      %2114 = vmatprep.subr.mxu0 0.0
      %2115 = vmatpush1.msra.mxu0 0.0
      %2116 = vmatprep.subr.mxu0 0.0
      %2117 = vmatpush1.msra.mxu0 0.0
      %2118 = vmatprep.subr.mxu0 0.0
      %2119 = vmatpush1.msra.mxu0 0.0
      %2120 = vmatprep.subr.mxu0 0.0
      %2121 = vmatpush1.msra.mxu0 0.0
      %2122 = vmatprep.subr.mxu0 0.0
      %2123 = vmatpush1.msra.mxu0 0.0
      %2124 = vmatprep.subr.mxu0 0.0
      %2125 = vmatpush1.msra.mxu0 0.0
      %2126 = vmatprep.subr.mxu0 0.0
      %2127 = vmatpush1.msra.mxu0 0.0
      %2128 = vmatprep.subr.mxu0 0.0
      %2129 = vmatpush1.msra.mxu0 0.0
      %2130 = vmatprep.subr.mxu0 0.0
      %2131 = vmatpush1.msra.mxu0 0.0
      %2132 = vmatprep.subr.mxu0 0.0
      %2133 = vmatpush1.msra.mxu0 0.0
      %2134 = vmatprep.subr.mxu0 0.0
      %2135 = vmatpush1.msra.mxu0 0.0
      %2136 = vmatprep.subr.mxu0 0.0
      %2137 = vmatpush1.msra.mxu0 0.0
      %2138 = vmatprep.subr.mxu0 0.0
      %2139 = vmatpush1.msra.mxu0 0.0
      %2140 = vmatprep.subr.mxu0 0.0
      %2141 = vmatpush1.msra.mxu0 0.0
      %2142 = vmatprep.mubr.f32.mxu0 0.0
      %2143 = vmatmul.mubr.f32.gmra.mrb[0].mxu0 %v2070
      %v2144 = vpop.f32.mrb[0].mxu0
      %v2145 = vadd.f32 %v1995, %v2144
      %v2146 = vpop.f32.mrb[0].mxu0
      %v2147 = vadd.f32 %v1997, %v2146
      %2148 = vdwg.mxu0
      %2149 = vmatprep.subr.mxu0 0.0
      %2150 = vmatpush1.msra.mxu0 %v2076
      %2151 = vmatprep.subr.mxu0 0.0
      %2152 = vmatpush1.msra.mxu0 0.0
      %2153 = vmatprep.subr.mxu0 0.0
      %2154 = vmatpush1.msra.mxu0 0.0
      %2155 = vmatprep.subr.mxu0 0.0
      %2156 = vmatpush1.msra.mxu0 0.0
      %2157 = vmatprep.subr.mxu0 0.0
      %2158 = vmatpush1.msra.mxu0 0.0
      %2159 = vmatprep.subr.mxu0 0.0
      %2160 = vmatpush1.msra.mxu0 0.0
      %2161 = vmatprep.subr.mxu0 0.0
      %2162 = vmatpush1.msra.mxu0 0.0
      %2163 = vmatprep.subr.mxu0 0.0
      %2164 = vmatpush1.msra.mxu0 0.0
      %2165 = vmatprep.subr.mxu0 0.0
      %2166 = vmatpush1.msra.mxu0 0.0
      %2167 = vmatprep.subr.mxu0 0.0
      %2168 = vmatpush1.msra.mxu0 0.0
      %2169 = vmatprep.subr.mxu0 0.0
      %2170 = vmatpush1.msra.mxu0 0.0
      %2171 = vmatprep.subr.mxu0 0.0
      %2172 = vmatpush1.msra.mxu0 0.0
      %2173 = vmatprep.subr.mxu0 0.0
      %2174 = vmatpush1.msra.mxu0 0.0
      %2175 = vmatprep.subr.mxu0 0.0
      %2176 = vmatpush1.msra.mxu0 0.0
      %2177 = vmatprep.subr.mxu0 0.0
      %2178 = vmatpush1.msra.mxu0 0.0
      %2179 = vmatprep.subr.mxu0 0.0
      %2180 = vmatpush1.msra.mxu0 0.0
      %2181 = vmatprep.subr.mxu0 0.0
      %2182 = vmatpush1.msra.mxu0 0.0
      %2183 = vmatprep.subr.mxu0 0.0
      %2184 = vmatpush1.msra.mxu0 0.0
      %2185 = vmatprep.subr.mxu0 0.0
      %2186 = vmatpush1.msra.mxu0 0.0
      %2187 = vmatprep.subr.mxu0 0.0
      %2188 = vmatpush1.msra.mxu0 0.0
      %2189 = vmatprep.subr.mxu0 0.0
      %2190 = vmatpush1.msra.mxu0 0.0
      %2191 = vmatprep.subr.mxu0 0.0
      %2192 = vmatpush1.msra.mxu0 0.0
      %2193 = vmatprep.subr.mxu0 0.0
      %2194 = vmatpush1.msra.mxu0 0.0
      %2195 = vmatprep.subr.mxu0 0.0
      %2196 = vmatpush1.msra.mxu0 0.0
      %2197 = vmatprep.subr.mxu0 0.0
      %2198 = vmatpush1.msra.mxu0 0.0
      %2199 = vmatprep.subr.mxu0 0.0
      %2200 = vmatpush1.msra.mxu0 0.0
      %2201 = vmatprep.subr.mxu0 0.0
      %2202 = vmatpush1.msra.mxu0 0.0
      %2203 = vmatprep.subr.mxu0 0.0
      %2204 = vmatpush1.msra.mxu0 0.0
      %2205 = vmatprep.subr.mxu0 0.0
      %2206 = vmatpush1.msra.mxu0 0.0
      %2207 = vmatprep.subr.mxu0 0.0
      %2208 = vmatpush1.msra.mxu0 0.0
      %2209 = vmatprep.subr.mxu0 0.0
      %2210 = vmatpush1.msra.mxu0 0.0
      %2211 = vmatprep.subr.mxu0 0.0
      %2212 = vmatpush1.msra.mxu0 0.0
      %2213 = vmatprep.mubr.f32.mxu0 0.0
      %2214 = vmatmul.mubr.f32.gmra.mrb[0].mxu0 %v2070
      %v2215 = vpop.f32.mrb[0].mxu0
      %v2216 = vadd.f32 %v2066, %v2215
      %v2217 = vpop.f32.mrb[0].mxu0
      %2218 = vdwg.mxu0
      %s2219 = scalar_lea.vmem %s4, 16
      %v2220 = vld [vmem:[%s2219] sm:$0xff]
      %v2221 = vld [vmem:[#allocation2] sm:$0x3f]
      %v2223 = vcombine.high %v2221, %v2221
      %v2225 = vunpack.c.l.s4 1983009808
      %v2226 = vunpack.c.0.s8 %v2225
      %v2227 = vlaneseq
      %v2228 = vshrl.u32 %v2227, 7
      %v2229 = vsub.s32 %v2226, %v2228
      %v2230 = vrot.slane %v2221, %v2229
      %v2232 = vunpack.c.l.s4 1983009808
      %v2233 = vunpack.c.0.s8 %v2232
      %v2234 = vlaneseq
      %v2235 = vshrl.u32 %v2234, 7
      %v2236 = vsub.s32 %v2233, %v2235
      %v2237 = vrot.slane %v2223, %v2236
      %v2238 = vcombine.high %v2230, %v2230
      %2239 = vrot.lane.b32.xlu0 %v2230, 126
      %v2240 = vpop.permute.xlu0 %2239
      %2241 = vrot.lane.b32.xlu0 %v2238, 126
      %v2242 = vpop.permute.xlu0 %2241
      %2243 = vrot.lane.b32.xlu0 %v2237, 126
      %v2244 = vpop.permute.xlu0 %2243
      %v2245 = vsel %vm624, %v2240, %v2242
      %v2246 = vsel %vm624, %v2242, %v2244
      %v2248 = vsel %vm1918, %v2220, 0
      %v2250 = vsel %vm1833, %v2245, 0
      %v2252 = vsel %vm1833, %v2246, 0
      %v2254 = vsel %vm1833, %v2244, 0
      %2256 = vmatprep.subr.mxu0 %v2252
      %2257 = vmatpush1.msra.mxu0 %v2250
      %2258 = vmatprep.subr.mxu0 0.0
      %2259 = vmatpush1.msra.mxu0 0.0
      %2260 = vmatprep.subr.mxu0 0.0
      %2261 = vmatpush1.msra.mxu0 0.0
      %2262 = vmatprep.subr.mxu0 0.0
      %2263 = vmatpush1.msra.mxu0 0.0
      %2264 = vmatprep.subr.mxu0 0.0
      %2265 = vmatpush1.msra.mxu0 0.0
      %2266 = vmatprep.subr.mxu0 0.0
      %2267 = vmatpush1.msra.mxu0 0.0
      %2268 = vmatprep.subr.mxu0 0.0
      %2269 = vmatpush1.msra.mxu0 0.0
      %2270 = vmatprep.subr.mxu0 0.0
      %2271 = vmatpush1.msra.mxu0 0.0
      %2272 = vmatprep.subr.mxu0 0.0
      %2273 = vmatpush1.msra.mxu0 0.0
      %2274 = vmatprep.subr.mxu0 0.0
      %2275 = vmatpush1.msra.mxu0 0.0
      %2276 = vmatprep.subr.mxu0 0.0
      %2277 = vmatpush1.msra.mxu0 0.0
      %2278 = vmatprep.subr.mxu0 0.0
      %2279 = vmatpush1.msra.mxu0 0.0
      %2280 = vmatprep.subr.mxu0 0.0
      %2281 = vmatpush1.msra.mxu0 0.0
      %2282 = vmatprep.subr.mxu0 0.0
      %2283 = vmatpush1.msra.mxu0 0.0
      %2284 = vmatprep.subr.mxu0 0.0
      %2285 = vmatpush1.msra.mxu0 0.0
      %2286 = vmatprep.subr.mxu0 0.0
      %2287 = vmatpush1.msra.mxu0 0.0
      %2288 = vmatprep.subr.mxu0 0.0
      %2289 = vmatpush1.msra.mxu0 0.0
      %2290 = vmatprep.subr.mxu0 0.0
      %2291 = vmatpush1.msra.mxu0 0.0
      %2292 = vmatprep.subr.mxu0 0.0
      %2293 = vmatpush1.msra.mxu0 0.0
      %2294 = vmatprep.subr.mxu0 0.0
      %2295 = vmatpush1.msra.mxu0 0.0
      %2296 = vmatprep.subr.mxu0 0.0
      %2297 = vmatpush1.msra.mxu0 0.0
      %2298 = vmatprep.subr.mxu0 0.0
      %2299 = vmatpush1.msra.mxu0 0.0
      %2300 = vmatprep.subr.mxu0 0.0
      %2301 = vmatpush1.msra.mxu0 0.0
      %2302 = vmatprep.subr.mxu0 0.0
      %2303 = vmatpush1.msra.mxu0 0.0
      %2304 = vmatprep.subr.mxu0 0.0
      %2305 = vmatpush1.msra.mxu0 0.0
      %2306 = vmatprep.subr.mxu0 0.0
      %2307 = vmatpush1.msra.mxu0 0.0
      %2308 = vmatprep.subr.mxu0 0.0
      %2309 = vmatpush1.msra.mxu0 0.0
      %2310 = vmatprep.subr.mxu0 0.0
      %2311 = vmatpush1.msra.mxu0 0.0
      %2312 = vmatprep.subr.mxu0 0.0
      %2313 = vmatpush1.msra.mxu0 0.0
      %2314 = vmatprep.subr.mxu0 0.0
      %2315 = vmatpush1.msra.mxu0 0.0
      %2316 = vmatprep.subr.mxu0 0.0
      %2317 = vmatpush1.msra.mxu0 0.0
      %2318 = vmatprep.subr.mxu0 0.0
      %2319 = vmatpush1.msra.mxu0 0.0
      %2320 = vmatprep.mubr.f32.mxu0 0.0
      %2321 = vmatmul.mubr.f32.gmra.mrb[0].mxu0 %v2248
      %v2322 = vpop.f32.mrb[0].mxu0
      %v2323 = vadd.f32 0.0, %v2322
      %v2324 = vpop.f32.mrb[0].mxu0
      %v2325 = vadd.f32 0.0, %v2324
      %2326 = vdwg.mxu0
      %2327 = vmatprep.subr.mxu0 0.0
      %2328 = vmatpush1.msra.mxu0 %v2254
      %2329 = vmatprep.subr.mxu0 0.0
      %2330 = vmatpush1.msra.mxu0 0.0
      %2331 = vmatprep.subr.mxu0 0.0
      %2332 = vmatpush1.msra.mxu0 0.0
      %2333 = vmatprep.subr.mxu0 0.0
      %2334 = vmatpush1.msra.mxu0 0.0
      %2335 = vmatprep.subr.mxu0 0.0
      %2336 = vmatpush1.msra.mxu0 0.0
      %2337 = vmatprep.subr.mxu0 0.0
      %2338 = vmatpush1.msra.mxu0 0.0
      %2339 = vmatprep.subr.mxu0 0.0
      %2340 = vmatpush1.msra.mxu0 0.0
      %2341 = vmatprep.subr.mxu0 0.0
      %2342 = vmatpush1.msra.mxu0 0.0
      %2343 = vmatprep.subr.mxu0 0.0
      %2344 = vmatpush1.msra.mxu0 0.0
      %2345 = vmatprep.subr.mxu0 0.0
      %2346 = vmatpush1.msra.mxu0 0.0
      %2347 = vmatprep.subr.mxu0 0.0
      %2348 = vmatpush1.msra.mxu0 0.0
      %2349 = vmatprep.subr.mxu0 0.0
      %2350 = vmatpush1.msra.mxu0 0.0
      %2351 = vmatprep.subr.mxu0 0.0
      %2352 = vmatpush1.msra.mxu0 0.0
      %2353 = vmatprep.subr.mxu0 0.0
      %2354 = vmatpush1.msra.mxu0 0.0
      %2355 = vmatprep.subr.mxu0 0.0
      %2356 = vmatpush1.msra.mxu0 0.0
      %2357 = vmatprep.subr.mxu0 0.0
      %2358 = vmatpush1.msra.mxu0 0.0
      %2359 = vmatprep.subr.mxu0 0.0
      %2360 = vmatpush1.msra.mxu0 0.0
      %2361 = vmatprep.subr.mxu0 0.0
      %2362 = vmatpush1.msra.mxu0 0.0
      %2363 = vmatprep.subr.mxu0 0.0
      %2364 = vmatpush1.msra.mxu0 0.0
      %2365 = vmatprep.subr.mxu0 0.0
      %2366 = vmatpush1.msra.mxu0 0.0
      %2367 = vmatprep.subr.mxu0 0.0
      %2368 = vmatpush1.msra.mxu0 0.0
      %2369 = vmatprep.subr.mxu0 0.0
      %2370 = vmatpush1.msra.mxu0 0.0
      %2371 = vmatprep.subr.mxu0 0.0
      %2372 = vmatpush1.msra.mxu0 0.0
      %2373 = vmatprep.subr.mxu0 0.0
      %2374 = vmatpush1.msra.mxu0 0.0
      %2375 = vmatprep.subr.mxu0 0.0
      %2376 = vmatpush1.msra.mxu0 0.0
      %2377 = vmatprep.subr.mxu0 0.0
      %2378 = vmatpush1.msra.mxu0 0.0
      %2379 = vmatprep.subr.mxu0 0.0
      %2380 = vmatpush1.msra.mxu0 0.0
      %2381 = vmatprep.subr.mxu0 0.0
      %2382 = vmatpush1.msra.mxu0 0.0
      %2383 = vmatprep.subr.mxu0 0.0
      %2384 = vmatpush1.msra.mxu0 0.0
      %2385 = vmatprep.subr.mxu0 0.0
      %2386 = vmatpush1.msra.mxu0 0.0
      %2387 = vmatprep.subr.mxu0 0.0
      %2388 = vmatpush1.msra.mxu0 0.0
      %2389 = vmatprep.subr.mxu0 0.0
      %2390 = vmatpush1.msra.mxu0 0.0
      %2391 = vmatprep.mubr.f32.mxu0 0.0
      %2392 = vmatmul.mubr.f32.gmra.mrb[0].mxu0 %v2248
      %v2393 = vpop.f32.mrb[0].mxu0
      %v2394 = vadd.f32 0.0, %v2393
      %v2395 = vpop.f32.mrb[0].mxu0
      %2396 = vdwg.mxu0
      %v2397 = vadd.f32 %v2145, %v2323
      %v2398 = vadd.f32 %v2147, %v2325
      %v2399 = vadd.f32 %v2216, %v2394
      %s2400 = scalar_lea.vmem %s4, 24
      %v2401 = vld [vmem:[%s2400] sm:$0xff]
      %v2402 = vld [vmem:[#allocation2] sm:$0x3f]
      %v2404 = vcombine.high %v2402, %v2402
      %v2406 = vunpack.c.l.s4 1983009808
      %v2407 = vunpack.c.0.s8 %v2406
      %v2408 = vlaneseq
      %v2409 = vshrl.u32 %v2408, 7
      %v2410 = vsub.s32 %v2407, %v2409
      %v2411 = vrot.slane %v2402, %v2410
      %v2413 = vunpack.c.l.s4 1983009808
      %v2414 = vunpack.c.0.s8 %v2413
      %v2415 = vlaneseq
      %v2416 = vshrl.u32 %v2415, 7
      %v2417 = vsub.s32 %v2414, %v2416
      %v2418 = vrot.slane %v2404, %v2417
      %v2419 = vcombine.high %v2411, %v2411
      %2420 = vrot.lane.b32.xlu0 %v2411, 110
      %v2421 = vpop.permute.xlu0 %2420
      %2422 = vrot.lane.b32.xlu0 %v2419, 110
      %v2423 = vpop.permute.xlu0 %2422
      %2424 = vrot.lane.b32.xlu0 %v2418, 110
      %v2425 = vpop.permute.xlu0 %2424
      %v2426 = vsel %vm785, %v2421, %v2423
      %v2427 = vsel %vm785, %v2423, %v2425
      %v2429 = vsel %vm1918, %v2401, 0
      %v2431 = vsel %vm1833, %v2426, 0
      %v2433 = vsel %vm1833, %v2427, 0
      %v2435 = vsel %vm1833, %v2425, 0
      %2437 = vmatprep.subr.mxu0 %v2433
      %2438 = vmatpush1.msra.mxu0 %v2431
      %2439 = vmatprep.subr.mxu0 0.0
      %2440 = vmatpush1.msra.mxu0 0.0
      %2441 = vmatprep.subr.mxu0 0.0
      %2442 = vmatpush1.msra.mxu0 0.0
      %2443 = vmatprep.subr.mxu0 0.0
      %2444 = vmatpush1.msra.mxu0 0.0
      %2445 = vmatprep.subr.mxu0 0.0
      %2446 = vmatpush1.msra.mxu0 0.0
      %2447 = vmatprep.subr.mxu0 0.0
      %2448 = vmatpush1.msra.mxu0 0.0
      %2449 = vmatprep.subr.mxu0 0.0
      %2450 = vmatpush1.msra.mxu0 0.0
      %2451 = vmatprep.subr.mxu0 0.0
      %2452 = vmatpush1.msra.mxu0 0.0
      %2453 = vmatprep.subr.mxu0 0.0
      %2454 = vmatpush1.msra.mxu0 0.0
      %2455 = vmatprep.subr.mxu0 0.0
      %2456 = vmatpush1.msra.mxu0 0.0
      %2457 = vmatprep.subr.mxu0 0.0
      %2458 = vmatpush1.msra.mxu0 0.0
      %2459 = vmatprep.subr.mxu0 0.0
      %2460 = vmatpush1.msra.mxu0 0.0
      %2461 = vmatprep.subr.mxu0 0.0
      %2462 = vmatpush1.msra.mxu0 0.0
      %2463 = vmatprep.subr.mxu0 0.0
      %2464 = vmatpush1.msra.mxu0 0.0
      %2465 = vmatprep.subr.mxu0 0.0
      %2466 = vmatpush1.msra.mxu0 0.0
      %2467 = vmatprep.subr.mxu0 0.0
      %2468 = vmatpush1.msra.mxu0 0.0
      %2469 = vmatprep.subr.mxu0 0.0
      %2470 = vmatpush1.msra.mxu0 0.0
      %2471 = vmatprep.subr.mxu0 0.0
      %2472 = vmatpush1.msra.mxu0 0.0
      %2473 = vmatprep.subr.mxu0 0.0
      %2474 = vmatpush1.msra.mxu0 0.0
      %2475 = vmatprep.subr.mxu0 0.0
      %2476 = vmatpush1.msra.mxu0 0.0
      %2477 = vmatprep.subr.mxu0 0.0
      %2478 = vmatpush1.msra.mxu0 0.0
      %2479 = vmatprep.subr.mxu0 0.0
      %2480 = vmatpush1.msra.mxu0 0.0
      %2481 = vmatprep.subr.mxu0 0.0
      %2482 = vmatpush1.msra.mxu0 0.0
      %2483 = vmatprep.subr.mxu0 0.0
      %2484 = vmatpush1.msra.mxu0 0.0
      %2485 = vmatprep.subr.mxu0 0.0
      %2486 = vmatpush1.msra.mxu0 0.0
      %2487 = vmatprep.subr.mxu0 0.0
      %2488 = vmatpush1.msra.mxu0 0.0
      %2489 = vmatprep.subr.mxu0 0.0
      %2490 = vmatpush1.msra.mxu0 0.0
      %2491 = vmatprep.subr.mxu0 0.0
      %2492 = vmatpush1.msra.mxu0 0.0
      %2493 = vmatprep.subr.mxu0 0.0
      %2494 = vmatpush1.msra.mxu0 0.0
      %2495 = vmatprep.subr.mxu0 0.0
      %2496 = vmatpush1.msra.mxu0 0.0
      %2497 = vmatprep.subr.mxu0 0.0
      %2498 = vmatpush1.msra.mxu0 0.0
      %2499 = vmatprep.subr.mxu0 0.0
      %2500 = vmatpush1.msra.mxu0 0.0
      %2501 = vmatprep.mubr.f32.mxu0 0.0
      %2502 = vmatmul.mubr.f32.gmra.mrb[0].mxu0 %v2429
      %v2503 = vpop.f32.mrb[0].mxu0
      %v2504 = vadd.f32 0.0, %v2503
      %v2505 = vpop.f32.mrb[0].mxu0
      %v2506 = vadd.f32 0.0, %v2505
      %2507 = vdwg.mxu0
      %2508 = vmatprep.subr.mxu0 0.0
      %2509 = vmatpush1.msra.mxu0 %v2435
      %2510 = vmatprep.subr.mxu0 0.0
      %2511 = vmatpush1.msra.mxu0 0.0
      %2512 = vmatprep.subr.mxu0 0.0
      %2513 = vmatpush1.msra.mxu0 0.0
      %2514 = vmatprep.subr.mxu0 0.0
      %2515 = vmatpush1.msra.mxu0 0.0
      %2516 = vmatprep.subr.mxu0 0.0
      %2517 = vmatpush1.msra.mxu0 0.0
      %2518 = vmatprep.subr.mxu0 0.0
      %2519 = vmatpush1.msra.mxu0 0.0
      %2520 = vmatprep.subr.mxu0 0.0
      %2521 = vmatpush1.msra.mxu0 0.0
      %2522 = vmatprep.subr.mxu0 0.0
      %2523 = vmatpush1.msra.mxu0 0.0
      %2524 = vmatprep.subr.mxu0 0.0
      %2525 = vmatpush1.msra.mxu0 0.0
      %2526 = vmatprep.subr.mxu0 0.0
      %2527 = vmatpush1.msra.mxu0 0.0
      %2528 = vmatprep.subr.mxu0 0.0
      %2529 = vmatpush1.msra.mxu0 0.0
      %2530 = vmatprep.subr.mxu0 0.0
      %2531 = vmatpush1.msra.mxu0 0.0
      %2532 = vmatprep.subr.mxu0 0.0
      %2533 = vmatpush1.msra.mxu0 0.0
      %2534 = vmatprep.subr.mxu0 0.0
      %2535 = vmatpush1.msra.mxu0 0.0
      %2536 = vmatprep.subr.mxu0 0.0
      %2537 = vmatpush1.msra.mxu0 0.0
      %2538 = vmatprep.subr.mxu0 0.0
      %2539 = vmatpush1.msra.mxu0 0.0
      %2540 = vmatprep.subr.mxu0 0.0
      %2541 = vmatpush1.msra.mxu0 0.0
      %2542 = vmatprep.subr.mxu0 0.0
      %2543 = vmatpush1.msra.mxu0 0.0
      %2544 = vmatprep.subr.mxu0 0.0
      %2545 = vmatpush1.msra.mxu0 0.0
      %2546 = vmatprep.subr.mxu0 0.0
      %2547 = vmatpush1.msra.mxu0 0.0
      %2548 = vmatprep.subr.mxu0 0.0
      %2549 = vmatpush1.msra.mxu0 0.0
      %2550 = vmatprep.subr.mxu0 0.0
      %2551 = vmatpush1.msra.mxu0 0.0
      %2552 = vmatprep.subr.mxu0 0.0
      %2553 = vmatpush1.msra.mxu0 0.0
      %2554 = vmatprep.subr.mxu0 0.0
      %2555 = vmatpush1.msra.mxu0 0.0
      %2556 = vmatprep.subr.mxu0 0.0
      %2557 = vmatpush1.msra.mxu0 0.0
      %2558 = vmatprep.subr.mxu0 0.0
      %2559 = vmatpush1.msra.mxu0 0.0
      %2560 = vmatprep.subr.mxu0 0.0
      %2561 = vmatpush1.msra.mxu0 0.0
      %2562 = vmatprep.subr.mxu0 0.0
      %2563 = vmatpush1.msra.mxu0 0.0
      %2564 = vmatprep.subr.mxu0 0.0
      %2565 = vmatpush1.msra.mxu0 0.0
      %2566 = vmatprep.subr.mxu0 0.0
      %2567 = vmatpush1.msra.mxu0 0.0
      %2568 = vmatprep.subr.mxu0 0.0
      %2569 = vmatpush1.msra.mxu0 0.0
      %2570 = vmatprep.subr.mxu0 0.0
      %2571 = vmatpush1.msra.mxu0 0.0
      %2572 = vmatprep.mubr.f32.mxu0 0.0
      %2573 = vmatmul.mubr.f32.gmra.mrb[0].mxu0 %v2429
      %v2574 = vpop.f32.mrb[0].mxu0
      %v2575 = vadd.f32 0.0, %v2574
      %v2576 = vpop.f32.mrb[0].mxu0
      %2577 = vdwg.mxu0
      %v2578 = vadd.f32 %v2397, %v2504
      %v2579 = vadd.f32 %v2398, %v2506
      %v2580 = vadd.f32 %v2399, %v2575
      %s2581 = scalar_lea.vmem %s4, 32
      %v2582 = vld [vmem:[%s2581] sm:$0xff]
      %v2583 = vld [vmem:[#allocation2] sm:$0x3f]
      %v2585 = vcombine.high %v2583, %v2583
      %v2587 = vunpack.c.l.s4 1983009808
      %v2588 = vunpack.c.0.s8 %v2587
      %v2589 = vlaneseq
      %v2590 = vshrl.u32 %v2589, 7
      %v2591 = vsub.s32 %v2588, %v2590
      %v2592 = vrot.slane %v2583, %v2591
      %v2594 = vunpack.c.l.s4 1983009808
      %v2595 = vunpack.c.0.s8 %v2594
      %v2596 = vlaneseq
      %v2597 = vshrl.u32 %v2596, 7
      %v2598 = vsub.s32 %v2595, %v2597
      %v2599 = vrot.slane %v2585, %v2598
      %v2600 = vcombine.high %v2592, %v2592
      %2601 = vrot.lane.b32.xlu0 %v2592, 109
      %v2602 = vpop.permute.xlu0 %2601
      %2603 = vrot.lane.b32.xlu0 %v2600, 109
      %v2604 = vpop.permute.xlu0 %2603
      %2605 = vrot.lane.b32.xlu0 %v2599, 109
      %v2606 = vpop.permute.xlu0 %2605
      %v2607 = vsel %vm946, %v2602, %v2604
      %v2608 = vsel %vm946, %v2604, %v2606
      %v2610 = vsel %vm1918, %v2582, 0
      %v2612 = vsel %vm1833, %v2607, 0
      %v2614 = vsel %vm1833, %v2608, 0
      %v2616 = vsel %vm1833, %v2606, 0
      %2618 = vmatprep.subr.mxu0 %v2614
      %2619 = vmatpush1.msra.mxu0 %v2612
      %2620 = vmatprep.subr.mxu0 0.0
      %2621 = vmatpush1.msra.mxu0 0.0
      %2622 = vmatprep.subr.mxu0 0.0
      %2623 = vmatpush1.msra.mxu0 0.0
      %2624 = vmatprep.subr.mxu0 0.0
      %2625 = vmatpush1.msra.mxu0 0.0
      %2626 = vmatprep.subr.mxu0 0.0
      %2627 = vmatpush1.msra.mxu0 0.0
      %2628 = vmatprep.subr.mxu0 0.0
      %2629 = vmatpush1.msra.mxu0 0.0
      %2630 = vmatprep.subr.mxu0 0.0
      %2631 = vmatpush1.msra.mxu0 0.0
      %2632 = vmatprep.subr.mxu0 0.0
      %2633 = vmatpush1.msra.mxu0 0.0
      %2634 = vmatprep.subr.mxu0 0.0
      %2635 = vmatpush1.msra.mxu0 0.0
      %2636 = vmatprep.subr.mxu0 0.0
      %2637 = vmatpush1.msra.mxu0 0.0
      %2638 = vmatprep.subr.mxu0 0.0
      %2639 = vmatpush1.msra.mxu0 0.0
      %2640 = vmatprep.subr.mxu0 0.0
      %2641 = vmatpush1.msra.mxu0 0.0
      %2642 = vmatprep.subr.mxu0 0.0
      %2643 = vmatpush1.msra.mxu0 0.0
      %2644 = vmatprep.subr.mxu0 0.0
      %2645 = vmatpush1.msra.mxu0 0.0
      %2646 = vmatprep.subr.mxu0 0.0
      %2647 = vmatpush1.msra.mxu0 0.0
      %2648 = vmatprep.subr.mxu0 0.0
      %2649 = vmatpush1.msra.mxu0 0.0
      %2650 = vmatprep.subr.mxu0 0.0
      %2651 = vmatpush1.msra.mxu0 0.0
      %2652 = vmatprep.subr.mxu0 0.0
      %2653 = vmatpush1.msra.mxu0 0.0
      %2654 = vmatprep.subr.mxu0 0.0
      %2655 = vmatpush1.msra.mxu0 0.0
      %2656 = vmatprep.subr.mxu0 0.0
      %2657 = vmatpush1.msra.mxu0 0.0
      %2658 = vmatprep.subr.mxu0 0.0
      %2659 = vmatpush1.msra.mxu0 0.0
      %2660 = vmatprep.subr.mxu0 0.0
      %2661 = vmatpush1.msra.mxu0 0.0
      %2662 = vmatprep.subr.mxu0 0.0
      %2663 = vmatpush1.msra.mxu0 0.0
      %2664 = vmatprep.subr.mxu0 0.0
      %2665 = vmatpush1.msra.mxu0 0.0
      %2666 = vmatprep.subr.mxu0 0.0
      %2667 = vmatpush1.msra.mxu0 0.0
      %2668 = vmatprep.subr.mxu0 0.0
      %2669 = vmatpush1.msra.mxu0 0.0
      %2670 = vmatprep.subr.mxu0 0.0
      %2671 = vmatpush1.msra.mxu0 0.0
      %2672 = vmatprep.subr.mxu0 0.0
      %2673 = vmatpush1.msra.mxu0 0.0
      %2674 = vmatprep.subr.mxu0 0.0
      %2675 = vmatpush1.msra.mxu0 0.0
      %2676 = vmatprep.subr.mxu0 0.0
      %2677 = vmatpush1.msra.mxu0 0.0
      %2678 = vmatprep.subr.mxu0 0.0
      %2679 = vmatpush1.msra.mxu0 0.0
      %2680 = vmatprep.subr.mxu0 0.0
      %2681 = vmatpush1.msra.mxu0 0.0
      %2682 = vmatprep.mubr.f32.mxu0 0.0
      %2683 = vmatmul.mubr.f32.gmra.mrb[0].mxu0 %v2610
      %v2684 = vpop.f32.mrb[0].mxu0
      %v2685 = vadd.f32 0.0, %v2684
      %v2686 = vpop.f32.mrb[0].mxu0
      %v2687 = vadd.f32 0.0, %v2686
      %2688 = vdwg.mxu0
      %2689 = vmatprep.subr.mxu0 0.0
      %2690 = vmatpush1.msra.mxu0 %v2616
      %2691 = vmatprep.subr.mxu0 0.0
      %2692 = vmatpush1.msra.mxu0 0.0
      %2693 = vmatprep.subr.mxu0 0.0
      %2694 = vmatpush1.msra.mxu0 0.0
      %2695 = vmatprep.subr.mxu0 0.0
      %2696 = vmatpush1.msra.mxu0 0.0
      %2697 = vmatprep.subr.mxu0 0.0
      %2698 = vmatpush1.msra.mxu0 0.0
      %2699 = vmatprep.subr.mxu0 0.0
      %2700 = vmatpush1.msra.mxu0 0.0
      %2701 = vmatprep.subr.mxu0 0.0
      %2702 = vmatpush1.msra.mxu0 0.0
      %2703 = vmatprep.subr.mxu0 0.0
      %2704 = vmatpush1.msra.mxu0 0.0
      %2705 = vmatprep.subr.mxu0 0.0
      %2706 = vmatpush1.msra.mxu0 0.0
      %2707 = vmatprep.subr.mxu0 0.0
      %2708 = vmatpush1.msra.mxu0 0.0
      %2709 = vmatprep.subr.mxu0 0.0
      %2710 = vmatpush1.msra.mxu0 0.0
      %2711 = vmatprep.subr.mxu0 0.0
      %2712 = vmatpush1.msra.mxu0 0.0
      %2713 = vmatprep.subr.mxu0 0.0
      %2714 = vmatpush1.msra.mxu0 0.0
      %2715 = vmatprep.subr.mxu0 0.0
      %2716 = vmatpush1.msra.mxu0 0.0
      %2717 = vmatprep.subr.mxu0 0.0
      %2718 = vmatpush1.msra.mxu0 0.0
      %2719 = vmatprep.subr.mxu0 0.0
      %2720 = vmatpush1.msra.mxu0 0.0
      %2721 = vmatprep.subr.mxu0 0.0
      %2722 = vmatpush1.msra.mxu0 0.0
      %2723 = vmatprep.subr.mxu0 0.0
      %2724 = vmatpush1.msra.mxu0 0.0
      %2725 = vmatprep.subr.mxu0 0.0
      %2726 = vmatpush1.msra.mxu0 0.0
      %2727 = vmatprep.subr.mxu0 0.0
      %2728 = vmatpush1.msra.mxu0 0.0
      %2729 = vmatprep.subr.mxu0 0.0
      %2730 = vmatpush1.msra.mxu0 0.0
      %2731 = vmatprep.subr.mxu0 0.0
      %2732 = vmatpush1.msra.mxu0 0.0
      %2733 = vmatprep.subr.mxu0 0.0
      %2734 = vmatpush1.msra.mxu0 0.0
      %2735 = vmatprep.subr.mxu0 0.0
      %2736 = vmatpush1.msra.mxu0 0.0
      %2737 = vmatprep.subr.mxu0 0.0
      %2738 = vmatpush1.msra.mxu0 0.0
      %2739 = vmatprep.subr.mxu0 0.0
      %2740 = vmatpush1.msra.mxu0 0.0
      %2741 = vmatprep.subr.mxu0 0.0
      %2742 = vmatpush1.msra.mxu0 0.0
      %2743 = vmatprep.subr.mxu0 0.0
      %2744 = vmatpush1.msra.mxu0 0.0
      %2745 = vmatprep.subr.mxu0 0.0
      %2746 = vmatpush1.msra.mxu0 0.0
      %2747 = vmatprep.subr.mxu0 0.0
      %2748 = vmatpush1.msra.mxu0 0.0
      %2749 = vmatprep.subr.mxu0 0.0
      %2750 = vmatpush1.msra.mxu0 0.0
      %2751 = vmatprep.subr.mxu0 0.0
      %2752 = vmatpush1.msra.mxu0 0.0
      %2753 = vmatprep.mubr.f32.mxu0 0.0
      %2754 = vmatmul.mubr.f32.gmra.mrb[0].mxu0 %v2610
      %v2755 = vpop.f32.mrb[0].mxu0
      %v2756 = vadd.f32 0.0, %v2755
      %v2757 = vpop.f32.mrb[0].mxu0
      %2758 = vdwg.mxu0
      %v2759 = vadd.f32 %v2578, %v2685
      %v2760 = vadd.f32 %v2579, %v2687
      %v2761 = vadd.f32 %v2580, %v2756
      %s2762 = scalar_lea.vmem %s4, 40
      %v2763 = vld [vmem:[%s2762] sm:$0xff]
      %v2764 = vld [vmem:[#allocation2] sm:$0x3f]
      %v2766 = vcombine.high %v2764, %v2764
      %v2768 = vunpack.c.l.s4 1983009808
      %v2769 = vunpack.c.0.s8 %v2768
      %v2770 = vlaneseq
      %v2771 = vshrl.u32 %v2770, 7
      %v2772 = vsub.s32 %v2769, %v2771
      %v2773 = vrot.slane %v2764, %v2772
      %v2775 = vunpack.c.l.s4 1983009808
      %v2776 = vunpack.c.0.s8 %v2775
      %v2777 = vlaneseq
      %v2778 = vshrl.u32 %v2777, 7
      %v2779 = vsub.s32 %v2776, %v2778
      %v2780 = vrot.slane %v2766, %v2779
      %v2781 = vcombine.high %v2773, %v2773
      %2782 = vrot.lane.b32.xlu0 %v2773, 108
      %v2783 = vpop.permute.xlu0 %2782
      %2784 = vrot.lane.b32.xlu0 %v2781, 108
      %v2785 = vpop.permute.xlu0 %2784
      %2786 = vrot.lane.b32.xlu0 %v2780, 108
      %v2787 = vpop.permute.xlu0 %2786
      %v2788 = vsel %vm1107, %v2783, %v2785
      %v2789 = vsel %vm1107, %v2785, %v2787
      %v2791 = vsel %vm1918, %v2763, 0
      %v2793 = vsel %vm1833, %v2788, 0
      %v2795 = vsel %vm1833, %v2789, 0
      %v2797 = vsel %vm1833, %v2787, 0
      %2799 = vmatprep.subr.mxu0 %v2795
      %2800 = vmatpush1.msra.mxu0 %v2793
      %2801 = vmatprep.subr.mxu0 0.0
      %2802 = vmatpush1.msra.mxu0 0.0
      %2803 = vmatprep.subr.mxu0 0.0
      %2804 = vmatpush1.msra.mxu0 0.0
      %2805 = vmatprep.subr.mxu0 0.0
      %2806 = vmatpush1.msra.mxu0 0.0
      %2807 = vmatprep.subr.mxu0 0.0
      %2808 = vmatpush1.msra.mxu0 0.0
      %2809 = vmatprep.subr.mxu0 0.0
      %2810 = vmatpush1.msra.mxu0 0.0
      %2811 = vmatprep.subr.mxu0 0.0
      %2812 = vmatpush1.msra.mxu0 0.0
      %2813 = vmatprep.subr.mxu0 0.0
      %2814 = vmatpush1.msra.mxu0 0.0
      %2815 = vmatprep.subr.mxu0 0.0
      %2816 = vmatpush1.msra.mxu0 0.0
      %2817 = vmatprep.subr.mxu0 0.0
      %2818 = vmatpush1.msra.mxu0 0.0
      %2819 = vmatprep.subr.mxu0 0.0
      %2820 = vmatpush1.msra.mxu0 0.0
      %2821 = vmatprep.subr.mxu0 0.0
      %2822 = vmatpush1.msra.mxu0 0.0
      %2823 = vmatprep.subr.mxu0 0.0
      %2824 = vmatpush1.msra.mxu0 0.0
      %2825 = vmatprep.subr.mxu0 0.0
      %2826 = vmatpush1.msra.mxu0 0.0
      %2827 = vmatprep.subr.mxu0 0.0
      %2828 = vmatpush1.msra.mxu0 0.0
      %2829 = vmatprep.subr.mxu0 0.0
      %2830 = vmatpush1.msra.mxu0 0.0
      %2831 = vmatprep.subr.mxu0 0.0
      %2832 = vmatpush1.msra.mxu0 0.0
      %2833 = vmatprep.subr.mxu0 0.0
      %2834 = vmatpush1.msra.mxu0 0.0
      %2835 = vmatprep.subr.mxu0 0.0
      %2836 = vmatpush1.msra.mxu0 0.0
      %2837 = vmatprep.subr.mxu0 0.0
      %2838 = vmatpush1.msra.mxu0 0.0
      %2839 = vmatprep.subr.mxu0 0.0
      %2840 = vmatpush1.msra.mxu0 0.0
      %2841 = vmatprep.subr.mxu0 0.0
      %2842 = vmatpush1.msra.mxu0 0.0
      %2843 = vmatprep.subr.mxu0 0.0
      %2844 = vmatpush1.msra.mxu0 0.0
      %2845 = vmatprep.subr.mxu0 0.0
      %2846 = vmatpush1.msra.mxu0 0.0
      %2847 = vmatprep.subr.mxu0 0.0
      %2848 = vmatpush1.msra.mxu0 0.0
      %2849 = vmatprep.subr.mxu0 0.0
      %2850 = vmatpush1.msra.mxu0 0.0
      %2851 = vmatprep.subr.mxu0 0.0
      %2852 = vmatpush1.msra.mxu0 0.0
      %2853 = vmatprep.subr.mxu0 0.0
      %2854 = vmatpush1.msra.mxu0 0.0
      %2855 = vmatprep.subr.mxu0 0.0
      %2856 = vmatpush1.msra.mxu0 0.0
      %2857 = vmatprep.subr.mxu0 0.0
      %2858 = vmatpush1.msra.mxu0 0.0
      %2859 = vmatprep.subr.mxu0 0.0
      %2860 = vmatpush1.msra.mxu0 0.0
      %2861 = vmatprep.subr.mxu0 0.0
      %2862 = vmatpush1.msra.mxu0 0.0
      %2863 = vmatprep.mubr.f32.mxu0 0.0
      %2864 = vmatmul.mubr.f32.gmra.mrb[0].mxu0 %v2791
      %v2865 = vpop.f32.mrb[0].mxu0
      %v2866 = vadd.f32 0.0, %v2865
      %v2867 = vpop.f32.mrb[0].mxu0
      %v2868 = vadd.f32 0.0, %v2867
      %2869 = vdwg.mxu0
      %2870 = vmatprep.subr.mxu0 0.0
      %2871 = vmatpush1.msra.mxu0 %v2797
      %2872 = vmatprep.subr.mxu0 0.0
      %2873 = vmatpush1.msra.mxu0 0.0
      %2874 = vmatprep.subr.mxu0 0.0
      %2875 = vmatpush1.msra.mxu0 0.0
      %2876 = vmatprep.subr.mxu0 0.0
      %2877 = vmatpush1.msra.mxu0 0.0
      %2878 = vmatprep.subr.mxu0 0.0
      %2879 = vmatpush1.msra.mxu0 0.0
      %2880 = vmatprep.subr.mxu0 0.0
      %2881 = vmatpush1.msra.mxu0 0.0
      %2882 = vmatprep.subr.mxu0 0.0
      %2883 = vmatpush1.msra.mxu0 0.0
      %2884 = vmatprep.subr.mxu0 0.0
      %2885 = vmatpush1.msra.mxu0 0.0
      %2886 = vmatprep.subr.mxu0 0.0
      %2887 = vmatpush1.msra.mxu0 0.0
      %2888 = vmatprep.subr.mxu0 0.0
      %2889 = vmatpush1.msra.mxu0 0.0
      %2890 = vmatprep.subr.mxu0 0.0
      %2891 = vmatpush1.msra.mxu0 0.0
      %2892 = vmatprep.subr.mxu0 0.0
      %2893 = vmatpush1.msra.mxu0 0.0
      %2894 = vmatprep.subr.mxu0 0.0
      %2895 = vmatpush1.msra.mxu0 0.0
      %2896 = vmatprep.subr.mxu0 0.0
      %2897 = vmatpush1.msra.mxu0 0.0
      %2898 = vmatprep.subr.mxu0 0.0
      %2899 = vmatpush1.msra.mxu0 0.0
      %2900 = vmatprep.subr.mxu0 0.0
      %2901 = vmatpush1.msra.mxu0 0.0
      %2902 = vmatprep.subr.mxu0 0.0
      %2903 = vmatpush1.msra.mxu0 0.0
      %2904 = vmatprep.subr.mxu0 0.0
      %2905 = vmatpush1.msra.mxu0 0.0
      %2906 = vmatprep.subr.mxu0 0.0
      %2907 = vmatpush1.msra.mxu0 0.0
      %2908 = vmatprep.subr.mxu0 0.0
      %2909 = vmatpush1.msra.mxu0 0.0
      %2910 = vmatprep.subr.mxu0 0.0
      %2911 = vmatpush1.msra.mxu0 0.0
      %2912 = vmatprep.subr.mxu0 0.0
      %2913 = vmatpush1.msra.mxu0 0.0
      %2914 = vmatprep.subr.mxu0 0.0
      %2915 = vmatpush1.msra.mxu0 0.0
      %2916 = vmatprep.subr.mxu0 0.0
      %2917 = vmatpush1.msra.mxu0 0.0
      %2918 = vmatprep.subr.mxu0 0.0
      %2919 = vmatpush1.msra.mxu0 0.0
      %2920 = vmatprep.subr.mxu0 0.0
      %2921 = vmatpush1.msra.mxu0 0.0
      %2922 = vmatprep.subr.mxu0 0.0
      %2923 = vmatpush1.msra.mxu0 0.0
      %2924 = vmatprep.subr.mxu0 0.0
      %2925 = vmatpush1.msra.mxu0 0.0
      %2926 = vmatprep.subr.mxu0 0.0
      %2927 = vmatpush1.msra.mxu0 0.0
      %2928 = vmatprep.subr.mxu0 0.0
      %2929 = vmatpush1.msra.mxu0 0.0
      %2930 = vmatprep.subr.mxu0 0.0
      %2931 = vmatpush1.msra.mxu0 0.0
      %2932 = vmatprep.subr.mxu0 0.0
      %2933 = vmatpush1.msra.mxu0 0.0
      %2934 = vmatprep.mubr.f32.mxu0 0.0
      %2935 = vmatmul.mubr.f32.gmra.mrb[0].mxu0 %v2791
      %v2936 = vpop.f32.mrb[0].mxu0
      %v2937 = vadd.f32 0.0, %v2936
      %v2938 = vpop.f32.mrb[0].mxu0
      %2939 = vdwg.mxu0
      %v2940 = vadd.f32 %v2759, %v2866
      %v2941 = vadd.f32 %v2760, %v2868
      %v2942 = vadd.f32 %v2761, %v2937
      %s2943 = scalar_lea.vmem %s4, 48
      %v2944 = vld [vmem:[%s2943] sm:$0xff]
      %v2945 = vld [vmem:[#allocation2] sm:$0x3f]
      %v2947 = vcombine.high %v2945, %v2945
      %v2949 = vunpack.c.l.s4 1983009808
      %v2950 = vunpack.c.0.s8 %v2949
      %v2951 = vlaneseq
      %v2952 = vshrl.u32 %v2951, 7
      %v2953 = vsub.s32 %v2950, %v2952
      %v2954 = vrot.slane %v2945, %v2953
      %v2956 = vunpack.c.l.s4 1983009808
      %v2957 = vunpack.c.0.s8 %v2956
      %v2958 = vlaneseq
      %v2959 = vshrl.u32 %v2958, 7
      %v2960 = vsub.s32 %v2957, %v2959
      %v2961 = vrot.slane %v2947, %v2960
      %v2962 = vcombine.high %v2954, %v2954
      %2963 = vrot.lane.b32.xlu0 %v2954, 92
      %v2964 = vpop.permute.xlu0 %2963
      %2965 = vrot.lane.b32.xlu0 %v2962, 92
      %v2966 = vpop.permute.xlu0 %2965
      %2967 = vrot.lane.b32.xlu0 %v2961, 92
      %v2968 = vpop.permute.xlu0 %2967
      %v2969 = vsel %vm1268, %v2964, %v2966
      %v2970 = vsel %vm1268, %v2966, %v2968
      %v2972 = vsel %vm1918, %v2944, 0
      %v2974 = vsel %vm1833, %v2969, 0
      %v2976 = vsel %vm1833, %v2970, 0
      %v2978 = vsel %vm1833, %v2968, 0
      %2980 = vmatprep.subr.mxu0 %v2976
      %2981 = vmatpush1.msra.mxu0 %v2974
      %2982 = vmatprep.subr.mxu0 0.0
      %2983 = vmatpush1.msra.mxu0 0.0
      %2984 = vmatprep.subr.mxu0 0.0
      %2985 = vmatpush1.msra.mxu0 0.0
      %2986 = vmatprep.subr.mxu0 0.0
      %2987 = vmatpush1.msra.mxu0 0.0
      %2988 = vmatprep.subr.mxu0 0.0
      %2989 = vmatpush1.msra.mxu0 0.0
      %2990 = vmatprep.subr.mxu0 0.0
      %2991 = vmatpush1.msra.mxu0 0.0
      %2992 = vmatprep.subr.mxu0 0.0
      %2993 = vmatpush1.msra.mxu0 0.0
      %2994 = vmatprep.subr.mxu0 0.0
      %2995 = vmatpush1.msra.mxu0 0.0
      %2996 = vmatprep.subr.mxu0 0.0
      %2997 = vmatpush1.msra.mxu0 0.0
      %2998 = vmatprep.subr.mxu0 0.0
      %2999 = vmatpush1.msra.mxu0 0.0
      %3000 = vmatprep.subr.mxu0 0.0
      %3001 = vmatpush1.msra.mxu0 0.0
      %3002 = vmatprep.subr.mxu0 0.0
      %3003 = vmatpush1.msra.mxu0 0.0
      %3004 = vmatprep.subr.mxu0 0.0
      %3005 = vmatpush1.msra.mxu0 0.0
      %3006 = vmatprep.subr.mxu0 0.0
      %3007 = vmatpush1.msra.mxu0 0.0
      %3008 = vmatprep.subr.mxu0 0.0
      %3009 = vmatpush1.msra.mxu0 0.0
      %3010 = vmatprep.subr.mxu0 0.0
      %3011 = vmatpush1.msra.mxu0 0.0
      %3012 = vmatprep.subr.mxu0 0.0
      %3013 = vmatpush1.msra.mxu0 0.0
      %3014 = vmatprep.subr.mxu0 0.0
      %3015 = vmatpush1.msra.mxu0 0.0
      %3016 = vmatprep.subr.mxu0 0.0
      %3017 = vmatpush1.msra.mxu0 0.0
      %3018 = vmatprep.subr.mxu0 0.0
      %3019 = vmatpush1.msra.mxu0 0.0
      %3020 = vmatprep.subr.mxu0 0.0
      %3021 = vmatpush1.msra.mxu0 0.0
      %3022 = vmatprep.subr.mxu0 0.0
      %3023 = vmatpush1.msra.mxu0 0.0
      %3024 = vmatprep.subr.mxu0 0.0
      %3025 = vmatpush1.msra.mxu0 0.0
      %3026 = vmatprep.subr.mxu0 0.0
      %3027 = vmatpush1.msra.mxu0 0.0
      %3028 = vmatprep.subr.mxu0 0.0
      %3029 = vmatpush1.msra.mxu0 0.0
      %3030 = vmatprep.subr.mxu0 0.0
      %3031 = vmatpush1.msra.mxu0 0.0
      %3032 = vmatprep.subr.mxu0 0.0
      %3033 = vmatpush1.msra.mxu0 0.0
      %3034 = vmatprep.subr.mxu0 0.0
      %3035 = vmatpush1.msra.mxu0 0.0
      %3036 = vmatprep.subr.mxu0 0.0
      %3037 = vmatpush1.msra.mxu0 0.0
      %3038 = vmatprep.subr.mxu0 0.0
      %3039 = vmatpush1.msra.mxu0 0.0
      %3040 = vmatprep.subr.mxu0 0.0
      %3041 = vmatpush1.msra.mxu0 0.0
      %3042 = vmatprep.subr.mxu0 0.0
      %3043 = vmatpush1.msra.mxu0 0.0
      %3044 = vmatprep.mubr.f32.mxu0 0.0
      %3045 = vmatmul.mubr.f32.gmra.mrb[0].mxu0 %v2972
      %v3046 = vpop.f32.mrb[0].mxu0
      %v3047 = vadd.f32 0.0, %v3046
      %v3048 = vpop.f32.mrb[0].mxu0
      %v3049 = vadd.f32 0.0, %v3048
      %3050 = vdwg.mxu0
      %3051 = vmatprep.subr.mxu0 0.0
      %3052 = vmatpush1.msra.mxu0 %v2978
      %3053 = vmatprep.subr.mxu0 0.0
      %3054 = vmatpush1.msra.mxu0 0.0
      %3055 = vmatprep.subr.mxu0 0.0
      %3056 = vmatpush1.msra.mxu0 0.0
      %3057 = vmatprep.subr.mxu0 0.0
      %3058 = vmatpush1.msra.mxu0 0.0
      %3059 = vmatprep.subr.mxu0 0.0
      %3060 = vmatpush1.msra.mxu0 0.0
      %3061 = vmatprep.subr.mxu0 0.0
      %3062 = vmatpush1.msra.mxu0 0.0
      %3063 = vmatprep.subr.mxu0 0.0
      %3064 = vmatpush1.msra.mxu0 0.0
      %3065 = vmatprep.subr.mxu0 0.0
      %3066 = vmatpush1.msra.mxu0 0.0
      %3067 = vmatprep.subr.mxu0 0.0
      %3068 = vmatpush1.msra.mxu0 0.0
      %3069 = vmatprep.subr.mxu0 0.0
      %3070 = vmatpush1.msra.mxu0 0.0
      %3071 = vmatprep.subr.mxu0 0.0
      %3072 = vmatpush1.msra.mxu0 0.0
      %3073 = vmatprep.subr.mxu0 0.0
      %3074 = vmatpush1.msra.mxu0 0.0
      %3075 = vmatprep.subr.mxu0 0.0
      %3076 = vmatpush1.msra.mxu0 0.0
      %3077 = vmatprep.subr.mxu0 0.0
      %3078 = vmatpush1.msra.mxu0 0.0
      %3079 = vmatprep.subr.mxu0 0.0
      %3080 = vmatpush1.msra.mxu0 0.0
      %3081 = vmatprep.subr.mxu0 0.0
      %3082 = vmatpush1.msra.mxu0 0.0
      %3083 = vmatprep.subr.mxu0 0.0
      %3084 = vmatpush1.msra.mxu0 0.0
      %3085 = vmatprep.subr.mxu0 0.0
      %3086 = vmatpush1.msra.mxu0 0.0
      %3087 = vmatprep.subr.mxu0 0.0
      %3088 = vmatpush1.msra.mxu0 0.0
      %3089 = vmatprep.subr.mxu0 0.0
      %3090 = vmatpush1.msra.mxu0 0.0
      %3091 = vmatprep.subr.mxu0 0.0
      %3092 = vmatpush1.msra.mxu0 0.0
      %3093 = vmatprep.subr.mxu0 0.0
      %3094 = vmatpush1.msra.mxu0 0.0
      %3095 = vmatprep.subr.mxu0 0.0
      %3096 = vmatpush1.msra.mxu0 0.0
      %3097 = vmatprep.subr.mxu0 0.0
      %3098 = vmatpush1.msra.mxu0 0.0
      %3099 = vmatprep.subr.mxu0 0.0
      %3100 = vmatpush1.msra.mxu0 0.0
      %3101 = vmatprep.subr.mxu0 0.0
      %3102 = vmatpush1.msra.mxu0 0.0
      %3103 = vmatprep.subr.mxu0 0.0
      %3104 = vmatpush1.msra.mxu0 0.0
      %3105 = vmatprep.subr.mxu0 0.0
      %3106 = vmatpush1.msra.mxu0 0.0
      %3107 = vmatprep.subr.mxu0 0.0
      %3108 = vmatpush1.msra.mxu0 0.0
      %3109 = vmatprep.subr.mxu0 0.0
      %3110 = vmatpush1.msra.mxu0 0.0
      %3111 = vmatprep.subr.mxu0 0.0
      %3112 = vmatpush1.msra.mxu0 0.0
      %3113 = vmatprep.subr.mxu0 0.0
      %3114 = vmatpush1.msra.mxu0 0.0
      %3115 = vmatprep.mubr.f32.mxu0 0.0
      %3116 = vmatmul.mubr.f32.gmra.mrb[0].mxu0 %v2972
      %v3117 = vpop.f32.mrb[0].mxu0
      %v3118 = vadd.f32 0.0, %v3117
      %v3119 = vpop.f32.mrb[0].mxu0
      %3120 = vdwg.mxu0
      %v3121 = vadd.f32 %v2940, %v3047
      %v3122 = vadd.f32 %v2941, %v3049
      %v3123 = vadd.f32 %v2942, %v3118
      %s3124 = scalar_lea.vmem %s4, 56
      %v3125 = vld [vmem:[%s3124] sm:$0xff]
      %v3126 = vld [vmem:[#allocation2] sm:$0x3f]
      %v3128 = vcombine.high %v3126, %v3126
      %v3130 = vunpack.c.l.s4 1983009808
      %v3131 = vunpack.c.0.s8 %v3130
      %v3132 = vlaneseq
      %v3133 = vshrl.u32 %v3132, 7
      %v3134 = vsub.s32 %v3131, %v3133
      %v3135 = vrot.slane %v3126, %v3134
      %v3137 = vunpack.c.l.s4 1983009808
      %v3138 = vunpack.c.0.s8 %v3137
      %v3139 = vlaneseq
      %v3140 = vshrl.u32 %v3139, 7
      %v3141 = vsub.s32 %v3138, %v3140
      %v3142 = vrot.slane %v3128, %v3141
      %v3143 = vcombine.high %v3135, %v3135
      %3144 = vrot.lane.b32.xlu0 %v3135, 91
      %v3145 = vpop.permute.xlu0 %3144
      %3146 = vrot.lane.b32.xlu0 %v3143, 91
      %v3147 = vpop.permute.xlu0 %3146
      %3148 = vrot.lane.b32.xlu0 %v3142, 91
      %v3149 = vpop.permute.xlu0 %3148
      %v3150 = vsel %vm1429, %v3145, %v3147
      %v3151 = vsel %vm1429, %v3147, %v3149
      %v3153 = vsel %vm1918, %v3125, 0
      %v3155 = vsel %vm1833, %v3150, 0
      %v3157 = vsel %vm1833, %v3151, 0
      %v3159 = vsel %vm1833, %v3149, 0
      %3161 = vmatprep.subr.mxu0 %v3157
      %3162 = vmatpush1.msra.mxu0 %v3155
      %3163 = vmatprep.subr.mxu0 0.0
      %3164 = vmatpush1.msra.mxu0 0.0
      %3165 = vmatprep.subr.mxu0 0.0
      %3166 = vmatpush1.msra.mxu0 0.0
      %3167 = vmatprep.subr.mxu0 0.0
      %3168 = vmatpush1.msra.mxu0 0.0
      %3169 = vmatprep.subr.mxu0 0.0
      %3170 = vmatpush1.msra.mxu0 0.0
      %3171 = vmatprep.subr.mxu0 0.0
      %3172 = vmatpush1.msra.mxu0 0.0
      %3173 = vmatprep.subr.mxu0 0.0
      %3174 = vmatpush1.msra.mxu0 0.0
      %3175 = vmatprep.subr.mxu0 0.0
      %3176 = vmatpush1.msra.mxu0 0.0
      %3177 = vmatprep.subr.mxu0 0.0
      %3178 = vmatpush1.msra.mxu0 0.0
      %3179 = vmatprep.subr.mxu0 0.0
      %3180 = vmatpush1.msra.mxu0 0.0
      %3181 = vmatprep.subr.mxu0 0.0
      %3182 = vmatpush1.msra.mxu0 0.0
      %3183 = vmatprep.subr.mxu0 0.0
      %3184 = vmatpush1.msra.mxu0 0.0
      %3185 = vmatprep.subr.mxu0 0.0
      %3186 = vmatpush1.msra.mxu0 0.0
      %3187 = vmatprep.subr.mxu0 0.0
      %3188 = vmatpush1.msra.mxu0 0.0
      %3189 = vmatprep.subr.mxu0 0.0
      %3190 = vmatpush1.msra.mxu0 0.0
      %3191 = vmatprep.subr.mxu0 0.0
      %3192 = vmatpush1.msra.mxu0 0.0
      %3193 = vmatprep.subr.mxu0 0.0
      %3194 = vmatpush1.msra.mxu0 0.0
      %3195 = vmatprep.subr.mxu0 0.0
      %3196 = vmatpush1.msra.mxu0 0.0
      %3197 = vmatprep.subr.mxu0 0.0
      %3198 = vmatpush1.msra.mxu0 0.0
      %3199 = vmatprep.subr.mxu0 0.0
      %3200 = vmatpush1.msra.mxu0 0.0
      %3201 = vmatprep.subr.mxu0 0.0
      %3202 = vmatpush1.msra.mxu0 0.0
      %3203 = vmatprep.subr.mxu0 0.0
      %3204 = vmatpush1.msra.mxu0 0.0
      %3205 = vmatprep.subr.mxu0 0.0
      %3206 = vmatpush1.msra.mxu0 0.0
      %3207 = vmatprep.subr.mxu0 0.0
      %3208 = vmatpush1.msra.mxu0 0.0
      %3209 = vmatprep.subr.mxu0 0.0
      %3210 = vmatpush1.msra.mxu0 0.0
      %3211 = vmatprep.subr.mxu0 0.0
      %3212 = vmatpush1.msra.mxu0 0.0
      %3213 = vmatprep.subr.mxu0 0.0
      %3214 = vmatpush1.msra.mxu0 0.0
      %3215 = vmatprep.subr.mxu0 0.0
      %3216 = vmatpush1.msra.mxu0 0.0
      %3217 = vmatprep.subr.mxu0 0.0
      %3218 = vmatpush1.msra.mxu0 0.0
      %3219 = vmatprep.subr.mxu0 0.0
      %3220 = vmatpush1.msra.mxu0 0.0
      %3221 = vmatprep.subr.mxu0 0.0
      %3222 = vmatpush1.msra.mxu0 0.0
      %3223 = vmatprep.subr.mxu0 0.0
      %3224 = vmatpush1.msra.mxu0 0.0
      %3225 = vmatprep.mubr.f32.mxu0 0.0
      %3226 = vmatmul.mubr.f32.gmra.mrb[0].mxu0 %v3153
      %v3227 = vpop.f32.mrb[0].mxu0
      %v3228 = vadd.f32 0.0, %v3227
      %v3229 = vpop.f32.mrb[0].mxu0
      %v3230 = vadd.f32 0.0, %v3229
      %3231 = vdwg.mxu0
      %3232 = vmatprep.subr.mxu0 0.0
      %3233 = vmatpush1.msra.mxu0 %v3159
      %3234 = vmatprep.subr.mxu0 0.0
      %3235 = vmatpush1.msra.mxu0 0.0
      %3236 = vmatprep.subr.mxu0 0.0
      %3237 = vmatpush1.msra.mxu0 0.0
      %3238 = vmatprep.subr.mxu0 0.0
      %3239 = vmatpush1.msra.mxu0 0.0
      %3240 = vmatprep.subr.mxu0 0.0
      %3241 = vmatpush1.msra.mxu0 0.0
      %3242 = vmatprep.subr.mxu0 0.0
      %3243 = vmatpush1.msra.mxu0 0.0
      %3244 = vmatprep.subr.mxu0 0.0
      %3245 = vmatpush1.msra.mxu0 0.0
      %3246 = vmatprep.subr.mxu0 0.0
      %3247 = vmatpush1.msra.mxu0 0.0
      %3248 = vmatprep.subr.mxu0 0.0
      %3249 = vmatpush1.msra.mxu0 0.0
      %3250 = vmatprep.subr.mxu0 0.0
      %3251 = vmatpush1.msra.mxu0 0.0
      %3252 = vmatprep.subr.mxu0 0.0
      %3253 = vmatpush1.msra.mxu0 0.0
      %3254 = vmatprep.subr.mxu0 0.0
      %3255 = vmatpush1.msra.mxu0 0.0
      %3256 = vmatprep.subr.mxu0 0.0
      %3257 = vmatpush1.msra.mxu0 0.0
      %3258 = vmatprep.subr.mxu0 0.0
      %3259 = vmatpush1.msra.mxu0 0.0
      %3260 = vmatprep.subr.mxu0 0.0
      %3261 = vmatpush1.msra.mxu0 0.0
      %3262 = vmatprep.subr.mxu0 0.0
      %3263 = vmatpush1.msra.mxu0 0.0
      %3264 = vmatprep.subr.mxu0 0.0
      %3265 = vmatpush1.msra.mxu0 0.0
      %3266 = vmatprep.subr.mxu0 0.0
      %3267 = vmatpush1.msra.mxu0 0.0
      %3268 = vmatprep.subr.mxu0 0.0
      %3269 = vmatpush1.msra.mxu0 0.0
      %3270 = vmatprep.subr.mxu0 0.0
      %3271 = vmatpush1.msra.mxu0 0.0
      %3272 = vmatprep.subr.mxu0 0.0
      %3273 = vmatpush1.msra.mxu0 0.0
      %3274 = vmatprep.subr.mxu0 0.0
      %3275 = vmatpush1.msra.mxu0 0.0
      %3276 = vmatprep.subr.mxu0 0.0
      %3277 = vmatpush1.msra.mxu0 0.0
      %3278 = vmatprep.subr.mxu0 0.0
      %3279 = vmatpush1.msra.mxu0 0.0
      %3280 = vmatprep.subr.mxu0 0.0
      %3281 = vmatpush1.msra.mxu0 0.0
      %3282 = vmatprep.subr.mxu0 0.0
      %3283 = vmatpush1.msra.mxu0 0.0
      %3284 = vmatprep.subr.mxu0 0.0
      %3285 = vmatpush1.msra.mxu0 0.0
      %3286 = vmatprep.subr.mxu0 0.0
      %3287 = vmatpush1.msra.mxu0 0.0
      %3288 = vmatprep.subr.mxu0 0.0
      %3289 = vmatpush1.msra.mxu0 0.0
      %3290 = vmatprep.subr.mxu0 0.0
      %3291 = vmatpush1.msra.mxu0 0.0
      %3292 = vmatprep.subr.mxu0 0.0
      %3293 = vmatpush1.msra.mxu0 0.0
      %3294 = vmatprep.subr.mxu0 0.0
      %3295 = vmatpush1.msra.mxu0 0.0
      %3296 = vmatprep.mubr.f32.mxu0 0.0
      %3297 = vmatmul.mubr.f32.gmra.mrb[0].mxu0 %v3153
      %v3298 = vpop.f32.mrb[0].mxu0
      %v3299 = vadd.f32 0.0, %v3298
      %v3300 = vpop.f32.mrb[0].mxu0
      %3301 = vdwg.mxu0
      %v3302 = vadd.f32 %v3121, %v3228
      %v3303 = vadd.f32 %v3122, %v3230
      %v3304 = vadd.f32 %v3123, %v3299
      %s3305 = scalar_lea.vmem %s4, 64
      %v3306 = vld [vmem:[%s3305] sm:$0xff]
      %v3307 = vld [vmem:[#allocation2] sm:$0x3f]
      %v3309 = vcombine.high %v3307, %v3307
      %v3311 = vunpack.c.l.s4 1983009808
      %v3312 = vunpack.c.0.s8 %v3311
      %v3313 = vlaneseq
      %v3314 = vshrl.u32 %v3313, 7
      %v3315 = vsub.s32 %v3312, %v3314
      %v3316 = vrot.slane %v3307, %v3315
      %v3318 = vunpack.c.l.s4 1983009808
      %v3319 = vunpack.c.0.s8 %v3318
      %v3320 = vlaneseq
      %v3321 = vshrl.u32 %v3320, 7
      %v3322 = vsub.s32 %v3319, %v3321
      %v3323 = vrot.slane %v3309, %v3322
      %v3324 = vcombine.high %v3316, %v3316
      %3325 = vrot.lane.b32.xlu0 %v3316, 90
      %v3326 = vpop.permute.xlu0 %3325
      %3327 = vrot.lane.b32.xlu0 %v3324, 90
      %v3328 = vpop.permute.xlu0 %3327
      %3329 = vrot.lane.b32.xlu0 %v3323, 90
      %v3330 = vpop.permute.xlu0 %3329
      %v3331 = vsel %vm1590, %v3326, %v3328
      %v3332 = vsel %vm1590, %v3328, %v3330
      %v3334 = vsel %vm1918, %v3306, 0
      %v3336 = vsel %vm1833, %v3331, 0
      %v3338 = vsel %vm1833, %v3332, 0
      %v3340 = vsel %vm1833, %v3330, 0
      %3342 = vmatprep.subr.mxu0 %v3338
      %3343 = vmatpush1.msra.mxu0 %v3336
      %3344 = vmatprep.subr.mxu0 0.0
      %3345 = vmatpush1.msra.mxu0 0.0
      %3346 = vmatprep.subr.mxu0 0.0
      %3347 = vmatpush1.msra.mxu0 0.0
      %3348 = vmatprep.subr.mxu0 0.0
      %3349 = vmatpush1.msra.mxu0 0.0
      %3350 = vmatprep.subr.mxu0 0.0
      %3351 = vmatpush1.msra.mxu0 0.0
      %3352 = vmatprep.subr.mxu0 0.0
      %3353 = vmatpush1.msra.mxu0 0.0
      %3354 = vmatprep.subr.mxu0 0.0
      %3355 = vmatpush1.msra.mxu0 0.0
      %3356 = vmatprep.subr.mxu0 0.0
      %3357 = vmatpush1.msra.mxu0 0.0
      %3358 = vmatprep.subr.mxu0 0.0
      %3359 = vmatpush1.msra.mxu0 0.0
      %3360 = vmatprep.subr.mxu0 0.0
      %3361 = vmatpush1.msra.mxu0 0.0
      %3362 = vmatprep.subr.mxu0 0.0
      %3363 = vmatpush1.msra.mxu0 0.0
      %3364 = vmatprep.subr.mxu0 0.0
      %3365 = vmatpush1.msra.mxu0 0.0
      %3366 = vmatprep.subr.mxu0 0.0
      %3367 = vmatpush1.msra.mxu0 0.0
      %3368 = vmatprep.subr.mxu0 0.0
      %3369 = vmatpush1.msra.mxu0 0.0
      %3370 = vmatprep.subr.mxu0 0.0
      %3371 = vmatpush1.msra.mxu0 0.0
      %3372 = vmatprep.subr.mxu0 0.0
      %3373 = vmatpush1.msra.mxu0 0.0
      %3374 = vmatprep.subr.mxu0 0.0
      %3375 = vmatpush1.msra.mxu0 0.0
      %3376 = vmatprep.subr.mxu0 0.0
      %3377 = vmatpush1.msra.mxu0 0.0
      %3378 = vmatprep.subr.mxu0 0.0
      %3379 = vmatpush1.msra.mxu0 0.0
      %3380 = vmatprep.subr.mxu0 0.0
      %3381 = vmatpush1.msra.mxu0 0.0
      %3382 = vmatprep.subr.mxu0 0.0
      %3383 = vmatpush1.msra.mxu0 0.0
      %3384 = vmatprep.subr.mxu0 0.0
      %3385 = vmatpush1.msra.mxu0 0.0
      %3386 = vmatprep.subr.mxu0 0.0
      %3387 = vmatpush1.msra.mxu0 0.0
      %3388 = vmatprep.subr.mxu0 0.0
      %3389 = vmatpush1.msra.mxu0 0.0
      %3390 = vmatprep.subr.mxu0 0.0
      %3391 = vmatpush1.msra.mxu0 0.0
      %3392 = vmatprep.subr.mxu0 0.0
      %3393 = vmatpush1.msra.mxu0 0.0
      %3394 = vmatprep.subr.mxu0 0.0
      %3395 = vmatpush1.msra.mxu0 0.0
      %3396 = vmatprep.subr.mxu0 0.0
      %3397 = vmatpush1.msra.mxu0 0.0
      %3398 = vmatprep.subr.mxu0 0.0
      %3399 = vmatpush1.msra.mxu0 0.0
      %3400 = vmatprep.subr.mxu0 0.0
      %3401 = vmatpush1.msra.mxu0 0.0
      %3402 = vmatprep.subr.mxu0 0.0
      %3403 = vmatpush1.msra.mxu0 0.0
      %3404 = vmatprep.subr.mxu0 0.0
      %3405 = vmatpush1.msra.mxu0 0.0
      %3406 = vmatprep.mubr.f32.mxu0 0.0
      %3407 = vmatmul.mubr.f32.gmra.mrb[0].mxu0 %v3334
      %v3408 = vpop.f32.mrb[0].mxu0
      %v3409 = vadd.f32 0.0, %v3408
      %v3410 = vpop.f32.mrb[0].mxu0
      %v3411 = vadd.f32 0.0, %v3410
      %3412 = vdwg.mxu0
      %3413 = vmatprep.subr.mxu0 0.0
      %3414 = vmatpush1.msra.mxu0 %v3340
      %3415 = vmatprep.subr.mxu0 0.0
      %3416 = vmatpush1.msra.mxu0 0.0
      %3417 = vmatprep.subr.mxu0 0.0
      %3418 = vmatpush1.msra.mxu0 0.0
      %3419 = vmatprep.subr.mxu0 0.0
      %3420 = vmatpush1.msra.mxu0 0.0
      %3421 = vmatprep.subr.mxu0 0.0
      %3422 = vmatpush1.msra.mxu0 0.0
      %3423 = vmatprep.subr.mxu0 0.0
      %3424 = vmatpush1.msra.mxu0 0.0
      %3425 = vmatprep.subr.mxu0 0.0
      %3426 = vmatpush1.msra.mxu0 0.0
      %3427 = vmatprep.subr.mxu0 0.0
      %3428 = vmatpush1.msra.mxu0 0.0
      %3429 = vmatprep.subr.mxu0 0.0
      %3430 = vmatpush1.msra.mxu0 0.0
      %3431 = vmatprep.subr.mxu0 0.0
      %3432 = vmatpush1.msra.mxu0 0.0
      %3433 = vmatprep.subr.mxu0 0.0
      %3434 = vmatpush1.msra.mxu0 0.0
      %3435 = vmatprep.subr.mxu0 0.0
      %3436 = vmatpush1.msra.mxu0 0.0
      %3437 = vmatprep.subr.mxu0 0.0
      %3438 = vmatpush1.msra.mxu0 0.0
      %3439 = vmatprep.subr.mxu0 0.0
      %3440 = vmatpush1.msra.mxu0 0.0
      %3441 = vmatprep.subr.mxu0 0.0
      %3442 = vmatpush1.msra.mxu0 0.0
      %3443 = vmatprep.subr.mxu0 0.0
      %3444 = vmatpush1.msra.mxu0 0.0
      %3445 = vmatprep.subr.mxu0 0.0
      %3446 = vmatpush1.msra.mxu0 0.0
      %3447 = vmatprep.subr.mxu0 0.0
      %3448 = vmatpush1.msra.mxu0 0.0
      %3449 = vmatprep.subr.mxu0 0.0
      %3450 = vmatpush1.msra.mxu0 0.0
      %3451 = vmatprep.subr.mxu0 0.0
      %3452 = vmatpush1.msra.mxu0 0.0
      %3453 = vmatprep.subr.mxu0 0.0
      %3454 = vmatpush1.msra.mxu0 0.0
      %3455 = vmatprep.subr.mxu0 0.0
      %3456 = vmatpush1.msra.mxu0 0.0
      %3457 = vmatprep.subr.mxu0 0.0
      %3458 = vmatpush1.msra.mxu0 0.0
      %3459 = vmatprep.subr.mxu0 0.0
      %3460 = vmatpush1.msra.mxu0 0.0
      %3461 = vmatprep.subr.mxu0 0.0
      %3462 = vmatpush1.msra.mxu0 0.0
      %3463 = vmatprep.subr.mxu0 0.0
      %3464 = vmatpush1.msra.mxu0 0.0
      %3465 = vmatprep.subr.mxu0 0.0
      %3466 = vmatpush1.msra.mxu0 0.0
      %3467 = vmatprep.subr.mxu0 0.0
      %3468 = vmatpush1.msra.mxu0 0.0
      %3469 = vmatprep.subr.mxu0 0.0
      %3470 = vmatpush1.msra.mxu0 0.0
      %3471 = vmatprep.subr.mxu0 0.0
      %3472 = vmatpush1.msra.mxu0 0.0
      %3473 = vmatprep.subr.mxu0 0.0
      %3474 = vmatpush1.msra.mxu0 0.0
      %3475 = vmatprep.subr.mxu0 0.0
      %3476 = vmatpush1.msra.mxu0 0.0
      %3477 = vmatprep.mubr.f32.mxu0 0.0
      %3478 = vmatmul.mubr.f32.gmra.mrb[0].mxu0 %v3334
      %v3479 = vpop.f32.mrb[0].mxu0
      %v3480 = vadd.f32 0.0, %v3479
      %v3481 = vpop.f32.mrb[0].mxu0
      %3482 = vdwg.mxu0
      %v3483 = vadd.f32 %v3302, %v3409
      %v3484 = vadd.f32 %v3303, %v3411
      %v3485 = vadd.f32 %v3304, %v3480
      %v3486 = vld [vmem:[%s5] sm:$0xff]
      %3488 = vset.pattern.permute.xlu0 0
      %3489 = vperm.xlu0 %3488, %v3486
      %v3490 = vpop.permute.xlu0 %3489
      %v3492 = vadd.f32 %v3483, %v3490
      %v3493 = vadd.f32 %v3484, %v3490
      %v3494 = vadd.f32 %v3485, %v3490
      %v3495 = vld [vmem:[%s6] sm:$0xff]
      %v3496 = vld [vmem:[%s300] sm:$0xff]
      %v3497 = vld [vmem:[%s300 + $0x8] sm:$0xff]
      %v3498 = vld [vmem:[%s300 + $0x10] sm:$0xff]
      %v3499 = vld [vmem:[%s7] sm:$0xff]
      %3501 = vset.pattern.permute.xlu0 0
      %3502 = vperm.xlu0 %3501, %v3499
      %v3503 = vpop.permute.xlu0 %3502
      %3508 = vrot.lane.b32.xlu0 %v3496, 109
      %v3509 = vpop.permute.xlu0 %3508
      %3510 = vrot.lane.b32.xlu0 %v3497, 109
      %v3511 = vpop.permute.xlu0 %3510
      %3512 = vrot.lane.b32.xlu0 %v3498, 109
      %v3513 = vpop.permute.xlu0 %3512
      %v3514 = vsel %vm946, %v3509, %v3511
      %v3515 = vsel %vm946, %v3511, %v3513
      %v3520 = vsel %vm327, %v3495, 0
      %3522 = vmatprep.subr.mxu0 %v3515
      %3523 = vmatpush1.msra.mxu0 %v3514
      %3524 = vmatprep.subr.mxu0 0.0
      %3525 = vmatpush1.msra.mxu0 0.0
      %3526 = vmatprep.subr.mxu0 0.0
      %3527 = vmatpush1.msra.mxu0 0.0
      %3528 = vmatprep.subr.mxu0 0.0
      %3529 = vmatpush1.msra.mxu0 0.0
      %3530 = vmatprep.subr.mxu0 0.0
      %3531 = vmatpush1.msra.mxu0 0.0
      %3532 = vmatprep.subr.mxu0 0.0
      %3533 = vmatpush1.msra.mxu0 0.0
      %3534 = vmatprep.subr.mxu0 0.0
      %3535 = vmatpush1.msra.mxu0 0.0
      %3536 = vmatprep.subr.mxu0 0.0
      %3537 = vmatpush1.msra.mxu0 0.0
      %3538 = vmatprep.subr.mxu0 0.0
      %3539 = vmatpush1.msra.mxu0 0.0
      %3540 = vmatprep.subr.mxu0 0.0
      %3541 = vmatpush1.msra.mxu0 0.0
      %3542 = vmatprep.subr.mxu0 0.0
      %3543 = vmatpush1.msra.mxu0 0.0
      %3544 = vmatprep.subr.mxu0 0.0
      %3545 = vmatpush1.msra.mxu0 0.0
      %3546 = vmatprep.subr.mxu0 0.0
      %3547 = vmatpush1.msra.mxu0 0.0
      %3548 = vmatprep.subr.mxu0 0.0
      %3549 = vmatpush1.msra.mxu0 0.0
      %3550 = vmatprep.subr.mxu0 0.0
      %3551 = vmatpush1.msra.mxu0 0.0
      %3552 = vmatprep.subr.mxu0 0.0
      %3553 = vmatpush1.msra.mxu0 0.0
      %3554 = vmatprep.subr.mxu0 0.0
      %3555 = vmatpush1.msra.mxu0 0.0
      %3556 = vmatprep.subr.mxu0 0.0
      %3557 = vmatpush1.msra.mxu0 0.0
      %3558 = vmatprep.subr.mxu0 0.0
      %3559 = vmatpush1.msra.mxu0 0.0
      %3560 = vmatprep.subr.mxu0 0.0
      %3561 = vmatpush1.msra.mxu0 0.0
      %3562 = vmatprep.subr.mxu0 0.0
      %3563 = vmatpush1.msra.mxu0 0.0
      %3564 = vmatprep.subr.mxu0 0.0
      %3565 = vmatpush1.msra.mxu0 0.0
      %3566 = vmatprep.subr.mxu0 0.0
      %3567 = vmatpush1.msra.mxu0 0.0
      %3568 = vmatprep.subr.mxu0 0.0
      %3569 = vmatpush1.msra.mxu0 0.0
      %3570 = vmatprep.subr.mxu0 0.0
      %3571 = vmatpush1.msra.mxu0 0.0
      %3572 = vmatprep.subr.mxu0 0.0
      %3573 = vmatpush1.msra.mxu0 0.0
      %3574 = vmatprep.subr.mxu0 0.0
      %3575 = vmatpush1.msra.mxu0 0.0
      %3576 = vmatprep.subr.mxu0 0.0
      %3577 = vmatpush1.msra.mxu0 0.0
      %3578 = vmatprep.subr.mxu0 0.0
      %3579 = vmatpush1.msra.mxu0 0.0
      %3580 = vmatprep.subr.mxu0 0.0
      %3581 = vmatpush1.msra.mxu0 0.0
      %3582 = vmatprep.subr.mxu0 0.0
      %3583 = vmatpush1.msra.mxu0 0.0
      %3584 = vmatprep.subr.mxu0 0.0
      %3585 = vmatpush1.msra.mxu0 0.0
      %3586 = vmatprep.mubr.f32.mxu0 0.0
      %3587 = vmatmul.mubr.f32.gmra.mrb[0].mxu0 %v3520
      %v3588 = vpop.f32.mrb[0].mxu0
      %v3589 = vadd.f32 %v3503, %v3588
      %v3590 = vpop.f32.mrb[0].mxu0
      %v3591 = vadd.f32 %v3503, %v3590
      %3592 = vdwg.mxu0
      %3593 = vmatprep.subr.mxu0 0.0
      %3594 = vmatpush1.msra.mxu0 %v3513
      %3595 = vmatprep.subr.mxu0 0.0
      %3596 = vmatpush1.msra.mxu0 0.0
      %3597 = vmatprep.subr.mxu0 0.0
      %3598 = vmatpush1.msra.mxu0 0.0
      %3599 = vmatprep.subr.mxu0 0.0
      %3600 = vmatpush1.msra.mxu0 0.0
      %3601 = vmatprep.subr.mxu0 0.0
      %3602 = vmatpush1.msra.mxu0 0.0
      %3603 = vmatprep.subr.mxu0 0.0
      %3604 = vmatpush1.msra.mxu0 0.0
      %3605 = vmatprep.subr.mxu0 0.0
      %3606 = vmatpush1.msra.mxu0 0.0
      %3607 = vmatprep.subr.mxu0 0.0
      %3608 = vmatpush1.msra.mxu0 0.0
      %3609 = vmatprep.subr.mxu0 0.0
      %3610 = vmatpush1.msra.mxu0 0.0
      %3611 = vmatprep.subr.mxu0 0.0
      %3612 = vmatpush1.msra.mxu0 0.0
      %3613 = vmatprep.subr.mxu0 0.0
      %3614 = vmatpush1.msra.mxu0 0.0
      %3615 = vmatprep.subr.mxu0 0.0
      %3616 = vmatpush1.msra.mxu0 0.0
      %3617 = vmatprep.subr.mxu0 0.0
      %3618 = vmatpush1.msra.mxu0 0.0
      %3619 = vmatprep.subr.mxu0 0.0
      %3620 = vmatpush1.msra.mxu0 0.0
      %3621 = vmatprep.subr.mxu0 0.0
      %3622 = vmatpush1.msra.mxu0 0.0
      %3623 = vmatprep.subr.mxu0 0.0
      %3624 = vmatpush1.msra.mxu0 0.0
      %3625 = vmatprep.subr.mxu0 0.0
      %3626 = vmatpush1.msra.mxu0 0.0
      %3627 = vmatprep.subr.mxu0 0.0
      %3628 = vmatpush1.msra.mxu0 0.0
      %3629 = vmatprep.subr.mxu0 0.0
      %3630 = vmatpush1.msra.mxu0 0.0
      %3631 = vmatprep.subr.mxu0 0.0
      %3632 = vmatpush1.msra.mxu0 0.0
      %3633 = vmatprep.subr.mxu0 0.0
      %3634 = vmatpush1.msra.mxu0 0.0
      %3635 = vmatprep.subr.mxu0 0.0
      %3636 = vmatpush1.msra.mxu0 0.0
      %3637 = vmatprep.subr.mxu0 0.0
      %3638 = vmatpush1.msra.mxu0 0.0
      %3639 = vmatprep.subr.mxu0 0.0
      %3640 = vmatpush1.msra.mxu0 0.0
      %3641 = vmatprep.subr.mxu0 0.0
      %3642 = vmatpush1.msra.mxu0 0.0
      %3643 = vmatprep.subr.mxu0 0.0
      %3644 = vmatpush1.msra.mxu0 0.0
      %3645 = vmatprep.subr.mxu0 0.0
      %3646 = vmatpush1.msra.mxu0 0.0
      %3647 = vmatprep.subr.mxu0 0.0
      %3648 = vmatpush1.msra.mxu0 0.0
      %3649 = vmatprep.subr.mxu0 0.0
      %3650 = vmatpush1.msra.mxu0 0.0
      %3651 = vmatprep.subr.mxu0 0.0
      %3652 = vmatpush1.msra.mxu0 0.0
      %3653 = vmatprep.subr.mxu0 0.0
      %3654 = vmatpush1.msra.mxu0 0.0
      %3655 = vmatprep.subr.mxu0 0.0
      %3656 = vmatpush1.msra.mxu0 0.0
      %3657 = vmatprep.mubr.f32.mxu0 0.0
      %3658 = vmatmul.mubr.f32.gmra.mrb[0].mxu0 %v3520
      %v3659 = vpop.f32.mrb[0].mxu0
      %v3660 = vadd.f32 %v3503, %v3659
      %v3661 = vpop.f32.mrb[0].mxu0
      %3662 = vdwg.mxu0
      %v3663 = vmul.f32 %v3589, 0.5
      %v3664 = vmul.f32 %v3591, 0.5
      %v3665 = vmul.f32 %v3660, 0.5
      %v3666 = vmul.f32 %v3589, 0.70710677
      %v3667 = vmul.f32 %v3591, 0.70710677
      %v3668 = vmul.f32 %v3660, 0.70710677
      %v3669 = vand.u32 2147483647, %v3666
      %v3670 = vand.u32 2147483647, %v3667
      %v3671 = vand.u32 2147483647, %v3668
      %v3672 = vmul.f32 %v3669, 0.3275911
      %v3673 = vmul.f32 %v3670, 0.3275911
      %v3674 = vmul.f32 %v3671, 0.3275911
      %v3675 = vadd.f32 %v3672, 1.0
      %v3676 = vadd.f32 %v3673, 1.0
      %v3677 = vadd.f32 %v3674, 1.0
      %v3678 = vrcp.pop %v3675
      %v3679 = vmul.f32 1.0, %v3678
      %v3680 = vrcp.pop %v3676
      %v3681 = vmul.f32 1.0, %v3680
      %v3682 = vrcp.pop %v3677
      %v3683 = vmul.f32 1.0, %v3682
      %v3684 = vmul.f32 %v3679, 1.0614054
      %v3685 = vmul.f32 %v3681, 1.0614054
      %v3686 = vmul.f32 %v3683, 1.0614054
      %v3687 = vadd.f32 %v3684, -1.4531521
      %v3688 = vadd.f32 %v3685, -1.4531521
      %v3689 = vadd.f32 %v3686, -1.4531521
      %v3690 = vmul.f32 %v3687, %v3679
      %v3691 = vmul.f32 %v3688, %v3681
      %v3692 = vmul.f32 %v3689, %v3683
      %v3693 = vadd.f32 %v3690, 1.4214138
      %v3694 = vadd.f32 %v3691, 1.4214138
      %v3695 = vadd.f32 %v3692, 1.4214138
      %v3696 = vmul.f32 %v3693, %v3679
      %v3697 = vmul.f32 %v3694, %v3681
      %v3698 = vmul.f32 %v3695, %v3683
      %v3699 = vadd.f32 %v3696, -0.28449672
      %v3700 = vadd.f32 %v3697, -0.28449672
      %v3701 = vadd.f32 %v3698, -0.28449672
      %v3702 = vmul.f32 %v3699, %v3679
      %v3703 = vmul.f32 %v3700, %v3681
      %v3704 = vmul.f32 %v3701, %v3683
      %v3705 = vadd.f32 %v3702, 0.2548296
      %v3706 = vadd.f32 %v3703, 0.2548296
      %v3707 = vadd.f32 %v3704, 0.2548296
      %v3708 = vmul.f32 %v3705, %v3679
      %v3709 = vmul.f32 %v3706, %v3681
      %v3710 = vmul.f32 %v3707, %v3683
      %v3711 = vsub.f32 0.0, %v3669
      %v3712 = vsub.f32 0.0, %v3670
      %v3713 = vsub.f32 0.0, %v3671
      %v3714 = vmul.f32 %v3711, %v3669
      %v3715 = vmul.f32 %v3712, %v3670
      %v3716 = vmul.f32 %v3713, %v3671
      %v3717 = vmul.f32 %v3714, 1.442695
      %v3718 = vpow.pop %v3717
      %v3719 = vmul.f32 %v3715, 1.442695
      %v3720 = vpow.pop %v3719
      %v3721 = vmul.f32 %v3716, 1.442695
      %v3722 = vpow.pop %v3721
      %v3723 = vmul.f32 %v3708, %v3718
      %v3724 = vmul.f32 %v3709, %v3720
      %v3725 = vmul.f32 %v3710, %v3722
      %v3726 = vsub.f32 1.0, %v3723
      %v3727 = vsub.f32 1.0, %v3724
      %v3728 = vsub.f32 1.0, %v3725
      %vm3729 = vcmp.lt.f32.partialorder %v3666, 0.0
      %vm3730 = vcmp.lt.f32.partialorder %v3667, 0.0
      %vm3731 = vcmp.lt.f32.partialorder %v3668, 0.0
      %v3732 = vsub.f32 0.0, %v3726
      %v3733 = vsub.f32 0.0, %v3727
      %v3734 = vsub.f32 0.0, %v3728
      %v3735 = vsel %vm3729, %v3732, %v3726
      %v3736 = vsel %vm3730, %v3733, %v3727
      %v3737 = vsel %vm3731, %v3734, %v3728
      %v3738 = vadd.f32 %v3735, 1.0
      %v3739 = vadd.f32 %v3736, 1.0
      %v3740 = vadd.f32 %v3737, 1.0
      %v3741 = vmul.f32 %v3663, %v3738
      %v3742 = vmul.f32 %v3664, %v3739
      %v3743 = vmul.f32 %v3665, %v3740
      %v3744 = vmul.f32 %v3492, %v3741
      %v3745 = vmul.f32 %v3493, %v3742
      %v3746 = vmul.f32 %v3494, %v3743
      %v3747 = vmul.f32 %v3744, 0.5
      %v3748 = vmul.f32 %v3745, 0.5
      %v3749 = vmul.f32 %v3746, 0.5
      %v3750 = vmul.f32 %v3744, 0.70710677
      %v3751 = vmul.f32 %v3745, 0.70710677
      %v3752 = vmul.f32 %v3746, 0.70710677
      %v3753 = vand.u32 2147483647, %v3750
      %v3754 = vand.u32 2147483647, %v3751
      %v3755 = vand.u32 2147483647, %v3752
      %v3756 = vmul.f32 %v3753, 0.3275911
      %v3757 = vmul.f32 %v3754, 0.3275911
      %v3758 = vmul.f32 %v3755, 0.3275911
      %v3759 = vadd.f32 %v3756, 1.0
      %v3760 = vadd.f32 %v3757, 1.0
      %v3761 = vadd.f32 %v3758, 1.0
      %v3762 = vrcp.pop %v3759
      %v3763 = vmul.f32 1.0, %v3762
      %v3764 = vrcp.pop %v3760
      %v3765 = vmul.f32 1.0, %v3764
      %v3766 = vrcp.pop %v3761
      %v3767 = vmul.f32 1.0, %v3766
      %v3768 = vmul.f32 %v3763, 1.0614054
      %v3769 = vmul.f32 %v3765, 1.0614054
      %v3770 = vmul.f32 %v3767, 1.0614054
      %v3771 = vadd.f32 %v3768, -1.4531521
      %v3772 = vadd.f32 %v3769, -1.4531521
      %v3773 = vadd.f32 %v3770, -1.4531521
      %v3774 = vmul.f32 %v3771, %v3763
      %v3775 = vmul.f32 %v3772, %v3765
      %v3776 = vmul.f32 %v3773, %v3767
      %v3777 = vadd.f32 %v3774, 1.4214138
      %v3778 = vadd.f32 %v3775, 1.4214138
      %v3779 = vadd.f32 %v3776, 1.4214138
      %v3780 = vmul.f32 %v3777, %v3763
      %v3781 = vmul.f32 %v3778, %v3765
      %v3782 = vmul.f32 %v3779, %v3767
      %v3783 = vadd.f32 %v3780, -0.28449672
      %v3784 = vadd.f32 %v3781, -0.28449672
      %v3785 = vadd.f32 %v3782, -0.28449672
      %v3786 = vmul.f32 %v3783, %v3763
      %v3787 = vmul.f32 %v3784, %v3765
      %v3788 = vmul.f32 %v3785, %v3767
      %v3789 = vadd.f32 %v3786, 0.2548296
      %v3790 = vadd.f32 %v3787, 0.2548296
      %v3791 = vadd.f32 %v3788, 0.2548296
      %v3792 = vmul.f32 %v3789, %v3763
      %v3793 = vmul.f32 %v3790, %v3765
      %v3794 = vmul.f32 %v3791, %v3767
      %v3795 = vsub.f32 0.0, %v3753
      %v3796 = vsub.f32 0.0, %v3754
      %v3797 = vsub.f32 0.0, %v3755
      %v3798 = vmul.f32 %v3795, %v3753
      %v3799 = vmul.f32 %v3796, %v3754
      %v3800 = vmul.f32 %v3797, %v3755
      %v3801 = vmul.f32 %v3798, 1.442695
      %v3802 = vpow.pop %v3801
      %v3803 = vmul.f32 %v3799, 1.442695
      %v3804 = vpow.pop %v3803
      %v3805 = vmul.f32 %v3800, 1.442695
      %v3806 = vpow.pop %v3805
      %v3807 = vmul.f32 %v3792, %v3802
      %v3808 = vmul.f32 %v3793, %v3804
      %v3809 = vmul.f32 %v3794, %v3806
      %v3810 = vsub.f32 1.0, %v3807
      %v3811 = vsub.f32 1.0, %v3808
      %v3812 = vsub.f32 1.0, %v3809
      %vm3813 = vcmp.lt.f32.partialorder %v3750, 0.0
      %vm3814 = vcmp.lt.f32.partialorder %v3751, 0.0
      %vm3815 = vcmp.lt.f32.partialorder %v3752, 0.0
      %v3816 = vsub.f32 0.0, %v3810
      %v3817 = vsub.f32 0.0, %v3811
      %v3818 = vsub.f32 0.0, %v3812
      %v3819 = vsel %vm3813, %v3816, %v3810
      %v3820 = vsel %vm3814, %v3817, %v3811
      %v3821 = vsel %vm3815, %v3818, %v3812
      %v3822 = vadd.f32 %v3819, 1.0
      %v3823 = vadd.f32 %v3820, 1.0
      %v3824 = vadd.f32 %v3821, 1.0
      %v3825 = vmul.f32 %v3747, %v3822
      %v3826 = vmul.f32 %v3748, %v3823
      %v3827 = vmul.f32 %v3749, %v3824
      %3828 = vst [vmem:[%s305] sm:$0xff] %v3825
      %3829 = vst [vmem:[%s305 + $0x8] sm:$0xff] %v3826
      %vm3830 = vcmask 261120
      %3831 = vst.msk [vmem:[%s305 + $0x10] sm:$0xff] %vm3830, %v3827
      %p3832 = scmp.lt.s32.totalorder %s19, 1
      %s3833 = scalar_select %p3832, %s19, 1
      %s3834 = smul.addr %s3833, 3
      %s3835 = smul.addr %s3834, 8
      %s3836 = scalar_lea.vmem %s8, %s3835
      // Predicated region
      $region53: #{local_att_forward.1} parent=51 // pred_check
        %p3837 = pneg %p210
      $region54: #{local_att_forward.1} parent=51 // pred_check_branch
        %3839 = sbr.rel (%p3837) target = $region56
      $region55: #{local_att_forward.1} parent=51 // pred_region
        _
      $region56: #{local_att_forward.1} parent=51 // pred_fallthru
        _
    $region52: #{local_att_forward.1} parent=5 // pred_fallthru
      _
    %p3840 = scmp.le.s32.totalorder 2, %s14
    // Predicated region
    $region57: #{local_att_forward.1} parent=5 // pred_check
      %p3841 = pneg %p3840
    $region58: #{local_att_forward.1} parent=5 // pred_check_branch
      %3843 = sbr.rel (%p3841) target = $region60
    $region59: #{local_att_forward.1} parent=5 // pred_region
      %s3844 = ssub.s32 %s14, 2
      // Predicated region
      $region61: #{local_att_forward.1} parent=59 // pred_check
        %p3845 = pneg %p216
      $region62: #{local_att_forward.1} parent=59 // pred_check_branch
        %3847 = sbr.rel (%p3845) target = $region64
      $region63: #{local_att_forward.1} parent=59 // pred_region
        %p3848 = scmp.lt.s32.totalorder %s20, 1
        %s3849 = scalar_select %p3848, %s20, 1
        %s3850 = smul.addr %s3849, 3
        %s3851 = smul.addr %s3850, 8
        %s3852 = scalar_lea.vmem %s8, %s3851
      $region64: #{local_att_forward.1} parent=59 // pred_fallthru
        _
    $region60: #{local_att_forward.1} parent=5 // pred_fallthru
      _
  $region6: #{local_att_forward.1} parent=0 // loop_footer
    %s18 = sadd.s32 1, %s14
  $region7: #{local_att_forward.1} parent=0 // loop_footer_branch
    %13 = sbr.rel target = $region3
  $region8: #{local_att_forward.1} parent=0 // loop_exit
    _

</llo_original>
